<compile_context>
chip_gen: v7x
topology: tpu7x:2x2x1
jax: 0.10.0
libtpu: 0.0.40
codegen_flags: <defaults>
</compile_context>

<pallas_src>
import functools

import jax
import jax.numpy as jnp
from jax.experimental import pallas as pl
from jax.experimental.pallas import tpu as pltpu

EPS = 1e-5          # nn.BatchNorm2d default eps
LANE = 128          # TPU lane width


# ---------------------------------------------------------------------------
# Small helpers
# ---------------------------------------------------------------------------
def _round_up(x, m):
    return (x + m - 1) // m * m


def _pad_to(a, shape):
    cfg = [(0, t - s) for s, t in zip(a.shape, shape)]
    if all(p == (0, 0) for p in cfg):
        return a
    return jnp.pad(a, cfg)


def _fold_bn(gamma, beta, mean, var):
    """Inference-mode BatchNorm2d -> per-channel (scale, shift)."""
    scale = gamma / jnp.sqrt(var + EPS)
    shift = beta - mean * scale
    return scale, shift


def _pick_h_tile(h, w, target=1024):
    """Largest divisor th of h with th*w <= target (matmul-M sized strips)."""
    best = 1
    for t in range(1, h + 1):
        if h % t == 0 and t * w <= target:
            best = t
    return best


@functools.lru_cache(maxsize=1)
def _vmem_limit_bytes():
    """Generation-aware scoped-VMEM budget (~60% of physical, clamped)."""
    try:
        cap = pltpu.get_tpu_info().vmem_capacity_bytes
        return max(32 * 1024 * 1024, min(int(cap * 0.6), 100 * 1024 * 1024))
    except Exception:
        return 48 * 1024 * 1024


# ---------------------------------------------------------------------------
# Fused Bottleneck kernel
# ---------------------------------------------------------------------------
def _bottleneck_kernel(x_ref, w1_ref, t1_ref, w2c_ref, t2_ref, w3_ref, t3_ref,
                       o_ref, h1cat_ref, *, th, h, w, cinp, c1p, c2p, c3p):
    # x_ref:    (1, H, W, Cin)      bf16  -- full image for this batch element
    # w1_ref:   (Cin, C1)           bf16  (BN1 scale folded)
    # t1_ref:   (1, C1)             f32
    # w2c_ref:  (3, 3*C1, C2)       bf16  (BN2 scale folded, kw merged into K)
    # t2_ref:   (1, C2)             f32
    # w3_ref:   (C2, C3)            bf16  (BN3 scale folded)
    # t3_ref:   (1, C3)             f32
    # o_ref:    (1, TH, W, C3)      f32   -- row-strip output tile
    # h1cat_ref:(H+2, W, 3*C1)      bf16  -- kw-expanded, spatially padded h1
    r = pl.program_id(1)

    @pl.when(r == 0)
    def _():
        # conv1 (1x1) + BN1 shift + ReLU over the whole image, written into the
        # kw-expanded scratch so conv2 needs only aligned row-slab slices.
        h1cat_ref[...] = jnp.zeros((h + 2, w, 3 * c1p), h1cat_ref.dtype)
        x_mat = x_ref[...].reshape(h * w, cinp)
        h1 = jnp.dot(x_mat, w1_ref[...], preferred_element_type=jnp.float32)
        h1 = jnp.maximum(h1 + t1_ref[...], 0.0)
        h1 = h1.astype(h1cat_ref.dtype).reshape(h, w, c1p)
        # kw = 1 (center tap): full width.
        h1cat_ref[pl.ds(1, h), pl.ds(0, w), pl.ds(c1p, c1p)] = h1
        # kw = 0 tap: output col x reads input col x-1 (col 0 stays zero pad).
        h1cat_ref[pl.ds(1, h), pl.ds(1, w - 1), pl.ds(0, c1p)] = h1[:, :w - 1, :]
        # kw = 2 tap: output col x reads input col x+1 (col W-1 stays zero pad).
        h1cat_ref[pl.ds(1, h), pl.ds(0, w - 1), pl.ds(2 * c1p, c1p)] = h1[:, 1:, :]

    row0 = pl.multiple_of(r * th, th)

    # conv2 (3x3) as 3 MXU matmuls with K = 3*C1 (kw taps merged into K).
    acc = jnp.zeros((th * w, c2p), jnp.float32)
    for kh in range(3):
        slab = h1cat_ref[pl.ds(row0 + kh, th)]            # (TH, W, 3*C1) bf16
        acc = acc + jnp.dot(slab.reshape(th * w, 3 * c1p), w2c_ref[kh],
                            preferred_element_type=jnp.float32)
    h2 = jnp.maximum(acc + t2_ref[...], 0.0)              # BN2 shift + ReLU

    # conv3 (1x1) + BN3 shift + residual + ReLU; h2 stays in registers/VMEM.
    y = jnp.dot(h2.astype(jnp.bfloat16), w3_ref[...],
                preferred_element_type=jnp.float32)
    res = x_ref[:, pl.ds(row0, th), :, :].reshape(th * w, c3p)  # residual = x
    y = y + t3_ref[...] + res.astype(jnp.float32)
    o_ref[...] = jnp.maximum(y, 0.0).reshape(1, th, w, c3p).astype(o_ref.dtype)


def _bottleneck_pallas(xp, w1, t1, w2c, t2, w3, t3, th):
    n_b, h, w, cinp = xp.shape
    c1p = w1.shape[1]
    c2p = w2c.shape[2]
    c3p = w3.shape[1]
    grid = (n_b, h // th)

    m = n_b * h * w
    flops = m * (2 * cinp * c1p + 18 * c1p * c2p + 2 * c2p * c3p)
    bytes_acc = (m * cinp * 2                                  # x (bf16)
                 + (cinp * c1p + 9 * c1p * c2p + c2p * c3p) * 2  # weights
                 + (c1p + c2p + c3p) * 4                       # shifts
                 + m * c3p * 4)                                # output (f32)

    kern = functools.partial(_bottleneck_kernel, th=th, h=h, w=w,
                             cinp=cinp, c1p=c1p, c2p=c2p, c3p=c3p)
    return pl.pallas_call(
        kern,
        out_shape=jax.ShapeDtypeStruct((n_b, h, w, c3p), jnp.float32),
        grid=grid,
        in_specs=[
            # Full image per batch element (also the residual); fetched once
            # per batch element since its block index only changes with n.
            pl.BlockSpec((1, h, w, cinp), lambda n, r: (n, 0, 0, 0)),
            # Folded weights / shifts: constant index map -> resident in VMEM.
            pl.BlockSpec((cinp, c1p), lambda n, r: (0, 0)),
            pl.BlockSpec((1, c1p), lambda n, r: (0, 0)),
            pl.BlockSpec((3, 3 * c1p, c2p), lambda n, r: (0, 0, 0)),
            pl.BlockSpec((1, c2p), lambda n, r: (0, 0)),
            pl.BlockSpec((c2p, c3p), lambda n, r: (0, 0)),
            pl.BlockSpec((1, c3p), lambda n, r: (0, 0)),
        ],
        out_specs=pl.BlockSpec((1, th, w, c3p), lambda n, r: (n, r, 0, 0)),
        scratch_shapes=[pltpu.VMEM((h + 2, w, 3 * c1p), jnp.bfloat16)],
        compiler_params=pltpu.CompilerParams(
            # Row-strip axis is "arbitrary": strips of one batch element share
            # the conv1 scratch written at r == 0.
            dimension_semantics=("parallel", "arbitrary"),
            vmem_limit_bytes=_vmem_limit_bytes(),
        ),
        cost_estimate=pl.CostEstimate(
            flops=flops, transcendentals=0, bytes_accessed=bytes_acc),
    )(xp, w1, t1, w2c, t2, w3, t3)


# ---------------------------------------------------------------------------
# Public forward (NCHW in / NCHW out)
# ---------------------------------------------------------------------------
@jax.jit
def bottleneck_forward(x_nchw, params):
    """Bottleneck forward (stride=1, downsample=None, eval-mode BN)."""
    n_b, cin, h, w = x_nchw.shape
    planes = params["w1"].shape[1]
    cout = 4 * planes
    assert cin == cout, "stride=1 + downsample=None requires inplanes == 4*planes"
    # TODO(synk): stride>1 / downsample submodule not implemented (module defaults).

    cinp = _round_up(cin, LANE)
    c1p = _round_up(planes, LANE)
    c2p = c1p
    c3p = _round_up(cout, LANE)      # == cinp because cin == cout

    # Single XLA pass: NCHW -> NHWC transpose, channel pad, bf16 cast.
    x_nhwc = jnp.transpose(x_nchw, (0, 2, 3, 1))
    xp = _pad_to(x_nhwc, (n_b, h, w, cinp)).astype(jnp.bfloat16)

    # Fold BN into per-channel scale (into bf16 weights) / shift (f32 epilogue).
    s1, t1 = _fold_bn(params["g1"], params["b1"], params["m1"], params["v1"])
    w1 = _pad_to(params["w1"] * s1[None, :], (cinp, c1p)).astype(jnp.bfloat16)
    t1 = _pad_to(t1[None, :], (1, c1p)).astype(jnp.float32)

    s2, t2 = _fold_bn(params["g2"], params["b2"], params["m2"], params["v2"])
    w2 = _pad_to(params["w2"] * s2[None, None, None, :],
                 (3, 3, c1p, c2p)).astype(jnp.bfloat16)
    w2c = w2.reshape(3, 3 * c1p, c2p)            # kw folded into the K axis
    t2 = _pad_to(t2[None, :], (1, c2p)).astype(jnp.float32)

    s3, t3 = _fold_bn(params["g3"], params["b3"], params["m3"], params["v3"])
    w3 = _pad_to(params["w3"] * s3[None, :], (c2p, c3p)).astype(jnp.bfloat16)
    t3 = _pad_to(t3[None, :], (1, c3p)).astype(jnp.float32)

    th = _pick_h_tile(h, w)
    out_p = _bottleneck_pallas(xp, w1, t1, w2c, t2, w3, t3, th)

    out = out_p[..., :cout]
    return jnp.transpose(out, (0, 3, 1, 2))      # back to NCHW


# ---------------------------------------------------------------------------
# Pure-JAX f32 reference (same math, no Pallas) for validation
# ---------------------------------------------------------------------------
def bottleneck_reference(x_nchw, params):
    x = jnp.transpose(x_nchw, (0, 2, 3, 1)).astype(jnp.float32)
    n_b, h, w, _ = x.shape
    planes = params["w1"].shape[1]

    def bn(y, g, b, m, v):
        return (y - m) / jnp.sqrt(v + EPS) * g + b

    h1 = jnp.einsum("nhwc,cd->nhwd", x, params["w1"])
    h1 = jax.nn.relu(bn(h1, params["g1"], params["b1"], params["m1"], params["v1"]))

    hp = jnp.pad(h1, ((0, 0), (1, 1), (1, 1), (0, 0)))
    h2 = jnp.zeros((n_b, h, w, planes), jnp.float32)
    for kh in range(3):
        for kw in range(3):
            h2 = h2 + jnp.einsum(
                "nhwc,cd->nhwd", hp[:, kh:kh + h, kw:kw + w, :], params["w2"][kh, kw]
            )
    h2 = jax.nn.relu(bn(h2, params["g2"], params["b2"], params["m2"], params["v2"]))

    h3 = jnp.einsum("nhwc,cd->nhwd", h2, params["w3"])
    h3 = bn(h3, params["g3"], params["b3"], params["m3"], params["v3"])
    out = jax.nn.relu(h3 + x)
    return jnp.transpose(out, (0, 3, 1, 2))


# ---------------------------------------------------------------------------
# Main
# ---------------------------------------------------------------------------
if __name__ == "__main__":
    # Module config: inplanes = planes * expansion so downsample=None is valid.
    N, planes, H, W = 2, 4, 16, 16
    inplanes = planes * 4  # expansion = 4

    key = jax.random.PRNGKey(0)
    ks = jax.random.split(key, 20)

    def rnd(k, shape, scale=0.2):
        return scale * jax.random.normal(k, shape, jnp.float32)

    params = {
        # conv weights, channels-last-friendly: (Cin, Cout) / (kh, kw, Cin, Cout)
        "w1": rnd(ks[0], (inplanes, planes)),
        "w2": rnd(ks[1], (3, 3, planes, planes)),
        "w3": rnd(ks[2], (planes, planes * 4)),
        # BN1
        "g1": 1.0 + rnd(ks[3], (planes,), 0.1),
        "b1": rnd(ks[4], (planes,), 0.1),
        "m1": rnd(ks[5], (planes,), 0.1),
        "v1": 0.5 + jax.random.uniform(ks[6], (planes,), jnp.float32),
        # BN2
        "g2": 1.0 + rnd(ks[7], (planes,), 0.1),
        "b2": rnd(ks[8], (planes,), 0.1),
        "m2": rnd(ks[9], (planes,), 0.1),
        "v2": 0.5 + jax.random.uniform(ks[10], (planes,), jnp.float32),
        # BN3
        "g3": 1.0 + rnd(ks[11], (planes * 4,), 0.1),
        "b3": rnd(ks[12], (planes * 4,), 0.1),
        "m3": rnd(ks[13], (planes * 4,), 0.1),
        "v3": 0.5 + jax.random.uniform(ks[14], (planes * 4,), jnp.float32),
    }

    x = jax.random.normal(ks[15], (N, inplanes, H, W), jnp.float32)

    out = bottleneck_forward(x, params)
    out = jax.block_until_ready(out)

    ref = bottleneck_reference(x, params)
    assert out.shape == (N, planes * 4, H, W), out.shape
    max_err = float(jnp.max(jnp.abs(out - ref)))
    # bf16 MXU inputs / bf16 residual with f32 accumulation -> loose tolerance.
    assert jnp.allclose(out, ref, rtol=3e-2, atol=3e-2), max_err

    print("KERNEL_OK")
</pallas_src>

<mosaic_0001>
module attributes {stable_mosaic.version = 11 : i64} {
  func.func @_bottleneck_kernel(%arg0: i32, %arg1: i32, %arg2: memref<1x16x16x128xbf16, #tpu.memory_space<vmem>>, %arg3: memref<128x128xbf16, #tpu.memory_space<vmem>>, %arg4: memref<1x128xf32, #tpu.memory_space<vmem>>, %arg5: memref<3x384x128xbf16, #tpu.memory_space<vmem>>, %arg6: memref<1x128xf32, #tpu.memory_space<vmem>>, %arg7: memref<128x128xbf16, #tpu.memory_space<vmem>>, %arg8: memref<1x128xf32, #tpu.memory_space<vmem>>, %arg9: memref<1x16x16x128xf32, #tpu.memory_space<vmem>>, %arg10: memref<18x16x384xbf16, #tpu.memory_space<vmem>>) attributes {dimension_semantics = [#tpu.dimension_semantics<parallel>, #tpu.dimension_semantics<arbitrary>], iteration_bounds = array<i64: 2, 1>, scalar_prefetch = 0 : i64, scratch_operands = 1 : i64, tpu.core_type = #tpu.core_type<tc>, window_params = [{transform_indices = @transform_0, window_bounds = array<i64: 1, 16, 16, 128>}, {pipeline_mode = #tpu.pipeline_mode<synchronous>, transform_indices = @transform_1, window_bounds = array<i64: 128, 128>}, {pipeline_mode = #tpu.pipeline_mode<synchronous>, transform_indices = @transform_2, window_bounds = array<i64: 1, 128>}, {pipeline_mode = #tpu.pipeline_mode<synchronous>, transform_indices = @transform_3, window_bounds = array<i64: 3, 384, 128>}, {pipeline_mode = #tpu.pipeline_mode<synchronous>, transform_indices = @transform_4, window_bounds = array<i64: 1, 128>}, {pipeline_mode = #tpu.pipeline_mode<synchronous>, transform_indices = @transform_5, window_bounds = array<i64: 128, 128>}, {pipeline_mode = #tpu.pipeline_mode<synchronous>, transform_indices = @transform_6, window_bounds = array<i64: 1, 128>}, {transform_indices = @transform_7, window_bounds = array<i64: 1, 16, 16, 128>}]} {
    %c0_i32 = arith.constant 0 : i32
    %0 = arith.cmpi eq, %arg1, %c0_i32 : i32
    %1 = arith.extui %0 : i1 to i32
    %c0_i32_0 = arith.constant 0 : i32
    %2 = arith.cmpi ne, %1, %c0_i32_0 : i32
    scf.if %2 {
      %cst_33 = arith.constant 0.000000e+00 : bf16
      %50 = vector.broadcast %cst_33 : bf16 to vector<18x16x384xbf16>
      %c0_34 = arith.constant 0 : index
      %c0_35 = arith.constant 0 : index
      %c0_36 = arith.constant 0 : index
      %51 = vector.load %arg10[%c0_34, %c0_35, %c0_36] : memref<18x16x384xbf16, #tpu.memory_space<vmem>>, vector<18x16x384xbf16>
      tpu.vector_store %arg10[%c0_34, %c0_35, %c0_36], %50 {strides = array<i32>} : memref<18x16x384xbf16, #tpu.memory_space<vmem>>, vector<18x16x384xbf16>,
      %c0_37 = arith.constant 0 : index
      %c0_38 = arith.constant 0 : index
      %c0_39 = arith.constant 0 : index
      %c0_40 = arith.constant 0 : index
      %52 = vector.load %arg2[%c0_37, %c0_38, %c0_39, %c0_40] : memref<1x16x16x128xbf16, #tpu.memory_space<vmem>>, vector<1x16x16x128xbf16>
      %53 = vector.shape_cast %52 : vector<1x16x16x128xbf16> to vector<256x128xbf16>
      %c0_41 = arith.constant 0 : index
      %c0_42 = arith.constant 0 : index
      %54 = vector.load %arg3[%c0_41, %c0_42] : memref<128x128xbf16, #tpu.memory_space<vmem>>, vector<128x128xbf16>
      %cst_43 = arith.constant dense<0.000000e+00> : vector<256x128xf32>
      %55 = tpu.matmul %53, %54, %cst_43 {dimension_numbers = #tpu.dot_dimension_numbers<[1], [0], [0], [1], [0, 0, 1, 1], [], []>} : vector<256x128xbf16>, vector<128x128xbf16>, vector<256x128xf32> -> vector<256x128xf32>
      %c0_44 = arith.constant 0 : index
      %c0_45 = arith.constant 0 : index
      %56 = vector.load %arg4[%c0_44, %c0_45] : memref<1x128xf32, #tpu.memory_space<vmem>>, vector<1x128xf32>
      %57 = vector.broadcast %56 : vector<1x128xf32> to vector<256x128xf32>
      %58 = arith.addf %55, %57 : vector<256x128xf32>
      %cst_46 = arith.constant 0.000000e+00 : f32
      %59 = vector.broadcast %cst_46 : f32 to vector<256x128xf32>
      %60 = arith.maximumf %58, %59 : vector<256x128xf32>
      %61 = arith.truncf %60 : vector<256x128xf32> to vector<256x128xbf16>
      %62 = vector.shape_cast %61 : vector<256x128xbf16> to vector<16x16x128xbf16>
      %c1_47 = arith.constant 1 : index
      %c0_48 = arith.constant 0 : index
      %c128 = arith.constant 128 : index
      %63 = vector.load %arg10[%c1_47, %c0_48, %c128] : memref<18x16x384xbf16, #tpu.memory_space<vmem>>, vector<16x16x128xbf16>
      tpu.vector_store %arg10[%c1_47, %c0_48, %c128], %62 {strides = array<i32>} : memref<18x16x384xbf16, #tpu.memory_space<vmem>>, vector<16x16x128xbf16>,
      %64 = vector.extract_strided_slice %62 {offsets = [0, 0, 0], sizes = [16, 15, 128], strides = [1, 1, 1]} : vector<16x16x128xbf16> to vector<16x15x128xbf16>
      %c1_49 = arith.constant 1 : index
      %c1_50 = arith.constant 1 : index
      %c0_51 = arith.constant 0 : index
      %65 = vector.load %arg10[%c1_49, %c1_50, %c0_51] : memref<18x16x384xbf16, #tpu.memory_space<vmem>>, vector<16x15x128xbf16>
      tpu.vector_store %arg10[%c1_49, %c1_50, %c0_51], %64 {strides = array<i32>} : memref<18x16x384xbf16, #tpu.memory_space<vmem>>, vector<16x15x128xbf16>,
      %66 = vector.extract_strided_slice %62 {offsets = [0, 1, 0], sizes = [16, 15, 128], strides = [1, 1, 1]} : vector<16x16x128xbf16> to vector<16x15x128xbf16>
      %c1_52 = arith.constant 1 : index
      %c0_53 = arith.constant 0 : index
      %c256 = arith.constant 256 : index
      %67 = vector.load %arg10[%c1_52, %c0_53, %c256] : memref<18x16x384xbf16, #tpu.memory_space<vmem>>, vector<16x15x128xbf16>
      tpu.vector_store %arg10[%c1_52, %c0_53, %c256], %66 {strides = array<i32>} : memref<18x16x384xbf16, #tpu.memory_space<vmem>>, vector<16x15x128xbf16>,
    } else {
    }
    %c16_i32 = arith.constant 16 : i32
    %3 = arith.muli %arg1, %c16_i32 : i32
    %4 = tpu.assume_multiple %3, 16 : i32
    %cst = arith.constant 0.000000e+00 : f32
    %5 = vector.broadcast %cst : f32 to vector<256x128xf32>
    %c0_i32_1 = arith.constant 0 : i32
    %6 = arith.addi %4, %c0_i32_1 : i32
    %7 = arith.index_cast %6 : i32 to index
    %c0 = arith.constant 0 : index
    %c0_2 = arith.constant 0 : index
    %8 = vector.load %arg10[%7, %c0, %c0_2] : memref<18x16x384xbf16, #tpu.memory_space<vmem>>, vector<16x16x384xbf16>
    %9 = vector.shape_cast %8 : vector<16x16x384xbf16> to vector<256x384xbf16>
    %c0_3 = arith.constant 0 : index
    %c0_4 = arith.constant 0 : index
    %c0_5 = arith.constant 0 : index
    %10 = vector.load %arg5[%c0_3, %c0_4, %c0_5] : memref<3x384x128xbf16, #tpu.memory_space<vmem>>, vector<1x384x128xbf16>
    %11 = vector.shape_cast %10 : vector<1x384x128xbf16> to vector<384x128xbf16>
    %cst_6 = arith.constant dense<0.000000e+00> : vector<256x128xf32>
    %12 = tpu.matmul %9, %11, %cst_6 {dimension_numbers = #tpu.dot_dimension_numbers<[1], [0], [0], [1], [0, 0, 1, 1], [], []>} : vector<256x384xbf16>, vector<384x128xbf16>, vector<256x128xf32> -> vector<256x128xf32>
    %13 = arith.addf %5, %12 : vector<256x128xf32>
    %c1_i32 = arith.constant 1 : i32
    %14 = arith.addi %4, %c1_i32 : i32
    %15 = arith.index_cast %14 : i32 to index
    %c0_7 = arith.constant 0 : index
    %c0_8 = arith.constant 0 : index
    %16 = vector.load %arg10[%15, %c0_7, %c0_8] : memref<18x16x384xbf16, #tpu.memory_space<vmem>>, vector<16x16x384xbf16>
    %17 = vector.shape_cast %16 : vector<16x16x384xbf16> to vector<256x384xbf16>
    %c1 = arith.constant 1 : index
    %c0_9 = arith.constant 0 : index
    %c0_10 = arith.constant 0 : index
    %18 = vector.load %arg5[%c1, %c0_9, %c0_10] : memref<3x384x128xbf16, #tpu.memory_space<vmem>>, vector<1x384x128xbf16>
    %19 = vector.shape_cast %18 : vector<1x384x128xbf16> to vector<384x128xbf16>
    %cst_11 = arith.constant dense<0.000000e+00> : vector<256x128xf32>
    %20 = tpu.matmul %17, %19, %cst_11 {dimension_numbers = #tpu.dot_dimension_numbers<[1], [0], [0], [1], [0, 0, 1, 1], [], []>} : vector<256x384xbf16>, vector<384x128xbf16>, vector<256x128xf32> -> vector<256x128xf32>
    %21 = arith.addf %13, %20 : vector<256x128xf32>
    %c2_i32 = arith.constant 2 : i32
    %22 = arith.addi %4, %c2_i32 : i32
    %23 = arith.index_cast %22 : i32 to index
    %c0_12 = arith.constant 0 : index
    %c0_13 = arith.constant 0 : index
    %24 = vector.load %arg10[%23, %c0_12, %c0_13] : memref<18x16x384xbf16, #tpu.memory_space<vmem>>, vector<16x16x384xbf16>
    %25 = vector.shape_cast %24 : vector<16x16x384xbf16> to vector<256x384xbf16>
    %c2 = arith.constant 2 : index
    %c0_14 = arith.constant 0 : index
    %c0_15 = arith.constant 0 : index
    %26 = vector.load %arg5[%c2, %c0_14, %c0_15] : memref<3x384x128xbf16, #tpu.memory_space<vmem>>, vector<1x384x128xbf16>
    %27 = vector.shape_cast %26 : vector<1x384x128xbf16> to vector<384x128xbf16>
    %cst_16 = arith.constant dense<0.000000e+00> : vector<256x128xf32>
    %28 = tpu.matmul %25, %27, %cst_16 {dimension_numbers = #tpu.dot_dimension_numbers<[1], [0], [0], [1], [0, 0, 1, 1], [], []>} : vector<256x384xbf16>, vector<384x128xbf16>, vector<256x128xf32> -> vector<256x128xf32>
    %29 = arith.addf %21, %28 : vector<256x128xf32>
    %c0_17 = arith.constant 0 : index
    %c0_18 = arith.constant 0 : index
    %30 = vector.load %arg6[%c0_17, %c0_18] : memref<1x128xf32, #tpu.memory_space<vmem>>, vector<1x128xf32>
    %31 = vector.broadcast %30 : vector<1x128xf32> to vector<256x128xf32>
    %32 = arith.addf %29, %31 : vector<256x128xf32>
    %cst_19 = arith.constant 0.000000e+00 : f32
    %33 = vector.broadcast %cst_19 : f32 to vector<256x128xf32>
    %34 = arith.maximumf %32, %33 : vector<256x128xf32>
    %35 = arith.truncf %34 : vector<256x128xf32> to vector<256x128xbf16>
    %c0_20 = arith.constant 0 : index
    %c0_21 = arith.constant 0 : index
    %36 = vector.load %arg7[%c0_20, %c0_21] : memref<128x128xbf16, #tpu.memory_space<vmem>>, vector<128x128xbf16>
    %cst_22 = arith.constant dense<0.000000e+00> : vector<256x128xf32>
    %37 = tpu.matmul %35, %36, %cst_22 {dimension_numbers = #tpu.dot_dimension_numbers<[1], [0], [0], [1], [0, 0, 1, 1], [], []>} : vector<256x128xbf16>, vector<128x128xbf16>, vector<256x128xf32> -> vector<256x128xf32>
    %c0_23 = arith.constant 0 : index
    %38 = arith.index_cast %4 : i32 to index
    %c0_24 = arith.constant 0 : index
    %c0_25 = arith.constant 0 : index
    %39 = vector.load %arg2[%c0_23, %38, %c0_24, %c0_25] : memref<1x16x16x128xbf16, #tpu.memory_space<vmem>>, vector<1x16x16x128xbf16>
    %40 = vector.shape_cast %39 : vector<1x16x16x128xbf16> to vector<256x128xbf16>
    %c0_26 = arith.constant 0 : index
    %c0_27 = arith.constant 0 : index
    %41 = vector.load %arg8[%c0_26, %c0_27] : memref<1x128xf32, #tpu.memory_space<vmem>>, vector<1x128xf32>
    %42 = vector.broadcast %41 : vector<1x128xf32> to vector<256x128xf32>
    %43 = arith.addf %37, %42 : vector<256x128xf32>
    %44 = arith.extf %40 : vector<256x128xbf16> to vector<256x128xf32>
    %45 = arith.addf %43, %44 : vector<256x128xf32>
    %cst_28 = arith.constant 0.000000e+00 : f32
    %46 = vector.broadcast %cst_28 : f32 to vector<256x128xf32>
    %47 = arith.maximumf %45, %46 : vector<256x128xf32>
    %48 = vector.shape_cast %47 : vector<256x128xf32> to vector<1x16x16x128xf32>
    %c0_29 = arith.constant 0 : index
    %c0_30 = arith.constant 0 : index
    %c0_31 = arith.constant 0 : index
    %c0_32 = arith.constant 0 : index
    %49 = vector.load %arg9[%c0_29, %c0_30, %c0_31, %c0_32] : memref<1x16x16x128xf32, #tpu.memory_space<vmem>>, vector<1x16x16x128xf32>
    tpu.vector_store %arg9[%c0_29, %c0_30, %c0_31, %c0_32], %48 {strides = array<i32>} : memref<1x16x16x128xf32, #tpu.memory_space<vmem>>, vector<1x16x16x128xf32>,
    return
  }
  func.func @transform_0(%arg0: i32, %arg1: i32) -> (i32, i32, i32, i32) {
    %c0_i32 = arith.constant 0 : i32
    %c0_i32_0 = arith.constant 0 : i32
    %c0_i32_1 = arith.constant 0 : i32
    %c0_i32_2 = arith.constant 0 : i32
    return %arg0, %c0_i32, %c0_i32_0, %c0_i32_1 : i32, i32, i32, i32
  }
  func.func @transform_1(%arg0: i32, %arg1: i32) -> (i32, i32) {
    %c0_i32 = arith.constant 0 : i32
    %c0_i32_0 = arith.constant 0 : i32
    %c0_i32_1 = arith.constant 0 : i32
    return %c0_i32, %c0_i32_0 : i32, i32
  }
  func.func @transform_2(%arg0: i32, %arg1: i32) -> (i32, i32) {
    %c0_i32 = arith.constant 0 : i32
    %c0_i32_0 = arith.constant 0 : i32
    %c0_i32_1 = arith.constant 0 : i32
    return %c0_i32, %c0_i32_0 : i32, i32
  }
  func.func @transform_3(%arg0: i32, %arg1: i32) -> (i32, i32, i32) {
    %c0_i32 = arith.constant 0 : i32
    %c0_i32_0 = arith.constant 0 : i32
    %c0_i32_1 = arith.constant 0 : i32
    %c0_i32_2 = arith.constant 0 : i32
    return %c0_i32, %c0_i32_0, %c0_i32_1 : i32, i32, i32
  }
  func.func @transform_4(%arg0: i32, %arg1: i32) -> (i32, i32) {
    %c0_i32 = arith.constant 0 : i32
    %c0_i32_0 = arith.constant 0 : i32
    %c0_i32_1 = arith.constant 0 : i32
    return %c0_i32, %c0_i32_0 : i32, i32
  }
  func.func @transform_5(%arg0: i32, %arg1: i32) -> (i32, i32) {
    %c0_i32 = arith.constant 0 : i32
    %c0_i32_0 = arith.constant 0 : i32
    %c0_i32_1 = arith.constant 0 : i32
    return %c0_i32, %c0_i32_0 : i32, i32
  }
  func.func @transform_6(%arg0: i32, %arg1: i32) -> (i32, i32) {
    %c0_i32 = arith.constant 0 : i32
    %c0_i32_0 = arith.constant 0 : i32
    %c0_i32_1 = arith.constant 0 : i32
    return %c0_i32, %c0_i32_0 : i32, i32
  }
  func.func @transform_7(%arg0: i32, %arg1: i32) -> (i32, i32, i32, i32) {
    %c0_i32 = arith.constant 0 : i32
    %c0_i32_0 = arith.constant 0 : i32
    %c0_i32_1 = arith.constant 0 : i32
    return %arg0, %arg1, %c0_i32, %c0_i32_0 : i32, i32, i32, i32
  }
}

</mosaic_0001>

<llo_original>
// kernel: bottleneck_forward.1
$region0: #{bottleneck_forward.1}
  #allocation0 [shape = 'u32[]', space=smem, size = 0x4, offset = 0x4, fixed_abs, tag = 'smem constant byte address 0x4 - core index']
  #allocation1 [shape = 'u32[144,128]{1,0:T(1,128)}', space=vmem, size = 0x12000, scoped, tag = 'internal scratch']
  #allocation2 [shape = 'bf16[18,16,384]{2,1,0:T(16,128)(2,1)}', space=vmem, size = 0x36000, scoped, tag = 'scratch operand']
  %s0 = inlined_call_operand.vmem [shape: bf16[2,16,16,128], index: 0, kind: input, shape index: {}]
  %s1 = inlined_call_operand.vmem [shape: bf16[128,128], index: 1, kind: input, shape index: {}]
  %s2 = inlined_call_operand.vmem [shape: f32[1,128], index: 2, kind: input, shape index: {}]
  %s3 = inlined_call_operand.vmem [shape: bf16[3,384,128], index: 3, kind: input, shape index: {}]
  %s4 = inlined_call_operand.vmem [shape: f32[1,128], index: 4, kind: input, shape index: {}]
  %s5 = inlined_call_operand.vmem [shape: bf16[128,128], index: 5, kind: input, shape index: {}]
  %s6 = inlined_call_operand.vmem [shape: f32[1,128], index: 6, kind: input, shape index: {}]
  %s7 = inlined_call_operand.vmem [shape: f32[2,16,16,128], index: 7, kind: output, shape index: {}]
  %s8 = sld [smem:[#allocation0]]
  $region65: #{bottleneck_forward.1} parent=0
    _
  %s10 = ssub.s32 1, %s8
  %s11 = scalar_select 0, %s10, %s8
  loop: start=0, step=1, limit=4
  $region2: #{bottleneck_forward.1} parent=0 // loop_pre_header
    _
  $region3: #{bottleneck_forward.1} parent=0 // loop_header
    %s13 = sphi 0, %s17
    %p14 = scmp.ge.s32.totalorder %s13, 4
    %s20 = sphi 0, %s32
    %s21 = sphi 0, %s28
    %s22 = sphi 0, %s20
    %s23 = sphi 0, %s21
    %s24 = sphi 0, %s22
    %s25 = sphi 0, %s23
    %s35 = sphi 0, %s37
    %s38 = sphi 0, %s35
    %s39 = sphi 0, %s38
    %s55 = sphi 0, %s39
    %s59 = sphi 0, %s59
    %s61 = sphi 0, %s59
    %s62 = sphi 0, %s61
    %s76 = sphi 0, %s62
    %s80 = sphi 0, %s80
    %s82 = sphi 0, %s80
    %s83 = sphi 0, %s82
    %s97 = sphi 0, %s83
    %s101 = sphi 0, %s101
    %s103 = sphi 0, %s101
    %s104 = sphi 0, %s103
    %s118 = sphi 0, %s104
    %s122 = sphi 0, %s122
    %s124 = sphi 0, %s122
    %s125 = sphi 0, %s124
    %s139 = sphi 0, %s125
    %s143 = sphi 0, %s143
    %s145 = sphi 0, %s143
    %s146 = sphi 0, %s145
    %s160 = sphi 0, %s146
    %s164 = sphi 0, %s164
    %s166 = sphi 0, %s164
    %s167 = sphi 0, %s166
    %s181 = sphi 0, %s167
    %s189 = sphi 0, %s191
    %s192 = sphi 0, %s189
    %s193 = sphi 0, %s192
    %s209 = sphi 0, %s193
  $region4: #{bottleneck_forward.1} parent=0 // loop_header_branch
    %16 = sbr.rel (%p14) target = $region8
  $region5: #{bottleneck_forward.1} parent=0 // loop_body
    %s18 = ssub.s32 %s13, 1
    %s19 = ssub.s32 %s13, 2
    %s26 = sadd.s32 1, %s21
    %p27 = scmp.ge.s32.totalorder %s26, 1
    %s28 = scalar_select %p27, 0, %s26
    %s29 = sadd.s32 1, %s20
    %s30 = scalar_select %p27, %s29, %s20
    %p31 = scmp.ge.s32.totalorder %s30, 2
    %s32 = scalar_select %p31, 0, %s30
    %s33 = ssub.s32 %s20, %s32
    %p34 = scmp.eq.s32.totalorder %s33, 0
    %s36 = sadd.s32 %s35, 1
    %s37 = scalar_select %p34, %s35, %s36
    %p40 = pneg %p34
    %p41 = scmp.eq.s32.totalorder %s13, 1
    %p42 = por %p40, %p41
    %p43 = scmp.ne.s32.totalorder %s35, %s38
    %p44 = scmp.eq.s32.totalorder %s13, 0
    %p45 = por %p43, %p44
    %p46 = scmp.ne.s32.totalorder %s35, %s38
    %p47 = scmp.eq.s32.totalorder %s18, 1
    %p48 = por %p46, %p47
    %p49 = scmp.ne.s32.totalorder %s38, %s39
    %p50 = scmp.eq.s32.totalorder %s18, 0
    %p51 = por %p49, %p50
    %p52 = scmp.ne.s32.totalorder %s38, %s39
    %p53 = scmp.eq.s32.totalorder %s19, 1
    %p54 = por %p52, %p53
    %p56 = scmp.ne.s32.totalorder %s39, %s55
    %p57 = scmp.eq.s32.totalorder %s19, 0
    %p58 = por %p56, %p57
    %s60 = sadd.s32 %s59, 1
    %p63 = scmp.eq.s32.totalorder %s13, 1
    %p64 = scmp.ne.s32.totalorder %s59, %s61
    %p65 = scmp.eq.s32.totalorder %s13, 0
    %p66 = por %p64, %p65
    %p67 = scmp.ne.s32.totalorder %s59, %s61
    %p68 = scmp.eq.s32.totalorder %s18, 1
    %p69 = por %p67, %p68
    %p70 = scmp.ne.s32.totalorder %s61, %s62
    %p71 = scmp.eq.s32.totalorder %s18, 0
    %p72 = por %p70, %p71
    %p73 = scmp.ne.s32.totalorder %s61, %s62
    %p74 = scmp.eq.s32.totalorder %s19, 1
    %p75 = por %p73, %p74
    %p77 = scmp.ne.s32.totalorder %s62, %s76
    %p78 = scmp.eq.s32.totalorder %s19, 0
    %p79 = por %p77, %p78
    %s81 = sadd.s32 %s80, 1
    %p84 = scmp.eq.s32.totalorder %s13, 1
    %p85 = scmp.ne.s32.totalorder %s80, %s82
    %p86 = scmp.eq.s32.totalorder %s13, 0
    %p87 = por %p85, %p86
    %p88 = scmp.ne.s32.totalorder %s80, %s82
    %p89 = scmp.eq.s32.totalorder %s18, 1
    %p90 = por %p88, %p89
    %p91 = scmp.ne.s32.totalorder %s82, %s83
    %p92 = scmp.eq.s32.totalorder %s18, 0
    %p93 = por %p91, %p92
    %p94 = scmp.ne.s32.totalorder %s82, %s83
    %p95 = scmp.eq.s32.totalorder %s19, 1
    %p96 = por %p94, %p95
    %p98 = scmp.ne.s32.totalorder %s83, %s97
    %p99 = scmp.eq.s32.totalorder %s19, 0
    %p100 = por %p98, %p99
    %s102 = sadd.s32 %s101, 1
    %p105 = scmp.eq.s32.totalorder %s13, 1
    %p106 = scmp.ne.s32.totalorder %s101, %s103
    %p107 = scmp.eq.s32.totalorder %s13, 0
    %p108 = por %p106, %p107
    %p109 = scmp.ne.s32.totalorder %s101, %s103
    %p110 = scmp.eq.s32.totalorder %s18, 1
    %p111 = por %p109, %p110
    %p112 = scmp.ne.s32.totalorder %s103, %s104
    %p113 = scmp.eq.s32.totalorder %s18, 0
    %p114 = por %p112, %p113
    %p115 = scmp.ne.s32.totalorder %s103, %s104
    %p116 = scmp.eq.s32.totalorder %s19, 1
    %p117 = por %p115, %p116
    %p119 = scmp.ne.s32.totalorder %s104, %s118
    %p120 = scmp.eq.s32.totalorder %s19, 0
    %p121 = por %p119, %p120
    %s123 = sadd.s32 %s122, 1
    %p126 = scmp.eq.s32.totalorder %s13, 1
    %p127 = scmp.ne.s32.totalorder %s122, %s124
    %p128 = scmp.eq.s32.totalorder %s13, 0
    %p129 = por %p127, %p128
    %p130 = scmp.ne.s32.totalorder %s122, %s124
    %p131 = scmp.eq.s32.totalorder %s18, 1
    %p132 = por %p130, %p131
    %p133 = scmp.ne.s32.totalorder %s124, %s125
    %p134 = scmp.eq.s32.totalorder %s18, 0
    %p135 = por %p133, %p134
    %p136 = scmp.ne.s32.totalorder %s124, %s125
    %p137 = scmp.eq.s32.totalorder %s19, 1
    %p138 = por %p136, %p137
    %p140 = scmp.ne.s32.totalorder %s125, %s139
    %p141 = scmp.eq.s32.totalorder %s19, 0
    %p142 = por %p140, %p141
    %s144 = sadd.s32 %s143, 1
    %p147 = scmp.eq.s32.totalorder %s13, 1
    %p148 = scmp.ne.s32.totalorder %s143, %s145
    %p149 = scmp.eq.s32.totalorder %s13, 0
    %p150 = por %p148, %p149
    %p151 = scmp.ne.s32.totalorder %s143, %s145
    %p152 = scmp.eq.s32.totalorder %s18, 1
    %p153 = por %p151, %p152
    %p154 = scmp.ne.s32.totalorder %s145, %s146
    %p155 = scmp.eq.s32.totalorder %s18, 0
    %p156 = por %p154, %p155
    %p157 = scmp.ne.s32.totalorder %s145, %s146
    %p158 = scmp.eq.s32.totalorder %s19, 1
    %p159 = por %p157, %p158
    %p161 = scmp.ne.s32.totalorder %s146, %s160
    %p162 = scmp.eq.s32.totalorder %s19, 0
    %p163 = por %p161, %p162
    %s165 = sadd.s32 %s164, 1
    %p168 = scmp.eq.s32.totalorder %s13, 1
    %p169 = scmp.ne.s32.totalorder %s164, %s166
    %p170 = scmp.eq.s32.totalorder %s13, 0
    %p171 = por %p169, %p170
    %p172 = scmp.ne.s32.totalorder %s164, %s166
    %p173 = scmp.eq.s32.totalorder %s18, 1
    %p174 = por %p172, %p173
    %p175 = scmp.ne.s32.totalorder %s166, %s167
    %p176 = scmp.eq.s32.totalorder %s18, 0
    %p177 = por %p175, %p176
    %p178 = scmp.ne.s32.totalorder %s166, %s167
    %p179 = scmp.eq.s32.totalorder %s19, 1
    %p180 = por %p178, %p179
    %p182 = scmp.ne.s32.totalorder %s167, %s181
    %p183 = scmp.eq.s32.totalorder %s19, 0
    %p184 = por %p182, %p183
    %s185 = ssub.s32 %s20, %s32
    %s186 = ssub.s32 %s21, %s28
    %s187 = sor.u32 %s185, %s186
    %p188 = scmp.eq.s32.totalorder %s187, 0
    %s190 = sadd.s32 %s189, 1
    %s191 = scalar_select %p188, %s189, %s190
    %p194 = pneg %p188
    %p195 = scmp.eq.s32.totalorder %s13, 1
    %p196 = por %p194, %p195
    %p197 = scmp.ne.s32.totalorder %s189, %s192
    %p198 = scmp.eq.s32.totalorder %s13, 0
    %p199 = por %p197, %p198
    %p200 = scmp.ne.s32.totalorder %s189, %s192
    %p201 = scmp.eq.s32.totalorder %s18, 1
    %p202 = por %p200, %p201
    %p203 = scmp.ne.s32.totalorder %s192, %s193
    %p204 = scmp.eq.s32.totalorder %s18, 0
    %p205 = por %p203, %p204
    %p206 = scmp.ne.s32.totalorder %s192, %s193
    %p207 = scmp.eq.s32.totalorder %s19, 1
    %p208 = por %p206, %p207
    %p210 = scmp.ne.s32.totalorder %s193, %s209
    %p211 = scmp.eq.s32.totalorder %s19, 0
    %p212 = por %p210, %p211
    %p213 = scmp.le.s32.totalorder 1, %s13
    %p214 = scmp.lt.s32.totalorder %s13, 3
    %p215 = pnand %p213, %p214
    %p216 = pneg %p215
    // Predicated region
    $region9: #{bottleneck_forward.1} parent=5 // pred_check
      _
    $region10: #{bottleneck_forward.1} parent=5 // pred_check_branch
      %218 = sbr.rel (%p215) target = $region12
    $region11: #{bottleneck_forward.1} parent=5 // pred_region
      %s219 = ssub.s32 %s13, 1
      // Predicated region
      $region13: #{bottleneck_forward.1} parent=11 // pred_check
        %p220 = pneg %p72
      $region14: #{bottleneck_forward.1} parent=11 // pred_check_branch
        %222 = sbr.rel (%p220) target = $region16
      $region15: #{bottleneck_forward.1} parent=11 // pred_region
        _
      $region16: #{bottleneck_forward.1} parent=11 // pred_fallthru
        _
      // Predicated region
      $region17: #{bottleneck_forward.1} parent=11 // pred_check
        %p223 = pneg %p93
      $region18: #{bottleneck_forward.1} parent=11 // pred_check_branch
        %225 = sbr.rel (%p223) target = $region20
      $region19: #{bottleneck_forward.1} parent=11 // pred_region
        _
      $region20: #{bottleneck_forward.1} parent=11 // pred_fallthru
        _
      // Predicated region
      $region21: #{bottleneck_forward.1} parent=11 // pred_check
        %p226 = pneg %p114
      $region22: #{bottleneck_forward.1} parent=11 // pred_check_branch
        %228 = sbr.rel (%p226) target = $region24
      $region23: #{bottleneck_forward.1} parent=11 // pred_region
        _
      $region24: #{bottleneck_forward.1} parent=11 // pred_fallthru
        _
      // Predicated region
      $region25: #{bottleneck_forward.1} parent=11 // pred_check
        %p229 = pneg %p135
      $region26: #{bottleneck_forward.1} parent=11 // pred_check_branch
        %231 = sbr.rel (%p229) target = $region28
      $region27: #{bottleneck_forward.1} parent=11 // pred_region
        _
      $region28: #{bottleneck_forward.1} parent=11 // pred_fallthru
        _
      // Predicated region
      $region29: #{bottleneck_forward.1} parent=11 // pred_check
        %p232 = pneg %p156
      $region30: #{bottleneck_forward.1} parent=11 // pred_check_branch
        %234 = sbr.rel (%p232) target = $region32
      $region31: #{bottleneck_forward.1} parent=11 // pred_region
        _
      $region32: #{bottleneck_forward.1} parent=11 // pred_fallthru
        _
      // Predicated region
      $region33: #{bottleneck_forward.1} parent=11 // pred_check
        %p235 = pneg %p177
      $region34: #{bottleneck_forward.1} parent=11 // pred_check_branch
        %237 = sbr.rel (%p235) target = $region36
      $region35: #{bottleneck_forward.1} parent=11 // pred_region
        _
      $region36: #{bottleneck_forward.1} parent=11 // pred_fallthru
        _
    $region12: #{bottleneck_forward.1} parent=5 // pred_fallthru
      _
    %p238 = scmp.lt.s32.totalorder %s13, 2
    // Predicated region
    $region37: #{bottleneck_forward.1} parent=5 // pred_check
      %p239 = pneg %p238
    $region38: #{bottleneck_forward.1} parent=5 // pred_check_branch
      %241 = sbr.rel (%p239) target = $region40
    $region39: #{bottleneck_forward.1} parent=5 // pred_region
      // Predicated region
      $region41: #{bottleneck_forward.1} parent=39 // pred_check
        %p242 = pneg %p45
      $region42: #{bottleneck_forward.1} parent=39 // pred_check_branch
        %244 = sbr.rel (%p242) target = $region44
      $region43: #{bottleneck_forward.1} parent=39 // pred_region
        %p245 = scmp.lt.s32.totalorder %s20, 1
        %s246 = scalar_select %p245, %s20, 1
        %s247 = smul.addr %s246, 32
        %s248 = smul.addr %s247, 4
        %s249 = scalar_lea.vmem %s0, %s248
      $region44: #{bottleneck_forward.1} parent=39 // pred_fallthru
        _
    $region40: #{bottleneck_forward.1} parent=5 // pred_fallthru
      _
    %p250 = scmp.le.s32.totalorder 1, %s13
    %p251 = scmp.lt.s32.totalorder %s13, 3
    %p252 = pnand %p250, %p251
    %p253 = pneg %p252
    // Predicated region
    $region45: #{bottleneck_forward.1} parent=5 // pred_check
      _
    $region46: #{bottleneck_forward.1} parent=5 // pred_check_branch
      %255 = sbr.rel (%p252) target = $region48
    $region47: #{bottleneck_forward.1} parent=5 // pred_region
      %s256 = ssub.s32 %s13, 1
      %p257 = scmp.lt.s32.totalorder %s22, 1
      %s258 = scalar_select %p257, %s22, 1
      %s259 = smul.addr %s258, 32
      %s260 = smul.addr %s259, 4
      %s261 = scalar_lea.vmem %s0, %s260
      %p262 = pneg %p51
      %p263 = pneg %p48
      %p264 = pneg %p72
      %p265 = pneg %p69
      %p266 = pneg %p93
      %p267 = pneg %p90
      %p268 = pneg %p114
      %p269 = pneg %p111
      %p270 = pneg %p135
      %p271 = pneg %p132
      %p272 = pneg %p156
      %p273 = pneg %p153
      %p274 = pneg %p177
      %p275 = pneg %p174
      %p276 = pneg %p205
      %p277 = pneg %p202
      %s278 = smul.u32 16, %s23
      %p279 = scmp.lt.s32.totalorder %s22, 1
      %s280 = scalar_select %p279, %s22, 1
      %p281 = scmp.lt.s32.totalorder %s278, 15
      %s282 = scalar_select %p281, %s278, 15
      %s283 = smul.addr %s282, 2
      %s284 = smul.addr %s280, 32
      %s285 = sadd.s32 %s283, %s284
      %s286 = smul.addr %s285, 8
      %s287 = scalar_lea.vmem %s7, %s286
      %p288 = scmp.lt.s32.totalorder %s22, 1
      %s289 = scalar_select %p288, %s22, 1
      %s290 = smul.addr %s289, 32
      %s291 = smul.addr %s290, 4
      %s292 = scalar_lea.vmem %s0, %s291
      %s293 = smul.u32 16, %s23
      %p294 = scmp.lt.s32.totalorder %s22, 1
      %s295 = scalar_select %p294, %s22, 1
      %p296 = scmp.lt.s32.totalorder %s293, 15
      %s297 = scalar_select %p296, %s293, 15
      %s298 = smul.addr %s297, 2
      %s299 = smul.addr %s295, 32
      %s300 = sadd.s32 %s298, %s299
      %s301 = smul.addr %s300, 8
      %s302 = scalar_lea.vmem %s7, %s301
      %s303 = smul.u32 16, %s23
      %p305 = scmp.eq.s32.totalorder %s23, 0
      // Predicated region
      $region49: #{bottleneck_forward.1} parent=47 // pred_check
        %p306 = pneg %p305
      $region50: #{bottleneck_forward.1} parent=47 // pred_check_branch
        %308 = sbr.rel (%p306) target = $region52
      $region51: #{bottleneck_forward.1} parent=47 // pred_region
        %309 = vst [vmem:[#allocation2] sm:$0xff] 0
        %310 = vst [vmem:[#allocation2 + $0x8] sm:$0xff] 0
        %311 = vst [vmem:[#allocation2 + $0x10] sm:$0xff] 0
        %312 = vst [vmem:[#allocation2 + $0x18] sm:$0xff] 0
        %313 = vst [vmem:[#allocation2 + $0x20] sm:$0xff] 0
        %314 = vst [vmem:[#allocation2 + $0x28] sm:$0xff] 0
        %315 = vst [vmem:[#allocation2 + $0x30] sm:$0xff] 0
        %316 = vst [vmem:[#allocation2 + $0x38] sm:$0xff] 0
        %317 = vst [vmem:[#allocation2 + $0x40] sm:$0xff] 0
        %318 = vst [vmem:[#allocation2 + $0x48] sm:$0xff] 0
        %319 = vst [vmem:[#allocation2 + $0x50] sm:$0xff] 0
        %320 = vst [vmem:[#allocation2 + $0x58] sm:$0xff] 0
        %321 = vst [vmem:[#allocation2 + $0x60] sm:$0xff] 0
        %322 = vst [vmem:[#allocation2 + $0x68] sm:$0xff] 0
        %323 = vst [vmem:[#allocation2 + $0x70] sm:$0xff] 0
        %324 = vst [vmem:[#allocation2 + $0x78] sm:$0xff] 0
        %325 = vst [vmem:[#allocation2 + $0x80] sm:$0xff] 0
        %326 = vst [vmem:[#allocation2 + $0x88] sm:$0xff] 0
        %327 = vst [vmem:[#allocation2 + $0x90] sm:$0xff] 0
        %328 = vst [vmem:[#allocation2 + $0x98] sm:$0xff] 0
        %329 = vst [vmem:[#allocation2 + $0xa0] sm:$0xff] 0
        %330 = vst [vmem:[#allocation2 + $0xa8] sm:$0xff] 0
        %331 = vst [vmem:[#allocation2 + $0xb0] sm:$0xff] 0
        %332 = vst [vmem:[#allocation2 + $0xb8] sm:$0xff] 0
        %333 = vst [vmem:[#allocation2 + $0xc0] sm:$0xff] 0
        %334 = vst [vmem:[#allocation2 + $0xc8] sm:$0xff] 0
        %335 = vst [vmem:[#allocation2 + $0xd0] sm:$0xff] 0
        %336 = vst [vmem:[#allocation2 + $0xd8] sm:$0xff] 0
        %337 = vst [vmem:[#allocation2 + $0xe0] sm:$0xff] 0
        %338 = vst [vmem:[#allocation2 + $0xe8] sm:$0xff] 0
        %339 = vst [vmem:[#allocation2 + $0xf0] sm:$0xff] 0
        %340 = vst [vmem:[#allocation2 + $0xf8] sm:$0xff] 0
        %341 = vst [vmem:[#allocation2 + $0x100] sm:$0xff] 0
        %342 = vst [vmem:[#allocation2 + $0x108] sm:$0xff] 0
        %343 = vst [vmem:[#allocation2 + $0x110] sm:$0xff] 0
        %344 = vst [vmem:[#allocation2 + $0x118] sm:$0xff] 0
        %345 = vst [vmem:[#allocation2 + $0x120] sm:$0xff] 0
        %346 = vst [vmem:[#allocation2 + $0x128] sm:$0xff] 0
        %347 = vst [vmem:[#allocation2 + $0x130] sm:$0xff] 0
        %348 = vst [vmem:[#allocation2 + $0x138] sm:$0xff] 0
        %349 = vst [vmem:[#allocation2 + $0x140] sm:$0xff] 0
        %350 = vst [vmem:[#allocation2 + $0x148] sm:$0xff] 0
        %351 = vst [vmem:[#allocation2 + $0x150] sm:$0xff] 0
        %352 = vst [vmem:[#allocation2 + $0x158] sm:$0xff] 0
        %353 = vst [vmem:[#allocation2 + $0x160] sm:$0xff] 0
        %354 = vst [vmem:[#allocation2 + $0x168] sm:$0xff] 0
        %355 = vst [vmem:[#allocation2 + $0x170] sm:$0xff] 0
        %356 = vst [vmem:[#allocation2 + $0x178] sm:$0xff] 0
        %357 = vst [vmem:[#allocation2 + $0x180] sm:$0xff] 0
        %358 = vst [vmem:[#allocation2 + $0x188] sm:$0xff] 0
        %359 = vst [vmem:[#allocation2 + $0x190] sm:$0xff] 0
        %360 = vst [vmem:[#allocation2 + $0x198] sm:$0xff] 0
        %361 = vst [vmem:[#allocation2 + $0x1a0] sm:$0xff] 0
        %362 = vst [vmem:[#allocation2 + $0x1a8] sm:$0xff] 0
        %v363 = vld [vmem:[%s292] sm:$0xf]
        %v364 = vld [vmem:[%s292 + $0x4] sm:$0xf]
        %v365 = vld [vmem:[%s292 + $0x8] sm:$0xf]
        %v366 = vld [vmem:[%s292 + $0xc] sm:$0xf]
        %v367 = vld [vmem:[%s292 + $0x10] sm:$0xf]
        %v368 = vld [vmem:[%s292 + $0x14] sm:$0xf]
        %v369 = vld [vmem:[%s292 + $0x18] sm:$0xf]
        %v370 = vld [vmem:[%s292 + $0x1c] sm:$0xf]
        %v371 = vld [vmem:[%s292 + $0x20] sm:$0xf]
        %v372 = vld [vmem:[%s292 + $0x24] sm:$0xf]
        %v373 = vld [vmem:[%s292 + $0x28] sm:$0xf]
        %v374 = vld [vmem:[%s292 + $0x2c] sm:$0xf]
        %v375 = vld [vmem:[%s292 + $0x30] sm:$0xf]
        %v376 = vld [vmem:[%s292 + $0x34] sm:$0xf]
        %v377 = vld [vmem:[%s292 + $0x38] sm:$0xf]
        %v378 = vld [vmem:[%s292 + $0x3c] sm:$0xf]
        %v379 = vld [vmem:[%s292 + $0x40] sm:$0xf]
        %v380 = vld [vmem:[%s292 + $0x44] sm:$0xf]
        %v381 = vld [vmem:[%s292 + $0x48] sm:$0xf]
        %v382 = vld [vmem:[%s292 + $0x4c] sm:$0xf]
        %v383 = vld [vmem:[%s292 + $0x50] sm:$0xf]
        %v384 = vld [vmem:[%s292 + $0x54] sm:$0xf]
        %v385 = vld [vmem:[%s292 + $0x58] sm:$0xf]
        %v386 = vld [vmem:[%s292 + $0x5c] sm:$0xf]
        %v387 = vld [vmem:[%s292 + $0x60] sm:$0xf]
        %v388 = vld [vmem:[%s292 + $0x64] sm:$0xf]
        %v389 = vld [vmem:[%s292 + $0x68] sm:$0xf]
        %v390 = vld [vmem:[%s292 + $0x6c] sm:$0xf]
        %v391 = vld [vmem:[%s292 + $0x70] sm:$0xf]
        %v392 = vld [vmem:[%s292 + $0x74] sm:$0xf]
        %v393 = vld [vmem:[%s292 + $0x78] sm:$0xf]
        %v394 = vld [vmem:[%s292 + $0x7c] sm:$0xf]
        %v395 = vld [vmem:[%s1] sm:$0xf]
        %v396 = vld [vmem:[%s1 + $0x4] sm:$0xf]
        %v397 = vld [vmem:[%s1 + $0x8] sm:$0xf]
        %v398 = vld [vmem:[%s1 + $0xc] sm:$0xf]
        %v399 = vld [vmem:[%s1 + $0x10] sm:$0xf]
        %v400 = vld [vmem:[%s1 + $0x14] sm:$0xf]
        %v401 = vld [vmem:[%s1 + $0x18] sm:$0xf]
        %v402 = vld [vmem:[%s1 + $0x1c] sm:$0xf]
        %v403 = vld [vmem:[%s1 + $0x20] sm:$0xf]
        %v404 = vld [vmem:[%s1 + $0x24] sm:$0xf]
        %v405 = vld [vmem:[%s1 + $0x28] sm:$0xf]
        %v406 = vld [vmem:[%s1 + $0x2c] sm:$0xf]
        %v407 = vld [vmem:[%s1 + $0x30] sm:$0xf]
        %v408 = vld [vmem:[%s1 + $0x34] sm:$0xf]
        %v409 = vld [vmem:[%s1 + $0x38] sm:$0xf]
        %v410 = vld [vmem:[%s1 + $0x3c] sm:$0xf]
        %v411 = vld [vmem:[%s2] sm:$0x1]
        %v413 = vlaneseq
        %v414 = vshrl.u32 %v413, 7
        %v415 = vsub.s32 0, %v414
        %v416 = vrot.slane %v411, %v415
        %v450 = vunpack.c.l.b16 %v363
        %v451 = vunpack.c.l.b16 %v364
        %v452 = vunpack.c.l.b16 %v365
        %v453 = vunpack.c.l.b16 %v366
        %v454 = vunpack.c.l.b16 %v367
        %v455 = vunpack.c.l.b16 %v368
        %v456 = vunpack.c.l.b16 %v369
        %v457 = vunpack.c.l.b16 %v370
        %v458 = vunpack.c.l.b16 %v371
        %v459 = vunpack.c.l.b16 %v372
        %v460 = vunpack.c.l.b16 %v373
        %v461 = vunpack.c.l.b16 %v374
        %v462 = vunpack.c.l.b16 %v375
        %v463 = vunpack.c.l.b16 %v376
        %v464 = vunpack.c.l.b16 %v377
        %v465 = vunpack.c.l.b16 %v378
        %v466 = vunpack.c.l.b16 %v379
        %v467 = vunpack.c.l.b16 %v380
        %v468 = vunpack.c.l.b16 %v381
        %v469 = vunpack.c.l.b16 %v382
        %v470 = vunpack.c.l.b16 %v383
        %v471 = vunpack.c.l.b16 %v384
        %v472 = vunpack.c.l.b16 %v385
        %v473 = vunpack.c.l.b16 %v386
        %v474 = vunpack.c.l.b16 %v387
        %v475 = vunpack.c.l.b16 %v388
        %v476 = vunpack.c.l.b16 %v389
        %v477 = vunpack.c.l.b16 %v390
        %v478 = vunpack.c.l.b16 %v391
        %v479 = vunpack.c.l.b16 %v392
        %v480 = vunpack.c.l.b16 %v393
        %v481 = vunpack.c.l.b16 %v394
        %v482 = vpack.c.b16 %v451, %v450
        %v483 = vpack.c.b16 %v453, %v452
        %v484 = vpack.c.b16 %v455, %v454
        %v485 = vpack.c.b16 %v457, %v456
        %v486 = vpack.c.b16 %v459, %v458
        %v487 = vpack.c.b16 %v461, %v460
        %v488 = vpack.c.b16 %v463, %v462
        %v489 = vpack.c.b16 %v465, %v464
        %v490 = vpack.c.b16 %v467, %v466
        %v491 = vpack.c.b16 %v469, %v468
        %v492 = vpack.c.b16 %v471, %v470
        %v493 = vpack.c.b16 %v473, %v472
        %v494 = vpack.c.b16 %v475, %v474
        %v495 = vpack.c.b16 %v477, %v476
        %v496 = vpack.c.b16 %v479, %v478
        %v497 = vpack.c.b16 %v481, %v480
        %v530 = vunpack.c.l.b16 %v395
        %v531 = vunpack.c.l.b16 %v396
        %v532 = vunpack.c.l.b16 %v397
        %v533 = vunpack.c.l.b16 %v398
        %v534 = vunpack.c.l.b16 %v399
        %v535 = vunpack.c.l.b16 %v400
        %v536 = vunpack.c.l.b16 %v401
        %v537 = vunpack.c.l.b16 %v402
        %v538 = vunpack.c.l.b16 %v403
        %v539 = vunpack.c.l.b16 %v404
        %v540 = vunpack.c.l.b16 %v405
        %v541 = vunpack.c.l.b16 %v406
        %v542 = vunpack.c.l.b16 %v407
        %v543 = vunpack.c.l.b16 %v408
        %v544 = vunpack.c.l.b16 %v409
        %v545 = vunpack.c.l.b16 %v410
        %v546 = vpack.c.b16 %v531, %v530
        %v547 = vpack.c.b16 %v533, %v532
        %v548 = vpack.c.b16 %v535, %v534
        %v549 = vpack.c.b16 %v537, %v536
        %v550 = vpack.c.b16 %v539, %v538
        %v551 = vpack.c.b16 %v541, %v540
        %v552 = vpack.c.b16 %v543, %v542
        %v553 = vpack.c.b16 %v545, %v544
        %562 = vmatprep.subr.bf16.mxu0 0
        %563 = vmatpush1.bf16.msra.mxu0 %v546
        %564 = vmatprep.subr.bf16.mxu0 0
        %565 = vmatpush1.bf16.msra.mxu0 %v547
        %566 = vmatprep.subr.bf16.mxu0 0
        %567 = vmatpush1.bf16.msra.mxu0 %v548
        %568 = vmatprep.subr.bf16.mxu0 0
        %569 = vmatpush1.bf16.msra.mxu0 %v549
        %570 = vmatprep.subr.bf16.mxu0 0
        %571 = vmatpush1.bf16.msra.mxu0 %v550
        %572 = vmatprep.subr.bf16.mxu0 0
        %573 = vmatpush1.bf16.msra.mxu0 %v551
        %574 = vmatprep.subr.bf16.mxu0 0
        %575 = vmatpush1.bf16.msra.mxu0 %v552
        %576 = vmatprep.subr.bf16.mxu0 0
        %577 = vmatpush1.bf16.msra.mxu0 %v553
        %578 = vmatprep.subr.bf16.mxu0 0
        %579 = vmatpush1.bf16.msra.mxu0 0
        %580 = vmatprep.subr.bf16.mxu0 0
        %581 = vmatpush1.bf16.msra.mxu0 0
        %582 = vmatprep.subr.bf16.mxu0 0
        %583 = vmatpush1.bf16.msra.mxu0 0
        %584 = vmatprep.subr.bf16.mxu0 0
        %585 = vmatpush1.bf16.msra.mxu0 0
        %586 = vmatprep.subr.bf16.mxu0 0
        %587 = vmatpush1.bf16.msra.mxu0 0
        %588 = vmatprep.subr.bf16.mxu0 0
        %589 = vmatpush1.bf16.msra.mxu0 0
        %590 = vmatprep.subr.bf16.mxu0 0
        %591 = vmatpush1.bf16.msra.mxu0 0
        %592 = vmatprep.subr.bf16.mxu0 0
        %593 = vmatpush1.bf16.msra.mxu0 0
        %594 = vmatprep.mubr.bf16.mxu0 0
        %595 = vmatmul.mubr.bf16.gmra.mrb[0].mxu0 %v482
        %v596 = vpop.f32.mrb[0].mxu0
        %v597 = vadd.f32 %v416, %v596
        %v598 = vpop.f32.mrb[0].mxu0
        %v599 = vpop.f32.mrb[0].mxu0
        %v600 = vadd.f32 %v416, %v599
        %v601 = vpop.f32.mrb[0].mxu0
        %602 = vmatprep.mubr.bf16.mxu0 0
        %603 = vmatmul.mubr.bf16.gmra.mrb[0].mxu0 %v483
        %v604 = vpop.f32.mrb[0].mxu0
        %v605 = vadd.f32 %v416, %v604
        %v606 = vpop.f32.mrb[0].mxu0
        %v607 = vpop.f32.mrb[0].mxu0
        %v608 = vadd.f32 %v416, %v607
        %v609 = vpop.f32.mrb[0].mxu0
        %610 = vmatprep.mubr.bf16.mxu0 0
        %611 = vmatmul.mubr.bf16.gmra.mrb[0].mxu0 %v484
        %v612 = vpop.f32.mrb[0].mxu0
        %v613 = vadd.f32 %v416, %v612
        %v614 = vpop.f32.mrb[0].mxu0
        %v615 = vpop.f32.mrb[0].mxu0
        %v616 = vadd.f32 %v416, %v615
        %v617 = vpop.f32.mrb[0].mxu0
        %618 = vmatprep.mubr.bf16.mxu0 0
        %619 = vmatmul.mubr.bf16.gmra.mrb[0].mxu0 %v485
        %v620 = vpop.f32.mrb[0].mxu0
        %v621 = vadd.f32 %v416, %v620
        %v622 = vpop.f32.mrb[0].mxu0
        %v623 = vpop.f32.mrb[0].mxu0
        %v624 = vadd.f32 %v416, %v623
        %v625 = vpop.f32.mrb[0].mxu0
        %626 = vmatprep.mubr.bf16.mxu0 0
        %627 = vmatmul.mubr.bf16.gmra.mrb[0].mxu0 %v486
        %v628 = vpop.f32.mrb[0].mxu0
        %v629 = vadd.f32 %v416, %v628
        %v630 = vpop.f32.mrb[0].mxu0
        %v631 = vpop.f32.mrb[0].mxu0
        %v632 = vadd.f32 %v416, %v631
        %v633 = vpop.f32.mrb[0].mxu0
        %634 = vmatprep.mubr.bf16.mxu0 0
        %635 = vmatmul.mubr.bf16.gmra.mrb[0].mxu0 %v487
        %v636 = vpop.f32.mrb[0].mxu0
        %v637 = vadd.f32 %v416, %v636
        %v638 = vpop.f32.mrb[0].mxu0
        %v639 = vpop.f32.mrb[0].mxu0
        %v640 = vadd.f32 %v416, %v639
        %v641 = vpop.f32.mrb[0].mxu0
        %642 = vmatprep.mubr.bf16.mxu0 0
        %643 = vmatmul.mubr.bf16.gmra.mrb[0].mxu0 %v488
        %v644 = vpop.f32.mrb[0].mxu0
        %v645 = vadd.f32 %v416, %v644
        %v646 = vpop.f32.mrb[0].mxu0
        %v647 = vpop.f32.mrb[0].mxu0
        %v648 = vadd.f32 %v416, %v647
        %v649 = vpop.f32.mrb[0].mxu0
        %650 = vmatprep.mubr.bf16.mxu0 0
        %651 = vmatmul.mubr.bf16.gmra.mrb[0].mxu0 %v489
        %v652 = vpop.f32.mrb[0].mxu0
        %v653 = vadd.f32 %v416, %v652
        %v654 = vpop.f32.mrb[0].mxu0
        %v655 = vpop.f32.mrb[0].mxu0
        %v656 = vadd.f32 %v416, %v655
        %v657 = vpop.f32.mrb[0].mxu0
        %658 = vmatprep.mubr.bf16.mxu0 0
        %659 = vmatmul.mubr.bf16.gmra.mrb[0].mxu0 %v490
        %v660 = vpop.f32.mrb[0].mxu0
        %v661 = vadd.f32 %v416, %v660
        %v662 = vpop.f32.mrb[0].mxu0
        %v663 = vpop.f32.mrb[0].mxu0
        %v664 = vadd.f32 %v416, %v663
        %v665 = vpop.f32.mrb[0].mxu0
        %666 = vmatprep.mubr.bf16.mxu0 0
        %667 = vmatmul.mubr.bf16.gmra.mrb[0].mxu0 %v491
        %v668 = vpop.f32.mrb[0].mxu0
        %v669 = vadd.f32 %v416, %v668
        %v670 = vpop.f32.mrb[0].mxu0
        %v671 = vpop.f32.mrb[0].mxu0
        %v672 = vadd.f32 %v416, %v671
        %v673 = vpop.f32.mrb[0].mxu0
        %674 = vmatprep.mubr.bf16.mxu0 0
        %675 = vmatmul.mubr.bf16.gmra.mrb[0].mxu0 %v492
        %v676 = vpop.f32.mrb[0].mxu0
        %v677 = vadd.f32 %v416, %v676
        %v678 = vpop.f32.mrb[0].mxu0
        %v679 = vpop.f32.mrb[0].mxu0
        %v680 = vadd.f32 %v416, %v679
        %v681 = vpop.f32.mrb[0].mxu0
        %682 = vmatprep.mubr.bf16.mxu0 0
        %683 = vmatmul.mubr.bf16.gmra.mrb[0].mxu0 %v493
        %v684 = vpop.f32.mrb[0].mxu0
        %v685 = vadd.f32 %v416, %v684
        %v686 = vpop.f32.mrb[0].mxu0
        %v687 = vpop.f32.mrb[0].mxu0
        %v688 = vadd.f32 %v416, %v687
        %v689 = vpop.f32.mrb[0].mxu0
        %690 = vmatprep.mubr.bf16.mxu0 0
        %691 = vmatmul.mubr.bf16.gmra.mrb[0].mxu0 %v494
        %v692 = vpop.f32.mrb[0].mxu0
        %v693 = vadd.f32 %v416, %v692
        %v694 = vpop.f32.mrb[0].mxu0
        %v695 = vpop.f32.mrb[0].mxu0
        %v696 = vadd.f32 %v416, %v695
        %v697 = vpop.f32.mrb[0].mxu0
        %698 = vmatprep.mubr.bf16.mxu0 0
        %699 = vmatmul.mubr.bf16.gmra.mrb[0].mxu0 %v495
        %v700 = vpop.f32.mrb[0].mxu0
        %v701 = vadd.f32 %v416, %v700
        %v702 = vpop.f32.mrb[0].mxu0
        %v703 = vpop.f32.mrb[0].mxu0
        %v704 = vadd.f32 %v416, %v703
        %v705 = vpop.f32.mrb[0].mxu0
        %706 = vmatprep.mubr.bf16.mxu0 0
        %707 = vmatmul.mubr.bf16.gmra.mrb[0].mxu0 %v496
        %v708 = vpop.f32.mrb[0].mxu0
        %v709 = vadd.f32 %v416, %v708
        %v710 = vpop.f32.mrb[0].mxu0
        %v711 = vpop.f32.mrb[0].mxu0
        %v712 = vadd.f32 %v416, %v711
        %v713 = vpop.f32.mrb[0].mxu0
        %714 = vmatprep.mubr.bf16.mxu0 0
        %715 = vmatmul.mubr.bf16.gmra.mrb[0].mxu0 %v497
        %v716 = vpop.f32.mrb[0].mxu0
        %v717 = vadd.f32 %v416, %v716
        %v718 = vpop.f32.mrb[0].mxu0
        %v719 = vpop.f32.mrb[0].mxu0
        %v720 = vadd.f32 %v416, %v719
        %v721 = vpop.f32.mrb[0].mxu0
        %722 = vdwg.mxu0
        %v723 = vmax.f32 %v597, 0.0
        %v724 = vmax.f32 %v600, 0.0
        %v725 = vmax.f32 %v605, 0.0
        %v726 = vmax.f32 %v608, 0.0
        %v727 = vmax.f32 %v613, 0.0
        %v728 = vmax.f32 %v616, 0.0
        %v729 = vmax.f32 %v621, 0.0
        %v730 = vmax.f32 %v624, 0.0
        %v731 = vmax.f32 %v629, 0.0
        %v732 = vmax.f32 %v632, 0.0
        %v733 = vmax.f32 %v637, 0.0
        %v734 = vmax.f32 %v640, 0.0
        %v735 = vmax.f32 %v645, 0.0
        %v736 = vmax.f32 %v648, 0.0
        %v737 = vmax.f32 %v653, 0.0
        %v738 = vmax.f32 %v656, 0.0
        %v739 = vmax.f32 %v661, 0.0
        %v740 = vmax.f32 %v664, 0.0
        %v741 = vmax.f32 %v669, 0.0
        %v742 = vmax.f32 %v672, 0.0
        %v743 = vmax.f32 %v677, 0.0
        %v744 = vmax.f32 %v680, 0.0
        %v745 = vmax.f32 %v685, 0.0
        %v746 = vmax.f32 %v688, 0.0
        %v747 = vmax.f32 %v693, 0.0
        %v748 = vmax.f32 %v696, 0.0
        %v749 = vmax.f32 %v701, 0.0
        %v750 = vmax.f32 %v704, 0.0
        %v751 = vmax.f32 %v709, 0.0
        %v752 = vmax.f32 %v712, 0.0
        %v753 = vmax.f32 %v717, 0.0
        %v754 = vmax.f32 %v720, 0.0
        %v755 = vpack.c.bf16 %v724, %v723
        %v756 = vpack.c.bf16 %v726, %v725
        %v757 = vpack.c.bf16 %v728, %v727
        %v758 = vpack.c.bf16 %v730, %v729
        %v759 = vpack.c.bf16 %v732, %v731
        %v760 = vpack.c.bf16 %v734, %v733
        %v761 = vpack.c.bf16 %v736, %v735
        %v762 = vpack.c.bf16 %v738, %v737
        %v763 = vpack.c.bf16 %v740, %v739
        %v764 = vpack.c.bf16 %v742, %v741
        %v765 = vpack.c.bf16 %v744, %v743
        %v766 = vpack.c.bf16 %v746, %v745
        %v767 = vpack.c.bf16 %v748, %v747
        %v768 = vpack.c.bf16 %v750, %v749
        %v769 = vpack.c.bf16 %v752, %v751
        %v770 = vpack.c.bf16 %v754, %v753
        %s771 = scalar_lea.vmem [#allocation2], 24
        %772 = vst [vmem:[%s771 + $0x8] sm:$0xff] %v755
        %773 = vst [vmem:[%s771 + $0x20] sm:$0xff] %v756
        %774 = vst [vmem:[%s771 + $0x38] sm:$0xff] %v757
        %775 = vst [vmem:[%s771 + $0x50] sm:$0xff] %v758
        %776 = vst [vmem:[%s771 + $0x68] sm:$0xff] %v759
        %777 = vst [vmem:[%s771 + $0x80] sm:$0xff] %v760
        %778 = vst [vmem:[%s771 + $0x98] sm:$0xff] %v761
        %779 = vst [vmem:[%s771 + $0xb0] sm:$0xff] %v762
        %780 = vst [vmem:[%s771 + $0xc8] sm:$0xff] %v763
        %781 = vst [vmem:[%s771 + $0xe0] sm:$0xff] %v764
        %782 = vst [vmem:[%s771 + $0xf8] sm:$0xff] %v765
        %783 = vst [vmem:[%s771 + $0x110] sm:$0xff] %v766
        %784 = vst [vmem:[%s771 + $0x128] sm:$0xff] %v767
        %785 = vst [vmem:[%s771 + $0x140] sm:$0xff] %v768
        %786 = vst [vmem:[%s771 + $0x158] sm:$0xff] %v769
        %787 = vst [vmem:[%s771 + $0x170] sm:$0xff] %v770
        %v789 = vshrl.u32 %v755, 16
        %v791 = vrot.slane %v789, 7
        %v792 = vshll.u32 %v755, 16
        %v794 = vor.u32 %v791, %v792
        %v796 = vshrl.u32 %v756, 16
        %v798 = vrot.slane %v796, 7
        %v799 = vshll.u32 %v756, 16
        %v801 = vor.u32 %v798, %v799
        %v803 = vshrl.u32 %v757, 16
        %v805 = vrot.slane %v803, 7
        %v806 = vshll.u32 %v757, 16
        %v808 = vor.u32 %v805, %v806
        %v810 = vshrl.u32 %v758, 16
        %v812 = vrot.slane %v810, 7
        %v813 = vshll.u32 %v758, 16
        %v815 = vor.u32 %v812, %v813
        %v817 = vshrl.u32 %v759, 16
        %v819 = vrot.slane %v817, 7
        %v820 = vshll.u32 %v759, 16
        %v822 = vor.u32 %v819, %v820
        %v824 = vshrl.u32 %v760, 16
        %v826 = vrot.slane %v824, 7
        %v827 = vshll.u32 %v760, 16
        %v829 = vor.u32 %v826, %v827
        %v831 = vshrl.u32 %v761, 16
        %v833 = vrot.slane %v831, 7
        %v834 = vshll.u32 %v761, 16
        %v836 = vor.u32 %v833, %v834
        %v838 = vshrl.u32 %v762, 16
        %v840 = vrot.slane %v838, 7
        %v841 = vshll.u32 %v762, 16
        %v843 = vor.u32 %v840, %v841
        %v845 = vshrl.u32 %v763, 16
        %v847 = vrot.slane %v845, 7
        %v848 = vshll.u32 %v763, 16
        %v850 = vor.u32 %v847, %v848
        %v852 = vshrl.u32 %v764, 16
        %v854 = vrot.slane %v852, 7
        %v855 = vshll.u32 %v764, 16
        %v857 = vor.u32 %v854, %v855
        %v859 = vshrl.u32 %v765, 16
        %v861 = vrot.slane %v859, 7
        %v862 = vshll.u32 %v765, 16
        %v864 = vor.u32 %v861, %v862
        %v866 = vshrl.u32 %v766, 16
        %v868 = vrot.slane %v866, 7
        %v869 = vshll.u32 %v766, 16
        %v871 = vor.u32 %v868, %v869
        %v873 = vshrl.u32 %v767, 16
        %v875 = vrot.slane %v873, 7
        %v876 = vshll.u32 %v767, 16
        %v878 = vor.u32 %v875, %v876
        %v880 = vshrl.u32 %v768, 16
        %v882 = vrot.slane %v880, 7
        %v883 = vshll.u32 %v768, 16
        %v885 = vor.u32 %v882, %v883
        %v887 = vshrl.u32 %v769, 16
        %v889 = vrot.slane %v887, 7
        %v890 = vshll.u32 %v769, 16
        %v892 = vor.u32 %v889, %v890
        %v894 = vshrl.u32 %v770, 16
        %v896 = vrot.slane %v894, 7
        %v897 = vshll.u32 %v770, 16
        %v899 = vor.u32 %v896, %v897
        %vm916 = vcmask 1047552
        %vm917 = vsmask.f32 7938
        %vm918 = vmand %vm916, %vm917
        %v919 = vld [vmem:[%s771] sm:$0xff]
        %v920 = vsel %vm918, %v794, %v919
        %921 = vst [vmem:[%s771] sm:$0xff] %v920
        %v922 = vld [vmem:[%s771 + $0x18] sm:$0xff]
        %v923 = vsel %vm918, %v801, %v922
        %924 = vst [vmem:[%s771 + $0x18] sm:$0xff] %v923
        %v925 = vld [vmem:[%s771 + $0x30] sm:$0xff]
        %v926 = vsel %vm918, %v808, %v925
        %927 = vst [vmem:[%s771 + $0x30] sm:$0xff] %v926
        %v928 = vld [vmem:[%s771 + $0x48] sm:$0xff]
        %v929 = vsel %vm918, %v815, %v928
        %930 = vst [vmem:[%s771 + $0x48] sm:$0xff] %v929
        %v931 = vld [vmem:[%s771 + $0x60] sm:$0xff]
        %v932 = vsel %vm918, %v822, %v931
        %933 = vst [vmem:[%s771 + $0x60] sm:$0xff] %v932
        %v934 = vld [vmem:[%s771 + $0x78] sm:$0xff]
        %v935 = vsel %vm918, %v829, %v934
        %936 = vst [vmem:[%s771 + $0x78] sm:$0xff] %v935
        %v937 = vld [vmem:[%s771 + $0x90] sm:$0xff]
        %v938 = vsel %vm918, %v836, %v937
        %939 = vst [vmem:[%s771 + $0x90] sm:$0xff] %v938
        %v940 = vld [vmem:[%s771 + $0xa8] sm:$0xff]
        %v941 = vsel %vm918, %v843, %v940
        %942 = vst [vmem:[%s771 + $0xa8] sm:$0xff] %v941
        %v943 = vld [vmem:[%s771 + $0xc0] sm:$0xff]
        %v944 = vsel %vm918, %v850, %v943
        %945 = vst [vmem:[%s771 + $0xc0] sm:$0xff] %v944
        %v946 = vld [vmem:[%s771 + $0xd8] sm:$0xff]
        %v947 = vsel %vm918, %v857, %v946
        %948 = vst [vmem:[%s771 + $0xd8] sm:$0xff] %v947
        %v949 = vld [vmem:[%s771 + $0xf0] sm:$0xff]
        %v950 = vsel %vm918, %v864, %v949
        %951 = vst [vmem:[%s771 + $0xf0] sm:$0xff] %v950
        %v952 = vld [vmem:[%s771 + $0x108] sm:$0xff]
        %v953 = vsel %vm918, %v871, %v952
        %954 = vst [vmem:[%s771 + $0x108] sm:$0xff] %v953
        %v955 = vld [vmem:[%s771 + $0x120] sm:$0xff]
        %v956 = vsel %vm918, %v878, %v955
        %957 = vst [vmem:[%s771 + $0x120] sm:$0xff] %v956
        %v958 = vld [vmem:[%s771 + $0x138] sm:$0xff]
        %v959 = vsel %vm918, %v885, %v958
        %960 = vst [vmem:[%s771 + $0x138] sm:$0xff] %v959
        %v961 = vld [vmem:[%s771 + $0x150] sm:$0xff]
        %v962 = vsel %vm918, %v892, %v961
        %963 = vst [vmem:[%s771 + $0x150] sm:$0xff] %v962
        %v964 = vld [vmem:[%s771 + $0x168] sm:$0xff]
        %v965 = vsel %vm918, %v899, %v964
        %966 = vst [vmem:[%s771 + $0x168] sm:$0xff] %v965
        %v967 = vrot.slane %v792, 1
        %v968 = vor.u32 %v789, %v967
        %v969 = vrot.slane %v799, 1
        %v970 = vor.u32 %v796, %v969
        %v971 = vrot.slane %v806, 1
        %v972 = vor.u32 %v803, %v971
        %v973 = vrot.slane %v813, 1
        %v974 = vor.u32 %v810, %v973
        %v975 = vrot.slane %v820, 1
        %v976 = vor.u32 %v817, %v975
        %v977 = vrot.slane %v827, 1
        %v978 = vor.u32 %v824, %v977
        %v979 = vrot.slane %v834, 1
        %v980 = vor.u32 %v831, %v979
        %v981 = vrot.slane %v841, 1
        %v982 = vor.u32 %v838, %v981
        %v983 = vrot.slane %v848, 1
        %v984 = vor.u32 %v845, %v983
        %v985 = vrot.slane %v855, 1
        %v986 = vor.u32 %v852, %v985
        %v987 = vrot.slane %v862, 1
        %v988 = vor.u32 %v859, %v987
        %v989 = vrot.slane %v869, 1
        %v990 = vor.u32 %v866, %v989
        %v991 = vrot.slane %v876, 1
        %v992 = vor.u32 %v873, %v991
        %v993 = vrot.slane %v883, 1
        %v994 = vor.u32 %v880, %v993
        %v995 = vrot.slane %v890, 1
        %v996 = vor.u32 %v887, %v995
        %v997 = vrot.slane %v897, 1
        %v998 = vor.u32 %v894, %v997
        %vm1015 = vsmask.f32 7424
        %vm1016 = vmand %vm916, %vm1015
        %v1017 = vld [vmem:[%s771 + $0x10] sm:$0xff]
        %v1018 = vsel %vm1016, %v968, %v1017
        %1019 = vst [vmem:[%s771 + $0x10] sm:$0xff] %v1018
        %v1020 = vld [vmem:[%s771 + $0x28] sm:$0xff]
        %v1021 = vsel %vm1016, %v970, %v1020
        %1022 = vst [vmem:[%s771 + $0x28] sm:$0xff] %v1021
        %v1023 = vld [vmem:[%s771 + $0x40] sm:$0xff]
        %v1024 = vsel %vm1016, %v972, %v1023
        %1025 = vst [vmem:[%s771 + $0x40] sm:$0xff] %v1024
        %v1026 = vld [vmem:[%s771 + $0x58] sm:$0xff]
        %v1027 = vsel %vm1016, %v974, %v1026
        %1028 = vst [vmem:[%s771 + $0x58] sm:$0xff] %v1027
        %v1029 = vld [vmem:[%s771 + $0x70] sm:$0xff]
        %v1030 = vsel %vm1016, %v976, %v1029
        %1031 = vst [vmem:[%s771 + $0x70] sm:$0xff] %v1030
        %v1032 = vld [vmem:[%s771 + $0x88] sm:$0xff]
        %v1033 = vsel %vm1016, %v978, %v1032
        %1034 = vst [vmem:[%s771 + $0x88] sm:$0xff] %v1033
        %v1035 = vld [vmem:[%s771 + $0xa0] sm:$0xff]
        %v1036 = vsel %vm1016, %v980, %v1035
        %1037 = vst [vmem:[%s771 + $0xa0] sm:$0xff] %v1036
        %v1038 = vld [vmem:[%s771 + $0xb8] sm:$0xff]
        %v1039 = vsel %vm1016, %v982, %v1038
        %1040 = vst [vmem:[%s771 + $0xb8] sm:$0xff] %v1039
        %v1041 = vld [vmem:[%s771 + $0xd0] sm:$0xff]
        %v1042 = vsel %vm1016, %v984, %v1041
        %1043 = vst [vmem:[%s771 + $0xd0] sm:$0xff] %v1042
        %v1044 = vld [vmem:[%s771 + $0xe8] sm:$0xff]
        %v1045 = vsel %vm1016, %v986, %v1044
        %1046 = vst [vmem:[%s771 + $0xe8] sm:$0xff] %v1045
        %v1047 = vld [vmem:[%s771 + $0x100] sm:$0xff]
        %v1048 = vsel %vm1016, %v988, %v1047
        %1049 = vst [vmem:[%s771 + $0x100] sm:$0xff] %v1048
        %v1050 = vld [vmem:[%s771 + $0x118] sm:$0xff]
        %v1051 = vsel %vm1016, %v990, %v1050
        %1052 = vst [vmem:[%s771 + $0x118] sm:$0xff] %v1051
        %v1053 = vld [vmem:[%s771 + $0x130] sm:$0xff]
        %v1054 = vsel %vm1016, %v992, %v1053
        %1055 = vst [vmem:[%s771 + $0x130] sm:$0xff] %v1054
        %v1056 = vld [vmem:[%s771 + $0x148] sm:$0xff]
        %v1057 = vsel %vm1016, %v994, %v1056
        %1058 = vst [vmem:[%s771 + $0x148] sm:$0xff] %v1057
        %v1059 = vld [vmem:[%s771 + $0x160] sm:$0xff]
        %v1060 = vsel %vm1016, %v996, %v1059
        %1061 = vst [vmem:[%s771 + $0x160] sm:$0xff] %v1060
        %v1062 = vld [vmem:[%s771 + $0x178] sm:$0xff]
        %v1063 = vsel %vm1016, %v998, %v1062
        %1064 = vst [vmem:[%s771 + $0x178] sm:$0xff] %v1063
      $region52: #{bottleneck_forward.1} parent=47 // pred_fallthru
        _
      %s1065 = smul.u32 %s23, 16
      %s1066 = smul.u32 %s1065, 3
      %s1067 = smul.addr %s1066, 8
      %s1068 = scalar_lea.vmem [#allocation2], %s1067
      %v1069 = vld [vmem:[%s1068] sm:$0xff]
      %v1070 = vld [vmem:[%s1068 + $0x8] sm:$0xff]
      %v1071 = vld [vmem:[%s1068 + $0x10] sm:$0xff]
      %v1072 = vld [vmem:[%s1068 + $0x18] sm:$0xff]
      %v1073 = vld [vmem:[%s1068 + $0x20] sm:$0xff]
      %v1074 = vld [vmem:[%s1068 + $0x28] sm:$0xff]
      %v1075 = vld [vmem:[%s1068 + $0x30] sm:$0xff]
      %v1076 = vld [vmem:[%s1068 + $0x38] sm:$0xff]
      %v1077 = vld [vmem:[%s1068 + $0x40] sm:$0xff]
      %v1078 = vld [vmem:[%s1068 + $0x48] sm:$0xff]
      %v1079 = vld [vmem:[%s1068 + $0x50] sm:$0xff]
      %v1080 = vld [vmem:[%s1068 + $0x58] sm:$0xff]
      %v1081 = vld [vmem:[%s1068 + $0x60] sm:$0xff]
      %v1082 = vld [vmem:[%s1068 + $0x68] sm:$0xff]
      %v1083 = vld [vmem:[%s1068 + $0x70] sm:$0xff]
      %v1084 = vld [vmem:[%s1068 + $0x78] sm:$0xff]
      %v1085 = vld [vmem:[%s1068 + $0x80] sm:$0xff]
      %v1086 = vld [vmem:[%s1068 + $0x88] sm:$0xff]
      %v1087 = vld [vmem:[%s1068 + $0x90] sm:$0xff]
      %v1088 = vld [vmem:[%s1068 + $0x98] sm:$0xff]
      %v1089 = vld [vmem:[%s1068 + $0xa0] sm:$0xff]
      %v1090 = vld [vmem:[%s1068 + $0xa8] sm:$0xff]
      %v1091 = vld [vmem:[%s1068 + $0xb0] sm:$0xff]
      %v1092 = vld [vmem:[%s1068 + $0xb8] sm:$0xff]
      %v1093 = vld [vmem:[%s1068 + $0xc0] sm:$0xff]
      %v1094 = vld [vmem:[%s1068 + $0xc8] sm:$0xff]
      %v1095 = vld [vmem:[%s1068 + $0xd0] sm:$0xff]
      %v1096 = vld [vmem:[%s1068 + $0xd8] sm:$0xff]
      %v1097 = vld [vmem:[%s1068 + $0xe0] sm:$0xff]
      %v1098 = vld [vmem:[%s1068 + $0xe8] sm:$0xff]
      %v1099 = vld [vmem:[%s1068 + $0xf0] sm:$0xff]
      %v1100 = vld [vmem:[%s1068 + $0xf8] sm:$0xff]
      %v1101 = vld [vmem:[%s1068 + $0x100] sm:$0xff]
      %v1102 = vld [vmem:[%s1068 + $0x108] sm:$0xff]
      %v1103 = vld [vmem:[%s1068 + $0x110] sm:$0xff]
      %v1104 = vld [vmem:[%s1068 + $0x118] sm:$0xff]
      %v1105 = vld [vmem:[%s1068 + $0x120] sm:$0xff]
      %v1106 = vld [vmem:[%s1068 + $0x128] sm:$0xff]
      %v1107 = vld [vmem:[%s1068 + $0x130] sm:$0xff]
      %v1108 = vld [vmem:[%s1068 + $0x138] sm:$0xff]
      %v1109 = vld [vmem:[%s1068 + $0x140] sm:$0xff]
      %v1110 = vld [vmem:[%s1068 + $0x148] sm:$0xff]
      %v1111 = vld [vmem:[%s1068 + $0x150] sm:$0xff]
      %v1112 = vld [vmem:[%s1068 + $0x158] sm:$0xff]
      %v1113 = vld [vmem:[%s1068 + $0x160] sm:$0xff]
      %v1114 = vld [vmem:[%s1068 + $0x168] sm:$0xff]
      %v1115 = vld [vmem:[%s1068 + $0x170] sm:$0xff]
      %v1116 = vld [vmem:[%s1068 + $0x178] sm:$0xff]
      %v1117 = vld [vmem:[%s3] sm:$0xf]
      %v1118 = vld [vmem:[%s3 + $0x4] sm:$0xf]
      %v1119 = vld [vmem:[%s3 + $0x8] sm:$0xf]
      %v1120 = vld [vmem:[%s3 + $0xc] sm:$0xf]
      %v1121 = vld [vmem:[%s3 + $0x10] sm:$0xf]
      %v1122 = vld [vmem:[%s3 + $0x14] sm:$0xf]
      %v1123 = vld [vmem:[%s3 + $0x18] sm:$0xf]
      %v1124 = vld [vmem:[%s3 + $0x1c] sm:$0xf]
      %v1125 = vld [vmem:[%s3 + $0x20] sm:$0xf]
      %v1126 = vld [vmem:[%s3 + $0x24] sm:$0xf]
      %v1127 = vld [vmem:[%s3 + $0x28] sm:$0xf]
      %v1128 = vld [vmem:[%s3 + $0x2c] sm:$0xf]
      %v1129 = vld [vmem:[%s3 + $0x30] sm:$0xf]
      %v1130 = vld [vmem:[%s3 + $0x34] sm:$0xf]
      %v1131 = vld [vmem:[%s3 + $0x38] sm:$0xf]
      %v1132 = vld [vmem:[%s3 + $0x3c] sm:$0xf]
      %v1133 = vld [vmem:[%s3 + $0x40] sm:$0xf]
      %v1134 = vld [vmem:[%s3 + $0x44] sm:$0xf]
      %v1135 = vld [vmem:[%s3 + $0x48] sm:$0xf]
      %v1136 = vld [vmem:[%s3 + $0x4c] sm:$0xf]
      %v1137 = vld [vmem:[%s3 + $0x50] sm:$0xf]
      %v1138 = vld [vmem:[%s3 + $0x54] sm:$0xf]
      %v1139 = vld [vmem:[%s3 + $0x58] sm:$0xf]
      %v1140 = vld [vmem:[%s3 + $0x5c] sm:$0xf]
      %v1141 = vld [vmem:[%s3 + $0x60] sm:$0xf]
      %v1142 = vld [vmem:[%s3 + $0x64] sm:$0xf]
      %v1143 = vld [vmem:[%s3 + $0x68] sm:$0xf]
      %v1144 = vld [vmem:[%s3 + $0x6c] sm:$0xf]
      %v1145 = vld [vmem:[%s3 + $0x70] sm:$0xf]
      %v1146 = vld [vmem:[%s3 + $0x74] sm:$0xf]
      %v1147 = vld [vmem:[%s3 + $0x78] sm:$0xf]
      %v1148 = vld [vmem:[%s3 + $0x7c] sm:$0xf]
      %v1149 = vld [vmem:[%s3 + $0x80] sm:$0xf]
      %v1150 = vld [vmem:[%s3 + $0x84] sm:$0xf]
      %v1151 = vld [vmem:[%s3 + $0x88] sm:$0xf]
      %v1152 = vld [vmem:[%s3 + $0x8c] sm:$0xf]
      %v1153 = vld [vmem:[%s3 + $0x90] sm:$0xf]
      %v1154 = vld [vmem:[%s3 + $0x94] sm:$0xf]
      %v1155 = vld [vmem:[%s3 + $0x98] sm:$0xf]
      %v1156 = vld [vmem:[%s3 + $0x9c] sm:$0xf]
      %v1157 = vld [vmem:[%s3 + $0xa0] sm:$0xf]
      %v1158 = vld [vmem:[%s3 + $0xa4] sm:$0xf]
      %v1159 = vld [vmem:[%s3 + $0xa8] sm:$0xf]
      %v1160 = vld [vmem:[%s3 + $0xac] sm:$0xf]
      %v1161 = vld [vmem:[%s3 + $0xb0] sm:$0xf]
      %v1162 = vld [vmem:[%s3 + $0xb4] sm:$0xf]
      %v1163 = vld [vmem:[%s3 + $0xb8] sm:$0xf]
      %v1164 = vld [vmem:[%s3 + $0xbc] sm:$0xf]
      %s1165 = sadd.s32 %s1065, 1
      %s1166 = smul.u32 %s1165, 3
      %s1167 = smul.addr %s1166, 8
      %s1168 = scalar_lea.vmem [#allocation2], %s1167
      %v1169 = vld [vmem:[%s1168] sm:$0xff]
      %v1170 = vld [vmem:[%s1168 + $0x8] sm:$0xff]
      %v1171 = vld [vmem:[%s1168 + $0x10] sm:$0xff]
      %v1172 = vld [vmem:[%s1168 + $0x18] sm:$0xff]
      %v1173 = vld [vmem:[%s1168 + $0x20] sm:$0xff]
      %v1174 = vld [vmem:[%s1168 + $0x28] sm:$0xff]
      %v1175 = vld [vmem:[%s1168 + $0x30] sm:$0xff]
      %v1176 = vld [vmem:[%s1168 + $0x38] sm:$0xff]
      %v1177 = vld [vmem:[%s1168 + $0x40] sm:$0xff]
      %v1178 = vld [vmem:[%s1168 + $0x48] sm:$0xff]
      %v1179 = vld [vmem:[%s1168 + $0x50] sm:$0xff]
      %v1180 = vld [vmem:[%s1168 + $0x58] sm:$0xff]
      %v1181 = vld [vmem:[%s1168 + $0x60] sm:$0xff]
      %v1182 = vld [vmem:[%s1168 + $0x68] sm:$0xff]
      %v1183 = vld [vmem:[%s1168 + $0x70] sm:$0xff]
      %v1184 = vld [vmem:[%s1168 + $0x78] sm:$0xff]
      %v1185 = vld [vmem:[%s1168 + $0x80] sm:$0xff]
      %v1186 = vld [vmem:[%s1168 + $0x88] sm:$0xff]
      %v1187 = vld [vmem:[%s1168 + $0x90] sm:$0xff]
      %v1188 = vld [vmem:[%s1168 + $0x98] sm:$0xff]
      %v1189 = vld [vmem:[%s1168 + $0xa0] sm:$0xff]
      %v1190 = vld [vmem:[%s1168 + $0xa8] sm:$0xff]
      %v1191 = vld [vmem:[%s1168 + $0xb0] sm:$0xff]
      %v1192 = vld [vmem:[%s1168 + $0xb8] sm:$0xff]
      %v1193 = vld [vmem:[%s1168 + $0xc0] sm:$0xff]
      %v1194 = vld [vmem:[%s1168 + $0xc8] sm:$0xff]
      %v1195 = vld [vmem:[%s1168 + $0xd0] sm:$0xff]
      %v1196 = vld [vmem:[%s1168 + $0xd8] sm:$0xff]
      %v1197 = vld [vmem:[%s1168 + $0xe0] sm:$0xff]
      %v1198 = vld [vmem:[%s1168 + $0xe8] sm:$0xff]
      %v1199 = vld [vmem:[%s1168 + $0xf0] sm:$0xff]
      %v1200 = vld [vmem:[%s1168 + $0xf8] sm:$0xff]
      %v1201 = vld [vmem:[%s1168 + $0x100] sm:$0xff]
      %v1202 = vld [vmem:[%s1168 + $0x108] sm:$0xff]
      %v1203 = vld [vmem:[%s1168 + $0x110] sm:$0xff]
      %v1204 = vld [vmem:[%s1168 + $0x118] sm:$0xff]
      %v1205 = vld [vmem:[%s1168 + $0x120] sm:$0xff]
      %v1206 = vld [vmem:[%s1168 + $0x128] sm:$0xff]
      %v1207 = vld [vmem:[%s1168 + $0x130] sm:$0xff]
      %v1208 = vld [vmem:[%s1168 + $0x138] sm:$0xff]
      %v1209 = vld [vmem:[%s1168 + $0x140] sm:$0xff]
      %v1210 = vld [vmem:[%s1168 + $0x148] sm:$0xff]
      %v1211 = vld [vmem:[%s1168 + $0x150] sm:$0xff]
      %v1212 = vld [vmem:[%s1168 + $0x158] sm:$0xff]
      %v1213 = vld [vmem:[%s1168 + $0x160] sm:$0xff]
      %v1214 = vld [vmem:[%s1168 + $0x168] sm:$0xff]
      %v1215 = vld [vmem:[%s1168 + $0x170] sm:$0xff]
      %v1216 = vld [vmem:[%s1168 + $0x178] sm:$0xff]
      %s1217 = scalar_lea.vmem %s3, 192
      %v1218 = vld [vmem:[%s1217] sm:$0xf]
      %v1219 = vld [vmem:[%s1217 + $0x4] sm:$0xf]
      %v1220 = vld [vmem:[%s1217 + $0x8] sm:$0xf]
      %v1221 = vld [vmem:[%s1217 + $0xc] sm:$0xf]
      %v1222 = vld [vmem:[%s1217 + $0x10] sm:$0xf]
      %v1223 = vld [vmem:[%s1217 + $0x14] sm:$0xf]
      %v1224 = vld [vmem:[%s1217 + $0x18] sm:$0xf]
      %v1225 = vld [vmem:[%s1217 + $0x1c] sm:$0xf]
      %v1226 = vld [vmem:[%s1217 + $0x20] sm:$0xf]
      %v1227 = vld [vmem:[%s1217 + $0x24] sm:$0xf]
      %v1228 = vld [vmem:[%s1217 + $0x28] sm:$0xf]
      %v1229 = vld [vmem:[%s1217 + $0x2c] sm:$0xf]
      %v1230 = vld [vmem:[%s1217 + $0x30] sm:$0xf]
      %v1231 = vld [vmem:[%s1217 + $0x34] sm:$0xf]
      %v1232 = vld [vmem:[%s1217 + $0x38] sm:$0xf]
      %v1233 = vld [vmem:[%s1217 + $0x3c] sm:$0xf]
      %v1234 = vld [vmem:[%s1217 + $0x40] sm:$0xf]
      %v1235 = vld [vmem:[%s1217 + $0x44] sm:$0xf]
      %v1236 = vld [vmem:[%s1217 + $0x48] sm:$0xf]
      %v1237 = vld [vmem:[%s1217 + $0x4c] sm:$0xf]
      %v1238 = vld [vmem:[%s1217 + $0x50] sm:$0xf]
      %v1239 = vld [vmem:[%s1217 + $0x54] sm:$0xf]
      %v1240 = vld [vmem:[%s1217 + $0x58] sm:$0xf]
      %v1241 = vld [vmem:[%s1217 + $0x5c] sm:$0xf]
      %v1242 = vld [vmem:[%s1217 + $0x60] sm:$0xf]
      %v1243 = vld [vmem:[%s1217 + $0x64] sm:$0xf]
      %v1244 = vld [vmem:[%s1217 + $0x68] sm:$0xf]
      %v1245 = vld [vmem:[%s1217 + $0x6c] sm:$0xf]
      %v1246 = vld [vmem:[%s1217 + $0x70] sm:$0xf]
      %v1247 = vld [vmem:[%s1217 + $0x74] sm:$0xf]
      %v1248 = vld [vmem:[%s1217 + $0x78] sm:$0xf]
      %v1249 = vld [vmem:[%s1217 + $0x7c] sm:$0xf]
      %v1250 = vld [vmem:[%s1217 + $0x80] sm:$0xf]
      %v1251 = vld [vmem:[%s1217 + $0x84] sm:$0xf]
      %v1252 = vld [vmem:[%s1217 + $0x88] sm:$0xf]
      %v1253 = vld [vmem:[%s1217 + $0x8c] sm:$0xf]
      %v1254 = vld [vmem:[%s1217 + $0x90] sm:$0xf]
      %v1255 = vld [vmem:[%s1217 + $0x94] sm:$0xf]
      %v1256 = vld [vmem:[%s1217 + $0x98] sm:$0xf]
      %v1257 = vld [vmem:[%s1217 + $0x9c] sm:$0xf]
      %v1258 = vld [vmem:[%s1217 + $0xa0] sm:$0xf]
      %v1259 = vld [vmem:[%s1217 + $0xa4] sm:$0xf]
      %v1260 = vld [vmem:[%s1217 + $0xa8] sm:$0xf]
      %v1261 = vld [vmem:[%s1217 + $0xac] sm:$0xf]
      %v1262 = vld [vmem:[%s1217 + $0xb0] sm:$0xf]
      %v1263 = vld [vmem:[%s1217 + $0xb4] sm:$0xf]
      %v1264 = vld [vmem:[%s1217 + $0xb8] sm:$0xf]
      %v1265 = vld [vmem:[%s1217 + $0xbc] sm:$0xf]
      %v1314 = vunpack.c.l.b16 %v1218
      %v1315 = vunpack.c.l.b16 %v1219
      %v1316 = vunpack.c.l.b16 %v1220
      %v1317 = vunpack.c.l.b16 %v1221
      %v1318 = vunpack.c.l.b16 %v1222
      %v1319 = vunpack.c.l.b16 %v1223
      %v1320 = vunpack.c.l.b16 %v1224
      %v1321 = vunpack.c.l.b16 %v1225
      %v1322 = vunpack.c.l.b16 %v1226
      %v1323 = vunpack.c.l.b16 %v1227
      %v1324 = vunpack.c.l.b16 %v1228
      %v1325 = vunpack.c.l.b16 %v1229
      %v1326 = vunpack.c.l.b16 %v1230
      %v1327 = vunpack.c.l.b16 %v1231
      %v1328 = vunpack.c.l.b16 %v1232
      %v1329 = vunpack.c.l.b16 %v1233
      %v1330 = vunpack.c.l.b16 %v1234
      %v1331 = vunpack.c.l.b16 %v1235
      %v1332 = vunpack.c.l.b16 %v1236
      %v1333 = vunpack.c.l.b16 %v1237
      %v1334 = vunpack.c.l.b16 %v1238
      %v1335 = vunpack.c.l.b16 %v1239
      %v1336 = vunpack.c.l.b16 %v1240
      %v1337 = vunpack.c.l.b16 %v1241
      %v1338 = vunpack.c.l.b16 %v1242
      %v1339 = vunpack.c.l.b16 %v1243
      %v1340 = vunpack.c.l.b16 %v1244
      %v1341 = vunpack.c.l.b16 %v1245
      %v1342 = vunpack.c.l.b16 %v1246
      %v1343 = vunpack.c.l.b16 %v1247
      %v1344 = vunpack.c.l.b16 %v1248
      %v1345 = vunpack.c.l.b16 %v1249
      %v1346 = vunpack.c.l.b16 %v1250
      %v1347 = vunpack.c.l.b16 %v1251
      %v1348 = vunpack.c.l.b16 %v1252
      %v1349 = vunpack.c.l.b16 %v1253
      %v1350 = vunpack.c.l.b16 %v1254
      %v1351 = vunpack.c.l.b16 %v1255
      %v1352 = vunpack.c.l.b16 %v1256
      %v1353 = vunpack.c.l.b16 %v1257
      %v1354 = vunpack.c.l.b16 %v1258
      %v1355 = vunpack.c.l.b16 %v1259
      %v1356 = vunpack.c.l.b16 %v1260
      %v1357 = vunpack.c.l.b16 %v1261
      %v1358 = vunpack.c.l.b16 %v1262
      %v1359 = vunpack.c.l.b16 %v1263
      %v1360 = vunpack.c.l.b16 %v1264
      %v1361 = vunpack.c.l.b16 %v1265
      %v1362 = vpack.c.b16 %v1315, %v1314
      %v1363 = vpack.c.b16 %v1317, %v1316
      %v1364 = vpack.c.b16 %v1319, %v1318
      %v1365 = vpack.c.b16 %v1321, %v1320
      %v1366 = vpack.c.b16 %v1323, %v1322
      %v1367 = vpack.c.b16 %v1325, %v1324
      %v1368 = vpack.c.b16 %v1327, %v1326
      %v1369 = vpack.c.b16 %v1329, %v1328
      %v1370 = vpack.c.b16 %v1331, %v1330
      %v1371 = vpack.c.b16 %v1333, %v1332
      %v1372 = vpack.c.b16 %v1335, %v1334
      %v1373 = vpack.c.b16 %v1337, %v1336
      %v1374 = vpack.c.b16 %v1339, %v1338
      %v1375 = vpack.c.b16 %v1341, %v1340
      %v1376 = vpack.c.b16 %v1343, %v1342
      %v1377 = vpack.c.b16 %v1345, %v1344
      %v1378 = vpack.c.b16 %v1347, %v1346
      %v1379 = vpack.c.b16 %v1349, %v1348
      %v1380 = vpack.c.b16 %v1351, %v1350
      %v1381 = vpack.c.b16 %v1353, %v1352
      %v1382 = vpack.c.b16 %v1355, %v1354
      %v1383 = vpack.c.b16 %v1357, %v1356
      %v1384 = vpack.c.b16 %v1359, %v1358
      %v1385 = vpack.c.b16 %v1361, %v1360
      %1410 = vmatprep.subr.bf16.mxu0 0
      %1411 = vmatpush1.bf16.msra.mxu0 %v1362
      %1412 = vmatprep.subr.bf16.mxu0 0
      %1413 = vmatpush1.bf16.msra.mxu0 %v1363
      %1414 = vmatprep.subr.bf16.mxu0 0
      %1415 = vmatpush1.bf16.msra.mxu0 %v1364
      %1416 = vmatprep.subr.bf16.mxu0 0
      %1417 = vmatpush1.bf16.msra.mxu0 %v1365
      %1418 = vmatprep.subr.bf16.mxu0 0
      %1419 = vmatpush1.bf16.msra.mxu0 %v1366
      %1420 = vmatprep.subr.bf16.mxu0 0
      %1421 = vmatpush1.bf16.msra.mxu0 %v1367
      %1422 = vmatprep.subr.bf16.mxu0 0
      %1423 = vmatpush1.bf16.msra.mxu0 %v1368
      %1424 = vmatprep.subr.bf16.mxu0 0
      %1425 = vmatpush1.bf16.msra.mxu0 %v1369
      %1426 = vmatprep.subr.bf16.mxu0 0
      %1427 = vmatpush1.bf16.msra.mxu0 %v1370
      %1428 = vmatprep.subr.bf16.mxu0 0
      %1429 = vmatpush1.bf16.msra.mxu0 %v1371
      %1430 = vmatprep.subr.bf16.mxu0 0
      %1431 = vmatpush1.bf16.msra.mxu0 %v1372
      %1432 = vmatprep.subr.bf16.mxu0 0
      %1433 = vmatpush1.bf16.msra.mxu0 %v1373
      %1434 = vmatprep.subr.bf16.mxu0 0
      %1435 = vmatpush1.bf16.msra.mxu0 %v1374
      %1436 = vmatprep.subr.bf16.mxu0 0
      %1437 = vmatpush1.bf16.msra.mxu0 %v1375
      %1438 = vmatprep.subr.bf16.mxu0 0
      %1439 = vmatpush1.bf16.msra.mxu0 %v1376
      %1440 = vmatprep.subr.bf16.mxu0 0
      %1441 = vmatpush1.bf16.msra.mxu0 %v1377
      %1442 = vmatprep.mubr.bf16.mxu0 %v1170
      %1443 = vmatmul.mubr.bf16.gmra.mrb[0].mxu0 %v1169
      %v1444 = vpop.f32.mrb[0].mxu0
      %v1445 = vadd.f32 0.0, %v1444
      %v1446 = vpop.f32.mrb[0].mxu0
      %v1447 = vpop.f32.mrb[0].mxu0
      %v1448 = vadd.f32 0.0, %v1447
      %v1449 = vpop.f32.mrb[0].mxu0
      %1450 = vmatprep.mubr.bf16.mxu0 %v1173
      %1451 = vmatmul.mubr.bf16.gmra.mrb[0].mxu0 %v1172
      %v1452 = vpop.f32.mrb[0].mxu0
      %v1453 = vadd.f32 0.0, %v1452
      %v1454 = vpop.f32.mrb[0].mxu0
      %v1455 = vpop.f32.mrb[0].mxu0
      %v1456 = vadd.f32 0.0, %v1455
      %v1457 = vpop.f32.mrb[0].mxu0
      %1458 = vmatprep.mubr.bf16.mxu0 %v1176
      %1459 = vmatmul.mubr.bf16.gmra.mrb[0].mxu0 %v1175
      %v1460 = vpop.f32.mrb[0].mxu0
      %v1461 = vadd.f32 0.0, %v1460
      %v1462 = vpop.f32.mrb[0].mxu0
      %v1463 = vpop.f32.mrb[0].mxu0
      %v1464 = vadd.f32 0.0, %v1463
      %v1465 = vpop.f32.mrb[0].mxu0
      %1466 = vmatprep.mubr.bf16.mxu0 %v1179
      %1467 = vmatmul.mubr.bf16.gmra.mrb[0].mxu0 %v1178
      %v1468 = vpop.f32.mrb[0].mxu0
      %v1469 = vadd.f32 0.0, %v1468
      %v1470 = vpop.f32.mrb[0].mxu0
      %v1471 = vpop.f32.mrb[0].mxu0
      %v1472 = vadd.f32 0.0, %v1471
      %v1473 = vpop.f32.mrb[0].mxu0
      %1474 = vmatprep.mubr.bf16.mxu0 %v1182
      %1475 = vmatmul.mubr.bf16.gmra.mrb[0].mxu0 %v1181
      %v1476 = vpop.f32.mrb[0].mxu0
      %v1477 = vadd.f32 0.0, %v1476
      %v1478 = vpop.f32.mrb[0].mxu0
      %v1479 = vpop.f32.mrb[0].mxu0
      %v1480 = vadd.f32 0.0, %v1479
      %v1481 = vpop.f32.mrb[0].mxu0
      %1482 = vmatprep.mubr.bf16.mxu0 %v1185
      %1483 = vmatmul.mubr.bf16.gmra.mrb[0].mxu0 %v1184
      %v1484 = vpop.f32.mrb[0].mxu0
      %v1485 = vadd.f32 0.0, %v1484
      %v1486 = vpop.f32.mrb[0].mxu0
      %v1487 = vpop.f32.mrb[0].mxu0
      %v1488 = vadd.f32 0.0, %v1487
      %v1489 = vpop.f32.mrb[0].mxu0
      %1490 = vmatprep.mubr.bf16.mxu0 %v1188
      %1491 = vmatmul.mubr.bf16.gmra.mrb[0].mxu0 %v1187
      %v1492 = vpop.f32.mrb[0].mxu0
      %v1493 = vadd.f32 0.0, %v1492
      %v1494 = vpop.f32.mrb[0].mxu0
      %v1495 = vpop.f32.mrb[0].mxu0
      %v1496 = vadd.f32 0.0, %v1495
      %v1497 = vpop.f32.mrb[0].mxu0
      %1498 = vmatprep.mubr.bf16.mxu0 %v1191
      %1499 = vmatmul.mubr.bf16.gmra.mrb[0].mxu0 %v1190
      %v1500 = vpop.f32.mrb[0].mxu0
      %v1501 = vadd.f32 0.0, %v1500
      %v1502 = vpop.f32.mrb[0].mxu0
      %v1503 = vpop.f32.mrb[0].mxu0
      %v1504 = vadd.f32 0.0, %v1503
      %v1505 = vpop.f32.mrb[0].mxu0
      %1506 = vmatprep.mubr.bf16.mxu0 %v1194
      %1507 = vmatmul.mubr.bf16.gmra.mrb[0].mxu0 %v1193
      %v1508 = vpop.f32.mrb[0].mxu0
      %v1509 = vadd.f32 0.0, %v1508
      %v1510 = vpop.f32.mrb[0].mxu0
      %v1511 = vpop.f32.mrb[0].mxu0
      %v1512 = vadd.f32 0.0, %v1511
      %v1513 = vpop.f32.mrb[0].mxu0
      %1514 = vmatprep.mubr.bf16.mxu0 %v1197
      %1515 = vmatmul.mubr.bf16.gmra.mrb[0].mxu0 %v1196
      %v1516 = vpop.f32.mrb[0].mxu0
      %v1517 = vadd.f32 0.0, %v1516
      %v1518 = vpop.f32.mrb[0].mxu0
      %v1519 = vpop.f32.mrb[0].mxu0
      %v1520 = vadd.f32 0.0, %v1519
      %v1521 = vpop.f32.mrb[0].mxu0
      %1522 = vmatprep.mubr.bf16.mxu0 %v1200
      %1523 = vmatmul.mubr.bf16.gmra.mrb[0].mxu0 %v1199
      %v1524 = vpop.f32.mrb[0].mxu0
      %v1525 = vadd.f32 0.0, %v1524
      %v1526 = vpop.f32.mrb[0].mxu0
      %v1527 = vpop.f32.mrb[0].mxu0
      %v1528 = vadd.f32 0.0, %v1527
      %v1529 = vpop.f32.mrb[0].mxu0
      %1530 = vmatprep.mubr.bf16.mxu0 %v1203
      %1531 = vmatmul.mubr.bf16.gmra.mrb[0].mxu0 %v1202
      %v1532 = vpop.f32.mrb[0].mxu0
      %v1533 = vadd.f32 0.0, %v1532
      %v1534 = vpop.f32.mrb[0].mxu0
      %v1535 = vpop.f32.mrb[0].mxu0
      %v1536 = vadd.f32 0.0, %v1535
      %v1537 = vpop.f32.mrb[0].mxu0
      %1538 = vmatprep.mubr.bf16.mxu0 %v1206
      %1539 = vmatmul.mubr.bf16.gmra.mrb[0].mxu0 %v1205
      %v1540 = vpop.f32.mrb[0].mxu0
      %v1541 = vadd.f32 0.0, %v1540
      %v1542 = vpop.f32.mrb[0].mxu0
      %v1543 = vpop.f32.mrb[0].mxu0
      %v1544 = vadd.f32 0.0, %v1543
      %v1545 = vpop.f32.mrb[0].mxu0
      %1546 = vmatprep.mubr.bf16.mxu0 %v1209
      %1547 = vmatmul.mubr.bf16.gmra.mrb[0].mxu0 %v1208
      %v1548 = vpop.f32.mrb[0].mxu0
      %v1549 = vadd.f32 0.0, %v1548
      %v1550 = vpop.f32.mrb[0].mxu0
      %v1551 = vpop.f32.mrb[0].mxu0
      %v1552 = vadd.f32 0.0, %v1551
      %v1553 = vpop.f32.mrb[0].mxu0
      %1554 = vmatprep.mubr.bf16.mxu0 %v1212
      %1555 = vmatmul.mubr.bf16.gmra.mrb[0].mxu0 %v1211
      %v1556 = vpop.f32.mrb[0].mxu0
      %v1557 = vadd.f32 0.0, %v1556
      %v1558 = vpop.f32.mrb[0].mxu0
      %v1559 = vpop.f32.mrb[0].mxu0
      %v1560 = vadd.f32 0.0, %v1559
      %v1561 = vpop.f32.mrb[0].mxu0
      %1562 = vmatprep.mubr.bf16.mxu0 %v1215
      %1563 = vmatmul.mubr.bf16.gmra.mrb[0].mxu0 %v1214
      %v1564 = vpop.f32.mrb[0].mxu0
      %v1565 = vadd.f32 0.0, %v1564
      %v1566 = vpop.f32.mrb[0].mxu0
      %v1567 = vpop.f32.mrb[0].mxu0
      %v1568 = vadd.f32 0.0, %v1567
      %v1569 = vpop.f32.mrb[0].mxu0
      %1570 = vdwg.mxu0
      %1571 = vmatprep.subr.bf16.mxu0 0
      %1572 = vmatpush1.bf16.msra.mxu0 %v1378
      %1573 = vmatprep.subr.bf16.mxu0 0
      %1574 = vmatpush1.bf16.msra.mxu0 %v1379
      %1575 = vmatprep.subr.bf16.mxu0 0
      %1576 = vmatpush1.bf16.msra.mxu0 %v1380
      %1577 = vmatprep.subr.bf16.mxu0 0
      %1578 = vmatpush1.bf16.msra.mxu0 %v1381
      %1579 = vmatprep.subr.bf16.mxu0 0
      %1580 = vmatpush1.bf16.msra.mxu0 %v1382
      %1581 = vmatprep.subr.bf16.mxu0 0
      %1582 = vmatpush1.bf16.msra.mxu0 %v1383
      %1583 = vmatprep.subr.bf16.mxu0 0
      %1584 = vmatpush1.bf16.msra.mxu0 %v1384
      %1585 = vmatprep.subr.bf16.mxu0 0
      %1586 = vmatpush1.bf16.msra.mxu0 %v1385
      %1587 = vmatprep.subr.bf16.mxu0 0
      %1588 = vmatpush1.bf16.msra.mxu0 0
      %1589 = vmatprep.subr.bf16.mxu0 0
      %1590 = vmatpush1.bf16.msra.mxu0 0
      %1591 = vmatprep.subr.bf16.mxu0 0
      %1592 = vmatpush1.bf16.msra.mxu0 0
      %1593 = vmatprep.subr.bf16.mxu0 0
      %1594 = vmatpush1.bf16.msra.mxu0 0
      %1595 = vmatprep.subr.bf16.mxu0 0
      %1596 = vmatpush1.bf16.msra.mxu0 0
      %1597 = vmatprep.subr.bf16.mxu0 0
      %1598 = vmatpush1.bf16.msra.mxu0 0
      %1599 = vmatprep.subr.bf16.mxu0 0
      %1600 = vmatpush1.bf16.msra.mxu0 0
      %1601 = vmatprep.subr.bf16.mxu0 0
      %1602 = vmatpush1.bf16.msra.mxu0 0
      %1603 = vmatprep.mubr.bf16.mxu0 0
      %1604 = vmatmul.mubr.bf16.gmra.mrb[0].mxu0 %v1171
      %v1605 = vpop.f32.mrb[0].mxu0
      %v1606 = vadd.f32 %v1445, %v1605
      %v1607 = vpop.f32.mrb[0].mxu0
      %v1608 = vpop.f32.mrb[0].mxu0
      %v1609 = vadd.f32 %v1448, %v1608
      %v1610 = vpop.f32.mrb[0].mxu0
      %1611 = vmatprep.mubr.bf16.mxu0 0
      %1612 = vmatmul.mubr.bf16.gmra.mrb[0].mxu0 %v1174
      %v1613 = vpop.f32.mrb[0].mxu0
      %v1614 = vadd.f32 %v1453, %v1613
      %v1615 = vpop.f32.mrb[0].mxu0
      %v1616 = vpop.f32.mrb[0].mxu0
      %v1617 = vadd.f32 %v1456, %v1616
      %v1618 = vpop.f32.mrb[0].mxu0
      %1619 = vmatprep.mubr.bf16.mxu0 0
      %1620 = vmatmul.mubr.bf16.gmra.mrb[0].mxu0 %v1177
      %v1621 = vpop.f32.mrb[0].mxu0
      %v1622 = vadd.f32 %v1461, %v1621
      %v1623 = vpop.f32.mrb[0].mxu0
      %v1624 = vpop.f32.mrb[0].mxu0
      %v1625 = vadd.f32 %v1464, %v1624
      %v1626 = vpop.f32.mrb[0].mxu0
      %1627 = vmatprep.mubr.bf16.mxu0 0
      %1628 = vmatmul.mubr.bf16.gmra.mrb[0].mxu0 %v1180
      %v1629 = vpop.f32.mrb[0].mxu0
      %v1630 = vadd.f32 %v1469, %v1629
      %v1631 = vpop.f32.mrb[0].mxu0
      %v1632 = vpop.f32.mrb[0].mxu0
      %v1633 = vadd.f32 %v1472, %v1632
      %v1634 = vpop.f32.mrb[0].mxu0
      %1635 = vmatprep.mubr.bf16.mxu0 0
      %1636 = vmatmul.mubr.bf16.gmra.mrb[0].mxu0 %v1183
      %v1637 = vpop.f32.mrb[0].mxu0
      %v1638 = vadd.f32 %v1477, %v1637
      %v1639 = vpop.f32.mrb[0].mxu0
      %v1640 = vpop.f32.mrb[0].mxu0
      %v1641 = vadd.f32 %v1480, %v1640
      %v1642 = vpop.f32.mrb[0].mxu0
      %1643 = vmatprep.mubr.bf16.mxu0 0
      %1644 = vmatmul.mubr.bf16.gmra.mrb[0].mxu0 %v1186
      %v1645 = vpop.f32.mrb[0].mxu0
      %v1646 = vadd.f32 %v1485, %v1645
      %v1647 = vpop.f32.mrb[0].mxu0
      %v1648 = vpop.f32.mrb[0].mxu0
      %v1649 = vadd.f32 %v1488, %v1648
      %v1650 = vpop.f32.mrb[0].mxu0
      %1651 = vmatprep.mubr.bf16.mxu0 0
      %1652 = vmatmul.mubr.bf16.gmra.mrb[0].mxu0 %v1189
      %v1653 = vpop.f32.mrb[0].mxu0
      %v1654 = vadd.f32 %v1493, %v1653
      %v1655 = vpop.f32.mrb[0].mxu0
      %v1656 = vpop.f32.mrb[0].mxu0
      %v1657 = vadd.f32 %v1496, %v1656
      %v1658 = vpop.f32.mrb[0].mxu0
      %1659 = vmatprep.mubr.bf16.mxu0 0
      %1660 = vmatmul.mubr.bf16.gmra.mrb[0].mxu0 %v1192
      %v1661 = vpop.f32.mrb[0].mxu0
      %v1662 = vadd.f32 %v1501, %v1661
      %v1663 = vpop.f32.mrb[0].mxu0
      %v1664 = vpop.f32.mrb[0].mxu0
      %v1665 = vadd.f32 %v1504, %v1664
      %v1666 = vpop.f32.mrb[0].mxu0
      %1667 = vmatprep.mubr.bf16.mxu0 0
      %1668 = vmatmul.mubr.bf16.gmra.mrb[0].mxu0 %v1195
      %v1669 = vpop.f32.mrb[0].mxu0
      %v1670 = vadd.f32 %v1509, %v1669
      %v1671 = vpop.f32.mrb[0].mxu0
      %v1672 = vpop.f32.mrb[0].mxu0
      %v1673 = vadd.f32 %v1512, %v1672
      %v1674 = vpop.f32.mrb[0].mxu0
      %1675 = vmatprep.mubr.bf16.mxu0 0
      %1676 = vmatmul.mubr.bf16.gmra.mrb[0].mxu0 %v1198
      %v1677 = vpop.f32.mrb[0].mxu0
      %v1678 = vadd.f32 %v1517, %v1677
      %v1679 = vpop.f32.mrb[0].mxu0
      %v1680 = vpop.f32.mrb[0].mxu0
      %v1681 = vadd.f32 %v1520, %v1680
      %v1682 = vpop.f32.mrb[0].mxu0
      %1683 = vmatprep.mubr.bf16.mxu0 0
      %1684 = vmatmul.mubr.bf16.gmra.mrb[0].mxu0 %v1201
      %v1685 = vpop.f32.mrb[0].mxu0
      %v1686 = vadd.f32 %v1525, %v1685
      %v1687 = vpop.f32.mrb[0].mxu0
      %v1688 = vpop.f32.mrb[0].mxu0
      %v1689 = vadd.f32 %v1528, %v1688
      %v1690 = vpop.f32.mrb[0].mxu0
      %1691 = vmatprep.mubr.bf16.mxu0 0
      %1692 = vmatmul.mubr.bf16.gmra.mrb[0].mxu0 %v1204
      %v1693 = vpop.f32.mrb[0].mxu0
      %v1694 = vadd.f32 %v1533, %v1693
      %v1695 = vpop.f32.mrb[0].mxu0
      %v1696 = vpop.f32.mrb[0].mxu0
      %v1697 = vadd.f32 %v1536, %v1696
      %v1698 = vpop.f32.mrb[0].mxu0
      %1699 = vmatprep.mubr.bf16.mxu0 0
      %1700 = vmatmul.mubr.bf16.gmra.mrb[0].mxu0 %v1207
      %v1701 = vpop.f32.mrb[0].mxu0
      %v1702 = vadd.f32 %v1541, %v1701
      %v1703 = vpop.f32.mrb[0].mxu0
      %v1704 = vpop.f32.mrb[0].mxu0
      %v1705 = vadd.f32 %v1544, %v1704
      %v1706 = vpop.f32.mrb[0].mxu0
      %1707 = vmatprep.mubr.bf16.mxu0 0
      %1708 = vmatmul.mubr.bf16.gmra.mrb[0].mxu0 %v1210
      %v1709 = vpop.f32.mrb[0].mxu0
      %v1710 = vadd.f32 %v1549, %v1709
      %v1711 = vpop.f32.mrb[0].mxu0
      %v1712 = vpop.f32.mrb[0].mxu0
      %v1713 = vadd.f32 %v1552, %v1712
      %v1714 = vpop.f32.mrb[0].mxu0
      %1715 = vmatprep.mubr.bf16.mxu0 0
      %1716 = vmatmul.mubr.bf16.gmra.mrb[0].mxu0 %v1213
      %v1717 = vpop.f32.mrb[0].mxu0
      %v1718 = vadd.f32 %v1557, %v1717
      %v1719 = vpop.f32.mrb[0].mxu0
      %v1720 = vpop.f32.mrb[0].mxu0
      %v1721 = vadd.f32 %v1560, %v1720
      %v1722 = vpop.f32.mrb[0].mxu0
      %1723 = vmatprep.mubr.bf16.mxu0 0
      %1724 = vmatmul.mubr.bf16.gmra.mrb[0].mxu0 %v1216
      %v1725 = vpop.f32.mrb[0].mxu0
      %v1726 = vadd.f32 %v1565, %v1725
      %v1727 = vpop.f32.mrb[0].mxu0
      %v1728 = vpop.f32.mrb[0].mxu0
      %v1729 = vadd.f32 %v1568, %v1728
      %v1730 = vpop.f32.mrb[0].mxu0
      %1731 = vdwg.mxu0
      %v1780 = vunpack.c.l.b16 %v1117
      %v1781 = vunpack.c.l.b16 %v1118
      %v1782 = vunpack.c.l.b16 %v1119
      %v1783 = vunpack.c.l.b16 %v1120
      %v1784 = vunpack.c.l.b16 %v1121
      %v1785 = vunpack.c.l.b16 %v1122
      %v1786 = vunpack.c.l.b16 %v1123
      %v1787 = vunpack.c.l.b16 %v1124
      %v1788 = vunpack.c.l.b16 %v1125
      %v1789 = vunpack.c.l.b16 %v1126
      %v1790 = vunpack.c.l.b16 %v1127
      %v1791 = vunpack.c.l.b16 %v1128
      %v1792 = vunpack.c.l.b16 %v1129
      %v1793 = vunpack.c.l.b16 %v1130
      %v1794 = vunpack.c.l.b16 %v1131
      %v1795 = vunpack.c.l.b16 %v1132
      %v1796 = vunpack.c.l.b16 %v1133
      %v1797 = vunpack.c.l.b16 %v1134
      %v1798 = vunpack.c.l.b16 %v1135
      %v1799 = vunpack.c.l.b16 %v1136
      %v1800 = vunpack.c.l.b16 %v1137
      %v1801 = vunpack.c.l.b16 %v1138
      %v1802 = vunpack.c.l.b16 %v1139
      %v1803 = vunpack.c.l.b16 %v1140
      %v1804 = vunpack.c.l.b16 %v1141
      %v1805 = vunpack.c.l.b16 %v1142
      %v1806 = vunpack.c.l.b16 %v1143
      %v1807 = vunpack.c.l.b16 %v1144
      %v1808 = vunpack.c.l.b16 %v1145
      %v1809 = vunpack.c.l.b16 %v1146
      %v1810 = vunpack.c.l.b16 %v1147
      %v1811 = vunpack.c.l.b16 %v1148
      %v1812 = vunpack.c.l.b16 %v1149
      %v1813 = vunpack.c.l.b16 %v1150
      %v1814 = vunpack.c.l.b16 %v1151
      %v1815 = vunpack.c.l.b16 %v1152
      %v1816 = vunpack.c.l.b16 %v1153
      %v1817 = vunpack.c.l.b16 %v1154
      %v1818 = vunpack.c.l.b16 %v1155
      %v1819 = vunpack.c.l.b16 %v1156
      %v1820 = vunpack.c.l.b16 %v1157
      %v1821 = vunpack.c.l.b16 %v1158
      %v1822 = vunpack.c.l.b16 %v1159
      %v1823 = vunpack.c.l.b16 %v1160
      %v1824 = vunpack.c.l.b16 %v1161
      %v1825 = vunpack.c.l.b16 %v1162
      %v1826 = vunpack.c.l.b16 %v1163
      %v1827 = vunpack.c.l.b16 %v1164
      %v1828 = vpack.c.b16 %v1781, %v1780
      %v1829 = vpack.c.b16 %v1783, %v1782
      %v1830 = vpack.c.b16 %v1785, %v1784
      %v1831 = vpack.c.b16 %v1787, %v1786
      %v1832 = vpack.c.b16 %v1789, %v1788
      %v1833 = vpack.c.b16 %v1791, %v1790
      %v1834 = vpack.c.b16 %v1793, %v1792
      %v1835 = vpack.c.b16 %v1795, %v1794
      %v1836 = vpack.c.b16 %v1797, %v1796
      %v1837 = vpack.c.b16 %v1799, %v1798
      %v1838 = vpack.c.b16 %v1801, %v1800
      %v1839 = vpack.c.b16 %v1803, %v1802
      %v1840 = vpack.c.b16 %v1805, %v1804
      %v1841 = vpack.c.b16 %v1807, %v1806
      %v1842 = vpack.c.b16 %v1809, %v1808
      %v1843 = vpack.c.b16 %v1811, %v1810
      %v1844 = vpack.c.b16 %v1813, %v1812
      %v1845 = vpack.c.b16 %v1815, %v1814
      %v1846 = vpack.c.b16 %v1817, %v1816
      %v1847 = vpack.c.b16 %v1819, %v1818
      %v1848 = vpack.c.b16 %v1821, %v1820
      %v1849 = vpack.c.b16 %v1823, %v1822
      %v1850 = vpack.c.b16 %v1825, %v1824
      %v1851 = vpack.c.b16 %v1827, %v1826
      %1876 = vmatprep.subr.bf16.mxu0 0
      %1877 = vmatpush1.bf16.msra.mxu0 %v1828
      %1878 = vmatprep.subr.bf16.mxu0 0
      %1879 = vmatpush1.bf16.msra.mxu0 %v1829
      %1880 = vmatprep.subr.bf16.mxu0 0
      %1881 = vmatpush1.bf16.msra.mxu0 %v1830
      %1882 = vmatprep.subr.bf16.mxu0 0
      %1883 = vmatpush1.bf16.msra.mxu0 %v1831
      %1884 = vmatprep.subr.bf16.mxu0 0
      %1885 = vmatpush1.bf16.msra.mxu0 %v1832
      %1886 = vmatprep.subr.bf16.mxu0 0
      %1887 = vmatpush1.bf16.msra.mxu0 %v1833
      %1888 = vmatprep.subr.bf16.mxu0 0
      %1889 = vmatpush1.bf16.msra.mxu0 %v1834
      %1890 = vmatprep.subr.bf16.mxu0 0
      %1891 = vmatpush1.bf16.msra.mxu0 %v1835
      %1892 = vmatprep.subr.bf16.mxu0 0
      %1893 = vmatpush1.bf16.msra.mxu0 %v1836
      %1894 = vmatprep.subr.bf16.mxu0 0
      %1895 = vmatpush1.bf16.msra.mxu0 %v1837
      %1896 = vmatprep.subr.bf16.mxu0 0
      %1897 = vmatpush1.bf16.msra.mxu0 %v1838
      %1898 = vmatprep.subr.bf16.mxu0 0
      %1899 = vmatpush1.bf16.msra.mxu0 %v1839
      %1900 = vmatprep.subr.bf16.mxu0 0
      %1901 = vmatpush1.bf16.msra.mxu0 %v1840
      %1902 = vmatprep.subr.bf16.mxu0 0
      %1903 = vmatpush1.bf16.msra.mxu0 %v1841
      %1904 = vmatprep.subr.bf16.mxu0 0
      %1905 = vmatpush1.bf16.msra.mxu0 %v1842
      %1906 = vmatprep.subr.bf16.mxu0 0
      %1907 = vmatpush1.bf16.msra.mxu0 %v1843
      %1908 = vmatprep.mubr.bf16.mxu0 %v1070
      %1909 = vmatmul.mubr.bf16.gmra.mrb[0].mxu0 %v1069
      %v1910 = vpop.f32.mrb[0].mxu0
      %v1911 = vadd.f32 %v1606, %v1910
      %v1912 = vpop.f32.mrb[0].mxu0
      %v1913 = vpop.f32.mrb[0].mxu0
      %v1914 = vadd.f32 %v1609, %v1913
      %v1915 = vpop.f32.mrb[0].mxu0
      %1916 = vmatprep.mubr.bf16.mxu0 %v1073
      %1917 = vmatmul.mubr.bf16.gmra.mrb[0].mxu0 %v1072
      %v1918 = vpop.f32.mrb[0].mxu0
      %v1919 = vadd.f32 %v1614, %v1918
      %v1920 = vpop.f32.mrb[0].mxu0
      %v1921 = vpop.f32.mrb[0].mxu0
      %v1922 = vadd.f32 %v1617, %v1921
      %v1923 = vpop.f32.mrb[0].mxu0
      %1924 = vmatprep.mubr.bf16.mxu0 %v1076
      %1925 = vmatmul.mubr.bf16.gmra.mrb[0].mxu0 %v1075
      %v1926 = vpop.f32.mrb[0].mxu0
      %v1927 = vadd.f32 %v1622, %v1926
      %v1928 = vpop.f32.mrb[0].mxu0
      %v1929 = vpop.f32.mrb[0].mxu0
      %v1930 = vadd.f32 %v1625, %v1929
      %v1931 = vpop.f32.mrb[0].mxu0
      %1932 = vmatprep.mubr.bf16.mxu0 %v1079
      %1933 = vmatmul.mubr.bf16.gmra.mrb[0].mxu0 %v1078
      %v1934 = vpop.f32.mrb[0].mxu0
      %v1935 = vadd.f32 %v1630, %v1934
      %v1936 = vpop.f32.mrb[0].mxu0
      %v1937 = vpop.f32.mrb[0].mxu0
      %v1938 = vadd.f32 %v1633, %v1937
      %v1939 = vpop.f32.mrb[0].mxu0
      %1940 = vmatprep.mubr.bf16.mxu0 %v1082
      %1941 = vmatmul.mubr.bf16.gmra.mrb[0].mxu0 %v1081
      %v1942 = vpop.f32.mrb[0].mxu0
      %v1943 = vadd.f32 %v1638, %v1942
      %v1944 = vpop.f32.mrb[0].mxu0
      %v1945 = vpop.f32.mrb[0].mxu0
      %v1946 = vadd.f32 %v1641, %v1945
      %v1947 = vpop.f32.mrb[0].mxu0
      %1948 = vmatprep.mubr.bf16.mxu0 %v1085
      %1949 = vmatmul.mubr.bf16.gmra.mrb[0].mxu0 %v1084
      %v1950 = vpop.f32.mrb[0].mxu0
      %v1951 = vadd.f32 %v1646, %v1950
      %v1952 = vpop.f32.mrb[0].mxu0
      %v1953 = vpop.f32.mrb[0].mxu0
      %v1954 = vadd.f32 %v1649, %v1953
      %v1955 = vpop.f32.mrb[0].mxu0
      %1956 = vmatprep.mubr.bf16.mxu0 %v1088
      %1957 = vmatmul.mubr.bf16.gmra.mrb[0].mxu0 %v1087
      %v1958 = vpop.f32.mrb[0].mxu0
      %v1959 = vadd.f32 %v1654, %v1958
      %v1960 = vpop.f32.mrb[0].mxu0
      %v1961 = vpop.f32.mrb[0].mxu0
      %v1962 = vadd.f32 %v1657, %v1961
      %v1963 = vpop.f32.mrb[0].mxu0
      %1964 = vmatprep.mubr.bf16.mxu0 %v1091
      %1965 = vmatmul.mubr.bf16.gmra.mrb[0].mxu0 %v1090
      %v1966 = vpop.f32.mrb[0].mxu0
      %v1967 = vadd.f32 %v1662, %v1966
      %v1968 = vpop.f32.mrb[0].mxu0
      %v1969 = vpop.f32.mrb[0].mxu0
      %v1970 = vadd.f32 %v1665, %v1969
      %v1971 = vpop.f32.mrb[0].mxu0
      %1972 = vmatprep.mubr.bf16.mxu0 %v1094
      %1973 = vmatmul.mubr.bf16.gmra.mrb[0].mxu0 %v1093
      %v1974 = vpop.f32.mrb[0].mxu0
      %v1975 = vadd.f32 %v1670, %v1974
      %v1976 = vpop.f32.mrb[0].mxu0
      %v1977 = vpop.f32.mrb[0].mxu0
      %v1978 = vadd.f32 %v1673, %v1977
      %v1979 = vpop.f32.mrb[0].mxu0
      %1980 = vmatprep.mubr.bf16.mxu0 %v1097
      %1981 = vmatmul.mubr.bf16.gmra.mrb[0].mxu0 %v1096
      %v1982 = vpop.f32.mrb[0].mxu0
      %v1983 = vadd.f32 %v1678, %v1982
      %v1984 = vpop.f32.mrb[0].mxu0
      %v1985 = vpop.f32.mrb[0].mxu0
      %v1986 = vadd.f32 %v1681, %v1985
      %v1987 = vpop.f32.mrb[0].mxu0
      %1988 = vmatprep.mubr.bf16.mxu0 %v1100
      %1989 = vmatmul.mubr.bf16.gmra.mrb[0].mxu0 %v1099
      %v1990 = vpop.f32.mrb[0].mxu0
      %v1991 = vadd.f32 %v1686, %v1990
      %v1992 = vpop.f32.mrb[0].mxu0
      %v1993 = vpop.f32.mrb[0].mxu0
      %v1994 = vadd.f32 %v1689, %v1993
      %v1995 = vpop.f32.mrb[0].mxu0
      %1996 = vmatprep.mubr.bf16.mxu0 %v1103
      %1997 = vmatmul.mubr.bf16.gmra.mrb[0].mxu0 %v1102
      %v1998 = vpop.f32.mrb[0].mxu0
      %v1999 = vadd.f32 %v1694, %v1998
      %v2000 = vpop.f32.mrb[0].mxu0
      %v2001 = vpop.f32.mrb[0].mxu0
      %v2002 = vadd.f32 %v1697, %v2001
      %v2003 = vpop.f32.mrb[0].mxu0
      %2004 = vmatprep.mubr.bf16.mxu0 %v1106
      %2005 = vmatmul.mubr.bf16.gmra.mrb[0].mxu0 %v1105
      %v2006 = vpop.f32.mrb[0].mxu0
      %v2007 = vadd.f32 %v1702, %v2006
      %v2008 = vpop.f32.mrb[0].mxu0
      %v2009 = vpop.f32.mrb[0].mxu0
      %v2010 = vadd.f32 %v1705, %v2009
      %v2011 = vpop.f32.mrb[0].mxu0
      %2012 = vmatprep.mubr.bf16.mxu0 %v1109
      %2013 = vmatmul.mubr.bf16.gmra.mrb[0].mxu0 %v1108
      %v2014 = vpop.f32.mrb[0].mxu0
      %v2015 = vadd.f32 %v1710, %v2014
      %v2016 = vpop.f32.mrb[0].mxu0
      %v2017 = vpop.f32.mrb[0].mxu0
      %v2018 = vadd.f32 %v1713, %v2017
      %v2019 = vpop.f32.mrb[0].mxu0
      %2020 = vmatprep.mubr.bf16.mxu0 %v1112
      %2021 = vmatmul.mubr.bf16.gmra.mrb[0].mxu0 %v1111
      %v2022 = vpop.f32.mrb[0].mxu0
      %v2023 = vadd.f32 %v1718, %v2022
      %v2024 = vpop.f32.mrb[0].mxu0
      %v2025 = vpop.f32.mrb[0].mxu0
      %v2026 = vadd.f32 %v1721, %v2025
      %v2027 = vpop.f32.mrb[0].mxu0
      %2028 = vmatprep.mubr.bf16.mxu0 %v1115
      %2029 = vmatmul.mubr.bf16.gmra.mrb[0].mxu0 %v1114
      %v2030 = vpop.f32.mrb[0].mxu0
      %v2031 = vadd.f32 %v1726, %v2030
      %v2032 = vpop.f32.mrb[0].mxu0
      %v2033 = vpop.f32.mrb[0].mxu0
      %v2034 = vadd.f32 %v1729, %v2033
      %v2035 = vpop.f32.mrb[0].mxu0
      %2036 = vdwg.mxu0
      %2037 = vmatprep.subr.bf16.mxu0 0
      %2038 = vmatpush1.bf16.msra.mxu0 %v1844
      %2039 = vmatprep.subr.bf16.mxu0 0
      %2040 = vmatpush1.bf16.msra.mxu0 %v1845
      %2041 = vmatprep.subr.bf16.mxu0 0
      %2042 = vmatpush1.bf16.msra.mxu0 %v1846
      %2043 = vmatprep.subr.bf16.mxu0 0
      %2044 = vmatpush1.bf16.msra.mxu0 %v1847
      %2045 = vmatprep.subr.bf16.mxu0 0
      %2046 = vmatpush1.bf16.msra.mxu0 %v1848
      %2047 = vmatprep.subr.bf16.mxu0 0
      %2048 = vmatpush1.bf16.msra.mxu0 %v1849
      %2049 = vmatprep.subr.bf16.mxu0 0
      %2050 = vmatpush1.bf16.msra.mxu0 %v1850
      %2051 = vmatprep.subr.bf16.mxu0 0
      %2052 = vmatpush1.bf16.msra.mxu0 %v1851
      %2053 = vmatprep.subr.bf16.mxu0 0
      %2054 = vmatpush1.bf16.msra.mxu0 0
      %2055 = vmatprep.subr.bf16.mxu0 0
      %2056 = vmatpush1.bf16.msra.mxu0 0
      %2057 = vmatprep.subr.bf16.mxu0 0
      %2058 = vmatpush1.bf16.msra.mxu0 0
      %2059 = vmatprep.subr.bf16.mxu0 0
      %2060 = vmatpush1.bf16.msra.mxu0 0
      %2061 = vmatprep.subr.bf16.mxu0 0
      %2062 = vmatpush1.bf16.msra.mxu0 0
      %2063 = vmatprep.subr.bf16.mxu0 0
      %2064 = vmatpush1.bf16.msra.mxu0 0
      %2065 = vmatprep.subr.bf16.mxu0 0
      %2066 = vmatpush1.bf16.msra.mxu0 0
      %2067 = vmatprep.subr.bf16.mxu0 0
      %2068 = vmatpush1.bf16.msra.mxu0 0
      %2069 = vmatprep.mubr.bf16.mxu0 0
      %2070 = vmatmul.mubr.bf16.gmra.mrb[0].mxu0 %v1071
      %v2071 = vpop.f32.mrb[0].mxu0
      %v2072 = vadd.f32 %v1911, %v2071
      %v2073 = vpop.f32.mrb[0].mxu0
      %v2074 = vpop.f32.mrb[0].mxu0
      %v2075 = vadd.f32 %v1914, %v2074
      %v2076 = vpop.f32.mrb[0].mxu0
      %2077 = vmatprep.mubr.bf16.mxu0 0
      %2078 = vmatmul.mubr.bf16.gmra.mrb[0].mxu0 %v1074
      %v2079 = vpop.f32.mrb[0].mxu0
      %v2080 = vadd.f32 %v1919, %v2079
      %v2081 = vpop.f32.mrb[0].mxu0
      %v2082 = vpop.f32.mrb[0].mxu0
      %v2083 = vadd.f32 %v1922, %v2082
      %v2084 = vpop.f32.mrb[0].mxu0
      %2085 = vmatprep.mubr.bf16.mxu0 0
      %2086 = vmatmul.mubr.bf16.gmra.mrb[0].mxu0 %v1077
      %v2087 = vpop.f32.mrb[0].mxu0
      %v2088 = vadd.f32 %v1927, %v2087
      %v2089 = vpop.f32.mrb[0].mxu0
      %v2090 = vpop.f32.mrb[0].mxu0
      %v2091 = vadd.f32 %v1930, %v2090
      %v2092 = vpop.f32.mrb[0].mxu0
      %2093 = vmatprep.mubr.bf16.mxu0 0
      %2094 = vmatmul.mubr.bf16.gmra.mrb[0].mxu0 %v1080
      %v2095 = vpop.f32.mrb[0].mxu0
      %v2096 = vadd.f32 %v1935, %v2095
      %v2097 = vpop.f32.mrb[0].mxu0
      %v2098 = vpop.f32.mrb[0].mxu0
      %v2099 = vadd.f32 %v1938, %v2098
      %v2100 = vpop.f32.mrb[0].mxu0
      %2101 = vmatprep.mubr.bf16.mxu0 0
      %2102 = vmatmul.mubr.bf16.gmra.mrb[0].mxu0 %v1083
      %v2103 = vpop.f32.mrb[0].mxu0
      %v2104 = vadd.f32 %v1943, %v2103
      %v2105 = vpop.f32.mrb[0].mxu0
      %v2106 = vpop.f32.mrb[0].mxu0
      %v2107 = vadd.f32 %v1946, %v2106
      %v2108 = vpop.f32.mrb[0].mxu0
      %2109 = vmatprep.mubr.bf16.mxu0 0
      %2110 = vmatmul.mubr.bf16.gmra.mrb[0].mxu0 %v1086
      %v2111 = vpop.f32.mrb[0].mxu0
      %v2112 = vadd.f32 %v1951, %v2111
      %v2113 = vpop.f32.mrb[0].mxu0
      %v2114 = vpop.f32.mrb[0].mxu0
      %v2115 = vadd.f32 %v1954, %v2114
      %v2116 = vpop.f32.mrb[0].mxu0
      %2117 = vmatprep.mubr.bf16.mxu0 0
      %2118 = vmatmul.mubr.bf16.gmra.mrb[0].mxu0 %v1089
      %v2119 = vpop.f32.mrb[0].mxu0
      %v2120 = vadd.f32 %v1959, %v2119
      %v2121 = vpop.f32.mrb[0].mxu0
      %v2122 = vpop.f32.mrb[0].mxu0
      %v2123 = vadd.f32 %v1962, %v2122
      %v2124 = vpop.f32.mrb[0].mxu0
      %2125 = vmatprep.mubr.bf16.mxu0 0
      %2126 = vmatmul.mubr.bf16.gmra.mrb[0].mxu0 %v1092
      %v2127 = vpop.f32.mrb[0].mxu0
      %v2128 = vadd.f32 %v1967, %v2127
      %v2129 = vpop.f32.mrb[0].mxu0
      %v2130 = vpop.f32.mrb[0].mxu0
      %v2131 = vadd.f32 %v1970, %v2130
      %v2132 = vpop.f32.mrb[0].mxu0
      %2133 = vmatprep.mubr.bf16.mxu0 0
      %2134 = vmatmul.mubr.bf16.gmra.mrb[0].mxu0 %v1095
      %v2135 = vpop.f32.mrb[0].mxu0
      %v2136 = vadd.f32 %v1975, %v2135
      %v2137 = vpop.f32.mrb[0].mxu0
      %v2138 = vpop.f32.mrb[0].mxu0
      %v2139 = vadd.f32 %v1978, %v2138
      %v2140 = vpop.f32.mrb[0].mxu0
      %2141 = vmatprep.mubr.bf16.mxu0 0
      %2142 = vmatmul.mubr.bf16.gmra.mrb[0].mxu0 %v1098
      %v2143 = vpop.f32.mrb[0].mxu0
      %v2144 = vadd.f32 %v1983, %v2143
      %v2145 = vpop.f32.mrb[0].mxu0
      %v2146 = vpop.f32.mrb[0].mxu0
      %v2147 = vadd.f32 %v1986, %v2146
      %v2148 = vpop.f32.mrb[0].mxu0
      %2149 = vmatprep.mubr.bf16.mxu0 0
      %2150 = vmatmul.mubr.bf16.gmra.mrb[0].mxu0 %v1101
      %v2151 = vpop.f32.mrb[0].mxu0
      %v2152 = vadd.f32 %v1991, %v2151
      %v2153 = vpop.f32.mrb[0].mxu0
      %v2154 = vpop.f32.mrb[0].mxu0
      %v2155 = vadd.f32 %v1994, %v2154
      %v2156 = vpop.f32.mrb[0].mxu0
      %2157 = vmatprep.mubr.bf16.mxu0 0
      %2158 = vmatmul.mubr.bf16.gmra.mrb[0].mxu0 %v1104
      %v2159 = vpop.f32.mrb[0].mxu0
      %v2160 = vadd.f32 %v1999, %v2159
      %v2161 = vpop.f32.mrb[0].mxu0
      %v2162 = vpop.f32.mrb[0].mxu0
      %v2163 = vadd.f32 %v2002, %v2162
      %v2164 = vpop.f32.mrb[0].mxu0
      %2165 = vmatprep.mubr.bf16.mxu0 0
      %2166 = vmatmul.mubr.bf16.gmra.mrb[0].mxu0 %v1107
      %v2167 = vpop.f32.mrb[0].mxu0
      %v2168 = vadd.f32 %v2007, %v2167
      %v2169 = vpop.f32.mrb[0].mxu0
      %v2170 = vpop.f32.mrb[0].mxu0
      %v2171 = vadd.f32 %v2010, %v2170
      %v2172 = vpop.f32.mrb[0].mxu0
      %2173 = vmatprep.mubr.bf16.mxu0 0
      %2174 = vmatmul.mubr.bf16.gmra.mrb[0].mxu0 %v1110
      %v2175 = vpop.f32.mrb[0].mxu0
      %v2176 = vadd.f32 %v2015, %v2175
      %v2177 = vpop.f32.mrb[0].mxu0
      %v2178 = vpop.f32.mrb[0].mxu0
      %v2179 = vadd.f32 %v2018, %v2178
      %v2180 = vpop.f32.mrb[0].mxu0
      %2181 = vmatprep.mubr.bf16.mxu0 0
      %2182 = vmatmul.mubr.bf16.gmra.mrb[0].mxu0 %v1113
      %v2183 = vpop.f32.mrb[0].mxu0
      %v2184 = vadd.f32 %v2023, %v2183
      %v2185 = vpop.f32.mrb[0].mxu0
      %v2186 = vpop.f32.mrb[0].mxu0
      %v2187 = vadd.f32 %v2026, %v2186
      %v2188 = vpop.f32.mrb[0].mxu0
      %2189 = vmatprep.mubr.bf16.mxu0 0
      %2190 = vmatmul.mubr.bf16.gmra.mrb[0].mxu0 %v1116
      %v2191 = vpop.f32.mrb[0].mxu0
      %v2192 = vadd.f32 %v2031, %v2191
      %v2193 = vpop.f32.mrb[0].mxu0
      %v2194 = vpop.f32.mrb[0].mxu0
      %v2195 = vadd.f32 %v2034, %v2194
      %v2196 = vpop.f32.mrb[0].mxu0
      %2197 = vdwg.mxu0
      %s2198 = sadd.s32 %s1065, 2
      %s2199 = smul.u32 %s2198, 3
      %s2200 = smul.addr %s2199, 8
      %s2201 = scalar_lea.vmem [#allocation2], %s2200
      %v2202 = vld [vmem:[%s2201] sm:$0xff]
      %v2203 = vld [vmem:[%s2201 + $0x8] sm:$0xff]
      %v2204 = vld [vmem:[%s2201 + $0x10] sm:$0xff]
      %v2205 = vld [vmem:[%s2201 + $0x18] sm:$0xff]
      %v2206 = vld [vmem:[%s2201 + $0x20] sm:$0xff]
      %v2207 = vld [vmem:[%s2201 + $0x28] sm:$0xff]
      %v2208 = vld [vmem:[%s2201 + $0x30] sm:$0xff]
      %v2209 = vld [vmem:[%s2201 + $0x38] sm:$0xff]
      %v2210 = vld [vmem:[%s2201 + $0x40] sm:$0xff]
      %v2211 = vld [vmem:[%s2201 + $0x48] sm:$0xff]
      %v2212 = vld [vmem:[%s2201 + $0x50] sm:$0xff]
      %v2213 = vld [vmem:[%s2201 + $0x58] sm:$0xff]
      %v2214 = vld [vmem:[%s2201 + $0x60] sm:$0xff]
      %v2215 = vld [vmem:[%s2201 + $0x68] sm:$0xff]
      %v2216 = vld [vmem:[%s2201 + $0x70] sm:$0xff]
      %v2217 = vld [vmem:[%s2201 + $0x78] sm:$0xff]
      %v2218 = vld [vmem:[%s2201 + $0x80] sm:$0xff]
      %v2219 = vld [vmem:[%s2201 + $0x88] sm:$0xff]
      %v2220 = vld [vmem:[%s2201 + $0x90] sm:$0xff]
      %v2221 = vld [vmem:[%s2201 + $0x98] sm:$0xff]
      %v2222 = vld [vmem:[%s2201 + $0xa0] sm:$0xff]
      %v2223 = vld [vmem:[%s2201 + $0xa8] sm:$0xff]
      %v2224 = vld [vmem:[%s2201 + $0xb0] sm:$0xff]
      %v2225 = vld [vmem:[%s2201 + $0xb8] sm:$0xff]
      %v2226 = vld [vmem:[%s2201 + $0xc0] sm:$0xff]
      %v2227 = vld [vmem:[%s2201 + $0xc8] sm:$0xff]
      %v2228 = vld [vmem:[%s2201 + $0xd0] sm:$0xff]
      %v2229 = vld [vmem:[%s2201 + $0xd8] sm:$0xff]
      %v2230 = vld [vmem:[%s2201 + $0xe0] sm:$0xff]
      %v2231 = vld [vmem:[%s2201 + $0xe8] sm:$0xff]
      %v2232 = vld [vmem:[%s2201 + $0xf0] sm:$0xff]
      %v2233 = vld [vmem:[%s2201 + $0xf8] sm:$0xff]
      %v2234 = vld [vmem:[%s2201 + $0x100] sm:$0xff]
      %v2235 = vld [vmem:[%s2201 + $0x108] sm:$0xff]
      %v2236 = vld [vmem:[%s2201 + $0x110] sm:$0xff]
      %v2237 = vld [vmem:[%s2201 + $0x118] sm:$0xff]
      %v2238 = vld [vmem:[%s2201 + $0x120] sm:$0xff]
      %v2239 = vld [vmem:[%s2201 + $0x128] sm:$0xff]
      %v2240 = vld [vmem:[%s2201 + $0x130] sm:$0xff]
      %v2241 = vld [vmem:[%s2201 + $0x138] sm:$0xff]
      %v2242 = vld [vmem:[%s2201 + $0x140] sm:$0xff]
      %v2243 = vld [vmem:[%s2201 + $0x148] sm:$0xff]
      %v2244 = vld [vmem:[%s2201 + $0x150] sm:$0xff]
      %v2245 = vld [vmem:[%s2201 + $0x158] sm:$0xff]
      %v2246 = vld [vmem:[%s2201 + $0x160] sm:$0xff]
      %v2247 = vld [vmem:[%s2201 + $0x168] sm:$0xff]
      %v2248 = vld [vmem:[%s2201 + $0x170] sm:$0xff]
      %v2249 = vld [vmem:[%s2201 + $0x178] sm:$0xff]
      %s2250 = scalar_lea.vmem %s3, 384
      %v2251 = vld [vmem:[%s2250] sm:$0xf]
      %v2252 = vld [vmem:[%s2250 + $0x4] sm:$0xf]
      %v2253 = vld [vmem:[%s2250 + $0x8] sm:$0xf]
      %v2254 = vld [vmem:[%s2250 + $0xc] sm:$0xf]
      %v2255 = vld [vmem:[%s2250 + $0x10] sm:$0xf]
      %v2256 = vld [vmem:[%s2250 + $0x14] sm:$0xf]
      %v2257 = vld [vmem:[%s2250 + $0x18] sm:$0xf]
      %v2258 = vld [vmem:[%s2250 + $0x1c] sm:$0xf]
      %v2259 = vld [vmem:[%s2250 + $0x20] sm:$0xf]
      %v2260 = vld [vmem:[%s2250 + $0x24] sm:$0xf]
      %v2261 = vld [vmem:[%s2250 + $0x28] sm:$0xf]
      %v2262 = vld [vmem:[%s2250 + $0x2c] sm:$0xf]
      %v2263 = vld [vmem:[%s2250 + $0x30] sm:$0xf]
      %v2264 = vld [vmem:[%s2250 + $0x34] sm:$0xf]
      %v2265 = vld [vmem:[%s2250 + $0x38] sm:$0xf]
      %v2266 = vld [vmem:[%s2250 + $0x3c] sm:$0xf]
      %v2267 = vld [vmem:[%s2250 + $0x40] sm:$0xf]
      %v2268 = vld [vmem:[%s2250 + $0x44] sm:$0xf]
      %v2269 = vld [vmem:[%s2250 + $0x48] sm:$0xf]
      %v2270 = vld [vmem:[%s2250 + $0x4c] sm:$0xf]
      %v2271 = vld [vmem:[%s2250 + $0x50] sm:$0xf]
      %v2272 = vld [vmem:[%s2250 + $0x54] sm:$0xf]
      %v2273 = vld [vmem:[%s2250 + $0x58] sm:$0xf]
      %v2274 = vld [vmem:[%s2250 + $0x5c] sm:$0xf]
      %v2275 = vld [vmem:[%s2250 + $0x60] sm:$0xf]
      %v2276 = vld [vmem:[%s2250 + $0x64] sm:$0xf]
      %v2277 = vld [vmem:[%s2250 + $0x68] sm:$0xf]
      %v2278 = vld [vmem:[%s2250 + $0x6c] sm:$0xf]
      %v2279 = vld [vmem:[%s2250 + $0x70] sm:$0xf]
      %v2280 = vld [vmem:[%s2250 + $0x74] sm:$0xf]
      %v2281 = vld [vmem:[%s2250 + $0x78] sm:$0xf]
      %v2282 = vld [vmem:[%s2250 + $0x7c] sm:$0xf]
      %v2283 = vld [vmem:[%s2250 + $0x80] sm:$0xf]
      %v2284 = vld [vmem:[%s2250 + $0x84] sm:$0xf]
      %v2285 = vld [vmem:[%s2250 + $0x88] sm:$0xf]
      %v2286 = vld [vmem:[%s2250 + $0x8c] sm:$0xf]
      %v2287 = vld [vmem:[%s2250 + $0x90] sm:$0xf]
      %v2288 = vld [vmem:[%s2250 + $0x94] sm:$0xf]
      %v2289 = vld [vmem:[%s2250 + $0x98] sm:$0xf]
      %v2290 = vld [vmem:[%s2250 + $0x9c] sm:$0xf]
      %v2291 = vld [vmem:[%s2250 + $0xa0] sm:$0xf]
      %v2292 = vld [vmem:[%s2250 + $0xa4] sm:$0xf]
      %v2293 = vld [vmem:[%s2250 + $0xa8] sm:$0xf]
      %v2294 = vld [vmem:[%s2250 + $0xac] sm:$0xf]
      %v2295 = vld [vmem:[%s2250 + $0xb0] sm:$0xf]
      %v2296 = vld [vmem:[%s2250 + $0xb4] sm:$0xf]
      %v2297 = vld [vmem:[%s2250 + $0xb8] sm:$0xf]
      %v2298 = vld [vmem:[%s2250 + $0xbc] sm:$0xf]
      %v2347 = vunpack.c.l.b16 %v2251
      %v2348 = vunpack.c.l.b16 %v2252
      %v2349 = vunpack.c.l.b16 %v2253
      %v2350 = vunpack.c.l.b16 %v2254
      %v2351 = vunpack.c.l.b16 %v2255
      %v2352 = vunpack.c.l.b16 %v2256
      %v2353 = vunpack.c.l.b16 %v2257
      %v2354 = vunpack.c.l.b16 %v2258
      %v2355 = vunpack.c.l.b16 %v2259
      %v2356 = vunpack.c.l.b16 %v2260
      %v2357 = vunpack.c.l.b16 %v2261
      %v2358 = vunpack.c.l.b16 %v2262
      %v2359 = vunpack.c.l.b16 %v2263
      %v2360 = vunpack.c.l.b16 %v2264
      %v2361 = vunpack.c.l.b16 %v2265
      %v2362 = vunpack.c.l.b16 %v2266
      %v2363 = vunpack.c.l.b16 %v2267
      %v2364 = vunpack.c.l.b16 %v2268
      %v2365 = vunpack.c.l.b16 %v2269
      %v2366 = vunpack.c.l.b16 %v2270
      %v2367 = vunpack.c.l.b16 %v2271
      %v2368 = vunpack.c.l.b16 %v2272
      %v2369 = vunpack.c.l.b16 %v2273
      %v2370 = vunpack.c.l.b16 %v2274
      %v2371 = vunpack.c.l.b16 %v2275
      %v2372 = vunpack.c.l.b16 %v2276
      %v2373 = vunpack.c.l.b16 %v2277
      %v2374 = vunpack.c.l.b16 %v2278
      %v2375 = vunpack.c.l.b16 %v2279
      %v2376 = vunpack.c.l.b16 %v2280
      %v2377 = vunpack.c.l.b16 %v2281
      %v2378 = vunpack.c.l.b16 %v2282
      %v2379 = vunpack.c.l.b16 %v2283
      %v2380 = vunpack.c.l.b16 %v2284
      %v2381 = vunpack.c.l.b16 %v2285
      %v2382 = vunpack.c.l.b16 %v2286
      %v2383 = vunpack.c.l.b16 %v2287
      %v2384 = vunpack.c.l.b16 %v2288
      %v2385 = vunpack.c.l.b16 %v2289
      %v2386 = vunpack.c.l.b16 %v2290
      %v2387 = vunpack.c.l.b16 %v2291
      %v2388 = vunpack.c.l.b16 %v2292
      %v2389 = vunpack.c.l.b16 %v2293
      %v2390 = vunpack.c.l.b16 %v2294
      %v2391 = vunpack.c.l.b16 %v2295
      %v2392 = vunpack.c.l.b16 %v2296
      %v2393 = vunpack.c.l.b16 %v2297
      %v2394 = vunpack.c.l.b16 %v2298
      %v2395 = vpack.c.b16 %v2348, %v2347
      %v2396 = vpack.c.b16 %v2350, %v2349
      %v2397 = vpack.c.b16 %v2352, %v2351
      %v2398 = vpack.c.b16 %v2354, %v2353
      %v2399 = vpack.c.b16 %v2356, %v2355
      %v2400 = vpack.c.b16 %v2358, %v2357
      %v2401 = vpack.c.b16 %v2360, %v2359
      %v2402 = vpack.c.b16 %v2362, %v2361
      %v2403 = vpack.c.b16 %v2364, %v2363
      %v2404 = vpack.c.b16 %v2366, %v2365
      %v2405 = vpack.c.b16 %v2368, %v2367
      %v2406 = vpack.c.b16 %v2370, %v2369
      %v2407 = vpack.c.b16 %v2372, %v2371
      %v2408 = vpack.c.b16 %v2374, %v2373
      %v2409 = vpack.c.b16 %v2376, %v2375
      %v2410 = vpack.c.b16 %v2378, %v2377
      %v2411 = vpack.c.b16 %v2380, %v2379
      %v2412 = vpack.c.b16 %v2382, %v2381
      %v2413 = vpack.c.b16 %v2384, %v2383
      %v2414 = vpack.c.b16 %v2386, %v2385
      %v2415 = vpack.c.b16 %v2388, %v2387
      %v2416 = vpack.c.b16 %v2390, %v2389
      %v2417 = vpack.c.b16 %v2392, %v2391
      %v2418 = vpack.c.b16 %v2394, %v2393
      %2443 = vmatprep.subr.bf16.mxu0 0
      %2444 = vmatpush1.bf16.msra.mxu0 %v2395
      %2445 = vmatprep.subr.bf16.mxu0 0
      %2446 = vmatpush1.bf16.msra.mxu0 %v2396
      %2447 = vmatprep.subr.bf16.mxu0 0
      %2448 = vmatpush1.bf16.msra.mxu0 %v2397
      %2449 = vmatprep.subr.bf16.mxu0 0
      %2450 = vmatpush1.bf16.msra.mxu0 %v2398
      %2451 = vmatprep.subr.bf16.mxu0 0
      %2452 = vmatpush1.bf16.msra.mxu0 %v2399
      %2453 = vmatprep.subr.bf16.mxu0 0
      %2454 = vmatpush1.bf16.msra.mxu0 %v2400
      %2455 = vmatprep.subr.bf16.mxu0 0
      %2456 = vmatpush1.bf16.msra.mxu0 %v2401
      %2457 = vmatprep.subr.bf16.mxu0 0
      %2458 = vmatpush1.bf16.msra.mxu0 %v2402
      %2459 = vmatprep.subr.bf16.mxu0 0
      %2460 = vmatpush1.bf16.msra.mxu0 %v2403
      %2461 = vmatprep.subr.bf16.mxu0 0
      %2462 = vmatpush1.bf16.msra.mxu0 %v2404
      %2463 = vmatprep.subr.bf16.mxu0 0
      %2464 = vmatpush1.bf16.msra.mxu0 %v2405
      %2465 = vmatprep.subr.bf16.mxu0 0
      %2466 = vmatpush1.bf16.msra.mxu0 %v2406
      %2467 = vmatprep.subr.bf16.mxu0 0
      %2468 = vmatpush1.bf16.msra.mxu0 %v2407
      %2469 = vmatprep.subr.bf16.mxu0 0
      %2470 = vmatpush1.bf16.msra.mxu0 %v2408
      %2471 = vmatprep.subr.bf16.mxu0 0
      %2472 = vmatpush1.bf16.msra.mxu0 %v2409
      %2473 = vmatprep.subr.bf16.mxu0 0
      %2474 = vmatpush1.bf16.msra.mxu0 %v2410
      %2475 = vmatprep.mubr.bf16.mxu0 %v2203
      %2476 = vmatmul.mubr.bf16.gmra.mrb[0].mxu0 %v2202
      %v2477 = vpop.f32.mrb[0].mxu0
      %v2478 = vadd.f32 0.0, %v2477
      %v2479 = vpop.f32.mrb[0].mxu0
      %v2480 = vpop.f32.mrb[0].mxu0
      %v2481 = vadd.f32 0.0, %v2480
      %v2482 = vpop.f32.mrb[0].mxu0
      %2483 = vmatprep.mubr.bf16.mxu0 %v2206
      %2484 = vmatmul.mubr.bf16.gmra.mrb[0].mxu0 %v2205
      %v2485 = vpop.f32.mrb[0].mxu0
      %v2486 = vadd.f32 0.0, %v2485
      %v2487 = vpop.f32.mrb[0].mxu0
      %v2488 = vpop.f32.mrb[0].mxu0
      %v2489 = vadd.f32 0.0, %v2488
      %v2490 = vpop.f32.mrb[0].mxu0
      %2491 = vmatprep.mubr.bf16.mxu0 %v2209
      %2492 = vmatmul.mubr.bf16.gmra.mrb[0].mxu0 %v2208
      %v2493 = vpop.f32.mrb[0].mxu0
      %v2494 = vadd.f32 0.0, %v2493
      %v2495 = vpop.f32.mrb[0].mxu0
      %v2496 = vpop.f32.mrb[0].mxu0
      %v2497 = vadd.f32 0.0, %v2496
      %v2498 = vpop.f32.mrb[0].mxu0
      %2499 = vmatprep.mubr.bf16.mxu0 %v2212
      %2500 = vmatmul.mubr.bf16.gmra.mrb[0].mxu0 %v2211
      %v2501 = vpop.f32.mrb[0].mxu0
      %v2502 = vadd.f32 0.0, %v2501
      %v2503 = vpop.f32.mrb[0].mxu0
      %v2504 = vpop.f32.mrb[0].mxu0
      %v2505 = vadd.f32 0.0, %v2504
      %v2506 = vpop.f32.mrb[0].mxu0
      %2507 = vmatprep.mubr.bf16.mxu0 %v2215
      %2508 = vmatmul.mubr.bf16.gmra.mrb[0].mxu0 %v2214
      %v2509 = vpop.f32.mrb[0].mxu0
      %v2510 = vadd.f32 0.0, %v2509
      %v2511 = vpop.f32.mrb[0].mxu0
      %v2512 = vpop.f32.mrb[0].mxu0
      %v2513 = vadd.f32 0.0, %v2512
      %v2514 = vpop.f32.mrb[0].mxu0
      %2515 = vmatprep.mubr.bf16.mxu0 %v2218
      %2516 = vmatmul.mubr.bf16.gmra.mrb[0].mxu0 %v2217
      %v2517 = vpop.f32.mrb[0].mxu0
      %v2518 = vadd.f32 0.0, %v2517
      %v2519 = vpop.f32.mrb[0].mxu0
      %v2520 = vpop.f32.mrb[0].mxu0
      %v2521 = vadd.f32 0.0, %v2520
      %v2522 = vpop.f32.mrb[0].mxu0
      %2523 = vmatprep.mubr.bf16.mxu0 %v2221
      %2524 = vmatmul.mubr.bf16.gmra.mrb[0].mxu0 %v2220
      %v2525 = vpop.f32.mrb[0].mxu0
      %v2526 = vadd.f32 0.0, %v2525
      %v2527 = vpop.f32.mrb[0].mxu0
      %v2528 = vpop.f32.mrb[0].mxu0
      %v2529 = vadd.f32 0.0, %v2528
      %v2530 = vpop.f32.mrb[0].mxu0
      %2531 = vmatprep.mubr.bf16.mxu0 %v2224
      %2532 = vmatmul.mubr.bf16.gmra.mrb[0].mxu0 %v2223
      %v2533 = vpop.f32.mrb[0].mxu0
      %v2534 = vadd.f32 0.0, %v2533
      %v2535 = vpop.f32.mrb[0].mxu0
      %v2536 = vpop.f32.mrb[0].mxu0
      %v2537 = vadd.f32 0.0, %v2536
      %v2538 = vpop.f32.mrb[0].mxu0
      %2539 = vmatprep.mubr.bf16.mxu0 %v2227
      %2540 = vmatmul.mubr.bf16.gmra.mrb[0].mxu0 %v2226
      %v2541 = vpop.f32.mrb[0].mxu0
      %v2542 = vadd.f32 0.0, %v2541
      %v2543 = vpop.f32.mrb[0].mxu0
      %v2544 = vpop.f32.mrb[0].mxu0
      %v2545 = vadd.f32 0.0, %v2544
      %v2546 = vpop.f32.mrb[0].mxu0
      %2547 = vmatprep.mubr.bf16.mxu0 %v2230
      %2548 = vmatmul.mubr.bf16.gmra.mrb[0].mxu0 %v2229
      %v2549 = vpop.f32.mrb[0].mxu0
      %v2550 = vadd.f32 0.0, %v2549
      %v2551 = vpop.f32.mrb[0].mxu0
      %v2552 = vpop.f32.mrb[0].mxu0
      %v2553 = vadd.f32 0.0, %v2552
      %v2554 = vpop.f32.mrb[0].mxu0
      %2555 = vmatprep.mubr.bf16.mxu0 %v2233
      %2556 = vmatmul.mubr.bf16.gmra.mrb[0].mxu0 %v2232
      %v2557 = vpop.f32.mrb[0].mxu0
      %v2558 = vadd.f32 0.0, %v2557
      %v2559 = vpop.f32.mrb[0].mxu0
      %v2560 = vpop.f32.mrb[0].mxu0
      %v2561 = vadd.f32 0.0, %v2560
      %v2562 = vpop.f32.mrb[0].mxu0
      %2563 = vmatprep.mubr.bf16.mxu0 %v2236
      %2564 = vmatmul.mubr.bf16.gmra.mrb[0].mxu0 %v2235
      %v2565 = vpop.f32.mrb[0].mxu0
      %v2566 = vadd.f32 0.0, %v2565
      %v2567 = vpop.f32.mrb[0].mxu0
      %v2568 = vpop.f32.mrb[0].mxu0
      %v2569 = vadd.f32 0.0, %v2568
      %v2570 = vpop.f32.mrb[0].mxu0
      %2571 = vmatprep.mubr.bf16.mxu0 %v2239
      %2572 = vmatmul.mubr.bf16.gmra.mrb[0].mxu0 %v2238
      %v2573 = vpop.f32.mrb[0].mxu0
      %v2574 = vadd.f32 0.0, %v2573
      %v2575 = vpop.f32.mrb[0].mxu0
      %v2576 = vpop.f32.mrb[0].mxu0
      %v2577 = vadd.f32 0.0, %v2576
      %v2578 = vpop.f32.mrb[0].mxu0
      %2579 = vmatprep.mubr.bf16.mxu0 %v2242
      %2580 = vmatmul.mubr.bf16.gmra.mrb[0].mxu0 %v2241
      %v2581 = vpop.f32.mrb[0].mxu0
      %v2582 = vadd.f32 0.0, %v2581
      %v2583 = vpop.f32.mrb[0].mxu0
      %v2584 = vpop.f32.mrb[0].mxu0
      %v2585 = vadd.f32 0.0, %v2584
      %v2586 = vpop.f32.mrb[0].mxu0
      %2587 = vmatprep.mubr.bf16.mxu0 %v2245
      %2588 = vmatmul.mubr.bf16.gmra.mrb[0].mxu0 %v2244
      %v2589 = vpop.f32.mrb[0].mxu0
      %v2590 = vadd.f32 0.0, %v2589
      %v2591 = vpop.f32.mrb[0].mxu0
      %v2592 = vpop.f32.mrb[0].mxu0
      %v2593 = vadd.f32 0.0, %v2592
      %v2594 = vpop.f32.mrb[0].mxu0
      %2595 = vmatprep.mubr.bf16.mxu0 %v2248
      %2596 = vmatmul.mubr.bf16.gmra.mrb[0].mxu0 %v2247
      %v2597 = vpop.f32.mrb[0].mxu0
      %v2598 = vadd.f32 0.0, %v2597
      %v2599 = vpop.f32.mrb[0].mxu0
      %v2600 = vpop.f32.mrb[0].mxu0
      %v2601 = vadd.f32 0.0, %v2600
      %v2602 = vpop.f32.mrb[0].mxu0
      %2603 = vdwg.mxu0
      %2604 = vmatprep.subr.bf16.mxu0 0
      %2605 = vmatpush1.bf16.msra.mxu0 %v2411
      %2606 = vmatprep.subr.bf16.mxu0 0
      %2607 = vmatpush1.bf16.msra.mxu0 %v2412
      %2608 = vmatprep.subr.bf16.mxu0 0
      %2609 = vmatpush1.bf16.msra.mxu0 %v2413
      %2610 = vmatprep.subr.bf16.mxu0 0
      %2611 = vmatpush1.bf16.msra.mxu0 %v2414
      %2612 = vmatprep.subr.bf16.mxu0 0
      %2613 = vmatpush1.bf16.msra.mxu0 %v2415
      %2614 = vmatprep.subr.bf16.mxu0 0
      %2615 = vmatpush1.bf16.msra.mxu0 %v2416
      %2616 = vmatprep.subr.bf16.mxu0 0
      %2617 = vmatpush1.bf16.msra.mxu0 %v2417
      %2618 = vmatprep.subr.bf16.mxu0 0
      %2619 = vmatpush1.bf16.msra.mxu0 %v2418
      %2620 = vmatprep.subr.bf16.mxu0 0
      %2621 = vmatpush1.bf16.msra.mxu0 0
      %2622 = vmatprep.subr.bf16.mxu0 0
      %2623 = vmatpush1.bf16.msra.mxu0 0
      %2624 = vmatprep.subr.bf16.mxu0 0
      %2625 = vmatpush1.bf16.msra.mxu0 0
      %2626 = vmatprep.subr.bf16.mxu0 0
      %2627 = vmatpush1.bf16.msra.mxu0 0
      %2628 = vmatprep.subr.bf16.mxu0 0
      %2629 = vmatpush1.bf16.msra.mxu0 0
      %2630 = vmatprep.subr.bf16.mxu0 0
      %2631 = vmatpush1.bf16.msra.mxu0 0
      %2632 = vmatprep.subr.bf16.mxu0 0
      %2633 = vmatpush1.bf16.msra.mxu0 0
      %2634 = vmatprep.subr.bf16.mxu0 0
      %2635 = vmatpush1.bf16.msra.mxu0 0
      %2636 = vmatprep.mubr.bf16.mxu0 0
      %2637 = vmatmul.mubr.bf16.gmra.mrb[0].mxu0 %v2204
      %v2638 = vpop.f32.mrb[0].mxu0
      %v2639 = vadd.f32 %v2478, %v2638
      %v2640 = vpop.f32.mrb[0].mxu0
      %v2641 = vpop.f32.mrb[0].mxu0
      %v2642 = vadd.f32 %v2481, %v2641
      %v2643 = vpop.f32.mrb[0].mxu0
      %2644 = vmatprep.mubr.bf16.mxu0 0
      %2645 = vmatmul.mubr.bf16.gmra.mrb[0].mxu0 %v2207
      %v2646 = vpop.f32.mrb[0].mxu0
      %v2647 = vadd.f32 %v2486, %v2646
      %v2648 = vpop.f32.mrb[0].mxu0
      %v2649 = vpop.f32.mrb[0].mxu0
      %v2650 = vadd.f32 %v2489, %v2649
      %v2651 = vpop.f32.mrb[0].mxu0
      %2652 = vmatprep.mubr.bf16.mxu0 0
      %2653 = vmatmul.mubr.bf16.gmra.mrb[0].mxu0 %v2210
      %v2654 = vpop.f32.mrb[0].mxu0
      %v2655 = vadd.f32 %v2494, %v2654
      %v2656 = vpop.f32.mrb[0].mxu0
      %v2657 = vpop.f32.mrb[0].mxu0
      %v2658 = vadd.f32 %v2497, %v2657
      %v2659 = vpop.f32.mrb[0].mxu0
      %2660 = vmatprep.mubr.bf16.mxu0 0
      %2661 = vmatmul.mubr.bf16.gmra.mrb[0].mxu0 %v2213
      %v2662 = vpop.f32.mrb[0].mxu0
      %v2663 = vadd.f32 %v2502, %v2662
      %v2664 = vpop.f32.mrb[0].mxu0
      %v2665 = vpop.f32.mrb[0].mxu0
      %v2666 = vadd.f32 %v2505, %v2665
      %v2667 = vpop.f32.mrb[0].mxu0
      %2668 = vmatprep.mubr.bf16.mxu0 0
      %2669 = vmatmul.mubr.bf16.gmra.mrb[0].mxu0 %v2216
      %v2670 = vpop.f32.mrb[0].mxu0
      %v2671 = vadd.f32 %v2510, %v2670
      %v2672 = vpop.f32.mrb[0].mxu0
      %v2673 = vpop.f32.mrb[0].mxu0
      %v2674 = vadd.f32 %v2513, %v2673
      %v2675 = vpop.f32.mrb[0].mxu0
      %2676 = vmatprep.mubr.bf16.mxu0 0
      %2677 = vmatmul.mubr.bf16.gmra.mrb[0].mxu0 %v2219
      %v2678 = vpop.f32.mrb[0].mxu0
      %v2679 = vadd.f32 %v2518, %v2678
      %v2680 = vpop.f32.mrb[0].mxu0
      %v2681 = vpop.f32.mrb[0].mxu0
      %v2682 = vadd.f32 %v2521, %v2681
      %v2683 = vpop.f32.mrb[0].mxu0
      %2684 = vmatprep.mubr.bf16.mxu0 0
      %2685 = vmatmul.mubr.bf16.gmra.mrb[0].mxu0 %v2222
      %v2686 = vpop.f32.mrb[0].mxu0
      %v2687 = vadd.f32 %v2526, %v2686
      %v2688 = vpop.f32.mrb[0].mxu0
      %v2689 = vpop.f32.mrb[0].mxu0
      %v2690 = vadd.f32 %v2529, %v2689
      %v2691 = vpop.f32.mrb[0].mxu0
      %2692 = vmatprep.mubr.bf16.mxu0 0
      %2693 = vmatmul.mubr.bf16.gmra.mrb[0].mxu0 %v2225
      %v2694 = vpop.f32.mrb[0].mxu0
      %v2695 = vadd.f32 %v2534, %v2694
      %v2696 = vpop.f32.mrb[0].mxu0
      %v2697 = vpop.f32.mrb[0].mxu0
      %v2698 = vadd.f32 %v2537, %v2697
      %v2699 = vpop.f32.mrb[0].mxu0
      %2700 = vmatprep.mubr.bf16.mxu0 0
      %2701 = vmatmul.mubr.bf16.gmra.mrb[0].mxu0 %v2228
      %v2702 = vpop.f32.mrb[0].mxu0
      %v2703 = vadd.f32 %v2542, %v2702
      %v2704 = vpop.f32.mrb[0].mxu0
      %v2705 = vpop.f32.mrb[0].mxu0
      %v2706 = vadd.f32 %v2545, %v2705
      %v2707 = vpop.f32.mrb[0].mxu0
      %2708 = vmatprep.mubr.bf16.mxu0 0
      %2709 = vmatmul.mubr.bf16.gmra.mrb[0].mxu0 %v2231
      %v2710 = vpop.f32.mrb[0].mxu0
      %v2711 = vadd.f32 %v2550, %v2710
      %v2712 = vpop.f32.mrb[0].mxu0
      %v2713 = vpop.f32.mrb[0].mxu0
      %v2714 = vadd.f32 %v2553, %v2713
      %v2715 = vpop.f32.mrb[0].mxu0
      %2716 = vmatprep.mubr.bf16.mxu0 0
      %2717 = vmatmul.mubr.bf16.gmra.mrb[0].mxu0 %v2234
      %v2718 = vpop.f32.mrb[0].mxu0
      %v2719 = vadd.f32 %v2558, %v2718
      %v2720 = vpop.f32.mrb[0].mxu0
      %v2721 = vpop.f32.mrb[0].mxu0
      %v2722 = vadd.f32 %v2561, %v2721
      %v2723 = vpop.f32.mrb[0].mxu0
      %2724 = vmatprep.mubr.bf16.mxu0 0
      %2725 = vmatmul.mubr.bf16.gmra.mrb[0].mxu0 %v2237
      %v2726 = vpop.f32.mrb[0].mxu0
      %v2727 = vadd.f32 %v2566, %v2726
      %v2728 = vpop.f32.mrb[0].mxu0
      %v2729 = vpop.f32.mrb[0].mxu0
      %v2730 = vadd.f32 %v2569, %v2729
      %v2731 = vpop.f32.mrb[0].mxu0
      %2732 = vmatprep.mubr.bf16.mxu0 0
      %2733 = vmatmul.mubr.bf16.gmra.mrb[0].mxu0 %v2240
      %v2734 = vpop.f32.mrb[0].mxu0
      %v2735 = vadd.f32 %v2574, %v2734
      %v2736 = vpop.f32.mrb[0].mxu0
      %v2737 = vpop.f32.mrb[0].mxu0
      %v2738 = vadd.f32 %v2577, %v2737
      %v2739 = vpop.f32.mrb[0].mxu0
      %2740 = vmatprep.mubr.bf16.mxu0 0
      %2741 = vmatmul.mubr.bf16.gmra.mrb[0].mxu0 %v2243
      %v2742 = vpop.f32.mrb[0].mxu0
      %v2743 = vadd.f32 %v2582, %v2742
      %v2744 = vpop.f32.mrb[0].mxu0
      %v2745 = vpop.f32.mrb[0].mxu0
      %v2746 = vadd.f32 %v2585, %v2745
      %v2747 = vpop.f32.mrb[0].mxu0
      %2748 = vmatprep.mubr.bf16.mxu0 0
      %2749 = vmatmul.mubr.bf16.gmra.mrb[0].mxu0 %v2246
      %v2750 = vpop.f32.mrb[0].mxu0
      %v2751 = vadd.f32 %v2590, %v2750
      %v2752 = vpop.f32.mrb[0].mxu0
      %v2753 = vpop.f32.mrb[0].mxu0
      %v2754 = vadd.f32 %v2593, %v2753
      %v2755 = vpop.f32.mrb[0].mxu0
      %2756 = vmatprep.mubr.bf16.mxu0 0
      %2757 = vmatmul.mubr.bf16.gmra.mrb[0].mxu0 %v2249
      %v2758 = vpop.f32.mrb[0].mxu0
      %v2759 = vadd.f32 %v2598, %v2758
      %v2760 = vpop.f32.mrb[0].mxu0
      %v2761 = vpop.f32.mrb[0].mxu0
      %v2762 = vadd.f32 %v2601, %v2761
      %v2763 = vpop.f32.mrb[0].mxu0
      %2764 = vdwg.mxu0
      %v2765 = vadd.f32 %v2072, %v2639
      %v2766 = vadd.f32 %v2075, %v2642
      %v2767 = vadd.f32 %v2080, %v2647
      %v2768 = vadd.f32 %v2083, %v2650
      %v2769 = vadd.f32 %v2088, %v2655
      %v2770 = vadd.f32 %v2091, %v2658
      %v2771 = vadd.f32 %v2096, %v2663
      %v2772 = vadd.f32 %v2099, %v2666
      %v2773 = vadd.f32 %v2104, %v2671
      %v2774 = vadd.f32 %v2107, %v2674
      %v2775 = vadd.f32 %v2112, %v2679
      %v2776 = vadd.f32 %v2115, %v2682
      %v2777 = vadd.f32 %v2120, %v2687
      %v2778 = vadd.f32 %v2123, %v2690
      %v2779 = vadd.f32 %v2128, %v2695
      %v2780 = vadd.f32 %v2131, %v2698
      %v2781 = vadd.f32 %v2136, %v2703
      %v2782 = vadd.f32 %v2139, %v2706
      %v2783 = vadd.f32 %v2144, %v2711
      %v2784 = vadd.f32 %v2147, %v2714
      %v2785 = vadd.f32 %v2152, %v2719
      %v2786 = vadd.f32 %v2155, %v2722
      %v2787 = vadd.f32 %v2160, %v2727
      %v2788 = vadd.f32 %v2163, %v2730
      %v2789 = vadd.f32 %v2168, %v2735
      %v2790 = vadd.f32 %v2171, %v2738
      %v2791 = vadd.f32 %v2176, %v2743
      %v2792 = vadd.f32 %v2179, %v2746
      %v2793 = vadd.f32 %v2184, %v2751
      %v2794 = vadd.f32 %v2187, %v2754
      %v2795 = vadd.f32 %v2192, %v2759
      %v2796 = vadd.f32 %v2195, %v2762
      %v2797 = vld [vmem:[%s4] sm:$0x1]
      %v2799 = vlaneseq
      %v2800 = vshrl.u32 %v2799, 7
      %v2801 = vsub.s32 0, %v2800
      %v2802 = vrot.slane %v2797, %v2801
      %v2804 = vadd.f32 %v2765, %v2802
      %v2805 = vadd.f32 %v2766, %v2802
      %v2806 = vadd.f32 %v2767, %v2802
      %v2807 = vadd.f32 %v2768, %v2802
      %v2808 = vadd.f32 %v2769, %v2802
      %v2809 = vadd.f32 %v2770, %v2802
      %v2810 = vadd.f32 %v2771, %v2802
      %v2811 = vadd.f32 %v2772, %v2802
      %v2812 = vadd.f32 %v2773, %v2802
      %v2813 = vadd.f32 %v2774, %v2802
      %v2814 = vadd.f32 %v2775, %v2802
      %v2815 = vadd.f32 %v2776, %v2802
      %v2816 = vadd.f32 %v2777, %v2802
      %v2817 = vadd.f32 %v2778, %v2802
      %v2818 = vadd.f32 %v2779, %v2802
      %v2819 = vadd.f32 %v2780, %v2802
      %v2820 = vadd.f32 %v2781, %v2802
      %v2821 = vadd.f32 %v2782, %v2802
      %v2822 = vadd.f32 %v2783, %v2802
      %v2823 = vadd.f32 %v2784, %v2802
      %v2824 = vadd.f32 %v2785, %v2802
      %v2825 = vadd.f32 %v2786, %v2802
      %v2826 = vadd.f32 %v2787, %v2802
      %v2827 = vadd.f32 %v2788, %v2802
      %v2828 = vadd.f32 %v2789, %v2802
      %v2829 = vadd.f32 %v2790, %v2802
      %v2830 = vadd.f32 %v2791, %v2802
      %v2831 = vadd.f32 %v2792, %v2802
      %v2832 = vadd.f32 %v2793, %v2802
      %v2833 = vadd.f32 %v2794, %v2802
      %v2834 = vadd.f32 %v2795, %v2802
      %v2835 = vadd.f32 %v2796, %v2802
      %v2836 = vmax.f32 %v2804, 0.0
      %v2837 = vmax.f32 %v2805, 0.0
      %v2838 = vmax.f32 %v2806, 0.0
      %v2839 = vmax.f32 %v2807, 0.0
      %v2840 = vmax.f32 %v2808, 0.0
      %v2841 = vmax.f32 %v2809, 0.0
      %v2842 = vmax.f32 %v2810, 0.0
      %v2843 = vmax.f32 %v2811, 0.0
      %v2844 = vmax.f32 %v2812, 0.0
      %v2845 = vmax.f32 %v2813, 0.0
      %v2846 = vmax.f32 %v2814, 0.0
      %v2847 = vmax.f32 %v2815, 0.0
      %v2848 = vmax.f32 %v2816, 0.0
      %v2849 = vmax.f32 %v2817, 0.0
      %v2850 = vmax.f32 %v2818, 0.0
      %v2851 = vmax.f32 %v2819, 0.0
      %v2852 = vmax.f32 %v2820, 0.0
      %v2853 = vmax.f32 %v2821, 0.0
      %v2854 = vmax.f32 %v2822, 0.0
      %v2855 = vmax.f32 %v2823, 0.0
      %v2856 = vmax.f32 %v2824, 0.0
      %v2857 = vmax.f32 %v2825, 0.0
      %v2858 = vmax.f32 %v2826, 0.0
      %v2859 = vmax.f32 %v2827, 0.0
      %v2860 = vmax.f32 %v2828, 0.0
      %v2861 = vmax.f32 %v2829, 0.0
      %v2862 = vmax.f32 %v2830, 0.0
      %v2863 = vmax.f32 %v2831, 0.0
      %v2864 = vmax.f32 %v2832, 0.0
      %v2865 = vmax.f32 %v2833, 0.0
      %v2866 = vmax.f32 %v2834, 0.0
      %v2867 = vmax.f32 %v2835, 0.0
      %v2868 = vpack.c.bf16 %v2837, %v2836
      %v2869 = vpack.c.bf16 %v2839, %v2838
      %v2870 = vpack.c.bf16 %v2841, %v2840
      %v2871 = vpack.c.bf16 %v2843, %v2842
      %v2872 = vpack.c.bf16 %v2845, %v2844
      %v2873 = vpack.c.bf16 %v2847, %v2846
      %v2874 = vpack.c.bf16 %v2849, %v2848
      %v2875 = vpack.c.bf16 %v2851, %v2850
      %v2876 = vpack.c.bf16 %v2853, %v2852
      %v2877 = vpack.c.bf16 %v2855, %v2854
      %v2878 = vpack.c.bf16 %v2857, %v2856
      %v2879 = vpack.c.bf16 %v2859, %v2858
      %v2880 = vpack.c.bf16 %v2861, %v2860
      %v2881 = vpack.c.bf16 %v2863, %v2862
      %v2882 = vpack.c.bf16 %v2865, %v2864
      %v2883 = vpack.c.bf16 %v2867, %v2866
      %v2884 = vld [vmem:[%s5] sm:$0xf]
      %v2885 = vld [vmem:[%s5 + $0x4] sm:$0xf]
      %v2886 = vld [vmem:[%s5 + $0x8] sm:$0xf]
      %v2887 = vld [vmem:[%s5 + $0xc] sm:$0xf]
      %v2888 = vld [vmem:[%s5 + $0x10] sm:$0xf]
      %v2889 = vld [vmem:[%s5 + $0x14] sm:$0xf]
      %v2890 = vld [vmem:[%s5 + $0x18] sm:$0xf]
      %v2891 = vld [vmem:[%s5 + $0x1c] sm:$0xf]
      %v2892 = vld [vmem:[%s5 + $0x20] sm:$0xf]
      %v2893 = vld [vmem:[%s5 + $0x24] sm:$0xf]
      %v2894 = vld [vmem:[%s5 + $0x28] sm:$0xf]
      %v2895 = vld [vmem:[%s5 + $0x2c] sm:$0xf]
      %v2896 = vld [vmem:[%s5 + $0x30] sm:$0xf]
      %v2897 = vld [vmem:[%s5 + $0x34] sm:$0xf]
      %v2898 = vld [vmem:[%s5 + $0x38] sm:$0xf]
      %v2899 = vld [vmem:[%s5 + $0x3c] sm:$0xf]
      %s2900 = smul.u32 %s1065, 2
      %s2901 = smul.addr %s2900, 4
      %s2902 = scalar_lea.vmem %s292, %s2901
      %v2903 = vld [vmem:[%s2902] sm:$0xf]
      %v2904 = vld [vmem:[%s2902 + $0x4] sm:$0xf]
      %v2905 = vld [vmem:[%s2902 + $0x8] sm:$0xf]
      %v2906 = vld [vmem:[%s2902 + $0xc] sm:$0xf]
      %v2907 = vld [vmem:[%s2902 + $0x10] sm:$0xf]
      %v2908 = vld [vmem:[%s2902 + $0x14] sm:$0xf]
      %v2909 = vld [vmem:[%s2902 + $0x18] sm:$0xf]
      %v2910 = vld [vmem:[%s2902 + $0x1c] sm:$0xf]
      %v2911 = vld [vmem:[%s2902 + $0x20] sm:$0xf]
      %v2912 = vld [vmem:[%s2902 + $0x24] sm:$0xf]
      %v2913 = vld [vmem:[%s2902 + $0x28] sm:$0xf]
      %v2914 = vld [vmem:[%s2902 + $0x2c] sm:$0xf]
      %v2915 = vld [vmem:[%s2902 + $0x30] sm:$0xf]
      %v2916 = vld [vmem:[%s2902 + $0x34] sm:$0xf]
      %v2917 = vld [vmem:[%s2902 + $0x38] sm:$0xf]
      %v2918 = vld [vmem:[%s2902 + $0x3c] sm:$0xf]
      %v2919 = vld [vmem:[%s2902 + $0x40] sm:$0xf]
      %v2920 = vld [vmem:[%s2902 + $0x44] sm:$0xf]
      %v2921 = vld [vmem:[%s2902 + $0x48] sm:$0xf]
      %v2922 = vld [vmem:[%s2902 + $0x4c] sm:$0xf]
      %v2923 = vld [vmem:[%s2902 + $0x50] sm:$0xf]
      %v2924 = vld [vmem:[%s2902 + $0x54] sm:$0xf]
      %v2925 = vld [vmem:[%s2902 + $0x58] sm:$0xf]
      %v2926 = vld [vmem:[%s2902 + $0x5c] sm:$0xf]
      %v2927 = vld [vmem:[%s2902 + $0x60] sm:$0xf]
      %v2928 = vld [vmem:[%s2902 + $0x64] sm:$0xf]
      %v2929 = vld [vmem:[%s2902 + $0x68] sm:$0xf]
      %v2930 = vld [vmem:[%s2902 + $0x6c] sm:$0xf]
      %v2931 = vld [vmem:[%s2902 + $0x70] sm:$0xf]
      %v2932 = vld [vmem:[%s2902 + $0x74] sm:$0xf]
      %v2933 = vld [vmem:[%s2902 + $0x78] sm:$0xf]
      %v2934 = vld [vmem:[%s2902 + $0x7c] sm:$0xf]
      %v2935 = vld [vmem:[%s6] sm:$0x1]
      %v2937 = vlaneseq
      %v2938 = vshrl.u32 %v2937, 7
      %v2939 = vsub.s32 0, %v2938
      %v2940 = vrot.slane %v2935, %v2939
      %v2958 = vunpack.c.l.b16 %v2884
      %v2959 = vunpack.c.l.b16 %v2885
      %v2960 = vunpack.c.l.b16 %v2886
      %v2961 = vunpack.c.l.b16 %v2887
      %v2962 = vunpack.c.l.b16 %v2888
      %v2963 = vunpack.c.l.b16 %v2889
      %v2964 = vunpack.c.l.b16 %v2890
      %v2965 = vunpack.c.l.b16 %v2891
      %v2966 = vunpack.c.l.b16 %v2892
      %v2967 = vunpack.c.l.b16 %v2893
      %v2968 = vunpack.c.l.b16 %v2894
      %v2969 = vunpack.c.l.b16 %v2895
      %v2970 = vunpack.c.l.b16 %v2896
      %v2971 = vunpack.c.l.b16 %v2897
      %v2972 = vunpack.c.l.b16 %v2898
      %v2973 = vunpack.c.l.b16 %v2899
      %v2974 = vpack.c.b16 %v2959, %v2958
      %v2975 = vpack.c.b16 %v2961, %v2960
      %v2976 = vpack.c.b16 %v2963, %v2962
      %v2977 = vpack.c.b16 %v2965, %v2964
      %v2978 = vpack.c.b16 %v2967, %v2966
      %v2979 = vpack.c.b16 %v2969, %v2968
      %v2980 = vpack.c.b16 %v2971, %v2970
      %v2981 = vpack.c.b16 %v2973, %v2972
      %2990 = vmatprep.subr.bf16.mxu0 0
      %2991 = vmatpush1.bf16.msra.mxu0 %v2974
      %2992 = vmatprep.subr.bf16.mxu0 0
      %2993 = vmatpush1.bf16.msra.mxu0 %v2975
      %2994 = vmatprep.subr.bf16.mxu0 0
      %2995 = vmatpush1.bf16.msra.mxu0 %v2976
      %2996 = vmatprep.subr.bf16.mxu0 0
      %2997 = vmatpush1.bf16.msra.mxu0 %v2977
      %2998 = vmatprep.subr.bf16.mxu0 0
      %2999 = vmatpush1.bf16.msra.mxu0 %v2978
      %3000 = vmatprep.subr.bf16.mxu0 0
      %3001 = vmatpush1.bf16.msra.mxu0 %v2979
      %3002 = vmatprep.subr.bf16.mxu0 0
      %3003 = vmatpush1.bf16.msra.mxu0 %v2980
      %3004 = vmatprep.subr.bf16.mxu0 0
      %3005 = vmatpush1.bf16.msra.mxu0 %v2981
      %3006 = vmatprep.subr.bf16.mxu0 0
      %3007 = vmatpush1.bf16.msra.mxu0 0
      %3008 = vmatprep.subr.bf16.mxu0 0
      %3009 = vmatpush1.bf16.msra.mxu0 0
      %3010 = vmatprep.subr.bf16.mxu0 0
      %3011 = vmatpush1.bf16.msra.mxu0 0
      %3012 = vmatprep.subr.bf16.mxu0 0
      %3013 = vmatpush1.bf16.msra.mxu0 0
      %3014 = vmatprep.subr.bf16.mxu0 0
      %3015 = vmatpush1.bf16.msra.mxu0 0
      %3016 = vmatprep.subr.bf16.mxu0 0
      %3017 = vmatpush1.bf16.msra.mxu0 0
      %3018 = vmatprep.subr.bf16.mxu0 0
      %3019 = vmatpush1.bf16.msra.mxu0 0
      %3020 = vmatprep.subr.bf16.mxu0 0
      %3021 = vmatpush1.bf16.msra.mxu0 0
      %3022 = vmatprep.mubr.bf16.mxu0 0
      %3023 = vmatmul.mubr.bf16.gmra.mrb[0].mxu0 %v2868
      %v3024 = vpop.f32.mrb[0].mxu0
      %v3025 = vadd.f32 %v2940, %v3024
      %v3026 = vpop.f32.mrb[0].mxu0
      %v3027 = vpop.f32.mrb[0].mxu0
      %v3028 = vadd.f32 %v2940, %v3027
      %v3029 = vpop.f32.mrb[0].mxu0
      %3030 = vmatprep.mubr.bf16.mxu0 0
      %3031 = vmatmul.mubr.bf16.gmra.mrb[0].mxu0 %v2869
      %v3032 = vpop.f32.mrb[0].mxu0
      %v3033 = vadd.f32 %v2940, %v3032
      %v3034 = vpop.f32.mrb[0].mxu0
      %v3035 = vpop.f32.mrb[0].mxu0
      %v3036 = vadd.f32 %v2940, %v3035
      %v3037 = vpop.f32.mrb[0].mxu0
      %3038 = vmatprep.mubr.bf16.mxu0 0
      %3039 = vmatmul.mubr.bf16.gmra.mrb[0].mxu0 %v2870
      %v3040 = vpop.f32.mrb[0].mxu0
      %v3041 = vadd.f32 %v2940, %v3040
      %v3042 = vpop.f32.mrb[0].mxu0
      %v3043 = vpop.f32.mrb[0].mxu0
      %v3044 = vadd.f32 %v2940, %v3043
      %v3045 = vpop.f32.mrb[0].mxu0
      %3046 = vmatprep.mubr.bf16.mxu0 0
      %3047 = vmatmul.mubr.bf16.gmra.mrb[0].mxu0 %v2871
      %v3048 = vpop.f32.mrb[0].mxu0
      %v3049 = vadd.f32 %v2940, %v3048
      %v3050 = vpop.f32.mrb[0].mxu0
      %v3051 = vpop.f32.mrb[0].mxu0
      %v3052 = vadd.f32 %v2940, %v3051
      %v3053 = vpop.f32.mrb[0].mxu0
      %3054 = vmatprep.mubr.bf16.mxu0 0
      %3055 = vmatmul.mubr.bf16.gmra.mrb[0].mxu0 %v2872
      %v3056 = vpop.f32.mrb[0].mxu0
      %v3057 = vadd.f32 %v2940, %v3056
      %v3058 = vpop.f32.mrb[0].mxu0
      %v3059 = vpop.f32.mrb[0].mxu0
      %v3060 = vadd.f32 %v2940, %v3059
      %v3061 = vpop.f32.mrb[0].mxu0
      %3062 = vmatprep.mubr.bf16.mxu0 0
      %3063 = vmatmul.mubr.bf16.gmra.mrb[0].mxu0 %v2873
      %v3064 = vpop.f32.mrb[0].mxu0
      %v3065 = vadd.f32 %v2940, %v3064
      %v3066 = vpop.f32.mrb[0].mxu0
      %v3067 = vpop.f32.mrb[0].mxu0
      %v3068 = vadd.f32 %v2940, %v3067
      %v3069 = vpop.f32.mrb[0].mxu0
      %3070 = vmatprep.mubr.bf16.mxu0 0
      %3071 = vmatmul.mubr.bf16.gmra.mrb[0].mxu0 %v2874
      %v3072 = vpop.f32.mrb[0].mxu0
      %v3073 = vadd.f32 %v2940, %v3072
      %v3074 = vpop.f32.mrb[0].mxu0
      %v3075 = vpop.f32.mrb[0].mxu0
      %v3076 = vadd.f32 %v2940, %v3075
      %v3077 = vpop.f32.mrb[0].mxu0
      %3078 = vmatprep.mubr.bf16.mxu0 0
      %3079 = vmatmul.mubr.bf16.gmra.mrb[0].mxu0 %v2875
      %v3080 = vpop.f32.mrb[0].mxu0
      %v3081 = vadd.f32 %v2940, %v3080
      %v3082 = vpop.f32.mrb[0].mxu0
      %v3083 = vpop.f32.mrb[0].mxu0
      %v3084 = vadd.f32 %v2940, %v3083
      %v3085 = vpop.f32.mrb[0].mxu0
      %3086 = vmatprep.mubr.bf16.mxu0 0
      %3087 = vmatmul.mubr.bf16.gmra.mrb[0].mxu0 %v2876
      %v3088 = vpop.f32.mrb[0].mxu0
      %v3089 = vadd.f32 %v2940, %v3088
      %v3090 = vpop.f32.mrb[0].mxu0
      %v3091 = vpop.f32.mrb[0].mxu0
      %v3092 = vadd.f32 %v2940, %v3091
      %v3093 = vpop.f32.mrb[0].mxu0
      %3094 = vmatprep.mubr.bf16.mxu0 0
      %3095 = vmatmul.mubr.bf16.gmra.mrb[0].mxu0 %v2877
      %v3096 = vpop.f32.mrb[0].mxu0
      %v3097 = vadd.f32 %v2940, %v3096
      %v3098 = vpop.f32.mrb[0].mxu0
      %v3099 = vpop.f32.mrb[0].mxu0
      %v3100 = vadd.f32 %v2940, %v3099
      %v3101 = vpop.f32.mrb[0].mxu0
      %3102 = vmatprep.mubr.bf16.mxu0 0
      %3103 = vmatmul.mubr.bf16.gmra.mrb[0].mxu0 %v2878
      %v3104 = vpop.f32.mrb[0].mxu0
      %v3105 = vadd.f32 %v2940, %v3104
      %v3106 = vpop.f32.mrb[0].mxu0
      %v3107 = vpop.f32.mrb[0].mxu0
      %v3108 = vadd.f32 %v2940, %v3107
      %v3109 = vpop.f32.mrb[0].mxu0
      %3110 = vmatprep.mubr.bf16.mxu0 0
      %3111 = vmatmul.mubr.bf16.gmra.mrb[0].mxu0 %v2879
      %v3112 = vpop.f32.mrb[0].mxu0
      %v3113 = vadd.f32 %v2940, %v3112
      %v3114 = vpop.f32.mrb[0].mxu0
      %v3115 = vpop.f32.mrb[0].mxu0
      %v3116 = vadd.f32 %v2940, %v3115
      %v3117 = vpop.f32.mrb[0].mxu0
      %3118 = vmatprep.mubr.bf16.mxu0 0
      %3119 = vmatmul.mubr.bf16.gmra.mrb[0].mxu0 %v2880
      %v3120 = vpop.f32.mrb[0].mxu0
      %v3121 = vadd.f32 %v2940, %v3120
      %v3122 = vpop.f32.mrb[0].mxu0
      %v3123 = vpop.f32.mrb[0].mxu0
      %v3124 = vadd.f32 %v2940, %v3123
      %v3125 = vpop.f32.mrb[0].mxu0
      %3126 = vmatprep.mubr.bf16.mxu0 0
      %3127 = vmatmul.mubr.bf16.gmra.mrb[0].mxu0 %v2881
      %v3128 = vpop.f32.mrb[0].mxu0
      %v3129 = vadd.f32 %v2940, %v3128
      %v3130 = vpop.f32.mrb[0].mxu0
      %v3131 = vpop.f32.mrb[0].mxu0
      %v3132 = vadd.f32 %v2940, %v3131
      %v3133 = vpop.f32.mrb[0].mxu0
      %3134 = vmatprep.mubr.bf16.mxu0 0
      %3135 = vmatmul.mubr.bf16.gmra.mrb[0].mxu0 %v2882
      %v3136 = vpop.f32.mrb[0].mxu0
      %v3137 = vadd.f32 %v2940, %v3136
      %v3138 = vpop.f32.mrb[0].mxu0
      %v3139 = vpop.f32.mrb[0].mxu0
      %v3140 = vadd.f32 %v2940, %v3139
      %v3141 = vpop.f32.mrb[0].mxu0
      %3142 = vmatprep.mubr.bf16.mxu0 0
      %3143 = vmatmul.mubr.bf16.gmra.mrb[0].mxu0 %v2883
      %v3144 = vpop.f32.mrb[0].mxu0
      %v3145 = vadd.f32 %v2940, %v3144
      %v3146 = vpop.f32.mrb[0].mxu0
      %v3147 = vpop.f32.mrb[0].mxu0
      %v3148 = vadd.f32 %v2940, %v3147
      %v3149 = vpop.f32.mrb[0].mxu0
      %3150 = vdwg.mxu0
      %v3151 = vunpack.c.l.bf16 %v2903
      %v3152 = vunpack.c.l.bf16 %v2904
      %v3153 = vunpack.c.l.bf16 %v2905
      %v3154 = vunpack.c.l.bf16 %v2906
      %v3155 = vunpack.c.l.bf16 %v2907
      %v3156 = vunpack.c.l.bf16 %v2908
      %v3157 = vunpack.c.l.bf16 %v2909
      %v3158 = vunpack.c.l.bf16 %v2910
      %v3159 = vunpack.c.l.bf16 %v2911
      %v3160 = vunpack.c.l.bf16 %v2912
      %v3161 = vunpack.c.l.bf16 %v2913
      %v3162 = vunpack.c.l.bf16 %v2914
      %v3163 = vunpack.c.l.bf16 %v2915
      %v3164 = vunpack.c.l.bf16 %v2916
      %v3165 = vunpack.c.l.bf16 %v2917
      %v3166 = vunpack.c.l.bf16 %v2918
      %v3167 = vunpack.c.l.bf16 %v2919
      %v3168 = vunpack.c.l.bf16 %v2920
      %v3169 = vunpack.c.l.bf16 %v2921
      %v3170 = vunpack.c.l.bf16 %v2922
      %v3171 = vunpack.c.l.bf16 %v2923
      %v3172 = vunpack.c.l.bf16 %v2924
      %v3173 = vunpack.c.l.bf16 %v2925
      %v3174 = vunpack.c.l.bf16 %v2926
      %v3175 = vunpack.c.l.bf16 %v2927
      %v3176 = vunpack.c.l.bf16 %v2928
      %v3177 = vunpack.c.l.bf16 %v2929
      %v3178 = vunpack.c.l.bf16 %v2930
      %v3179 = vunpack.c.l.bf16 %v2931
      %v3180 = vunpack.c.l.bf16 %v2932
      %v3181 = vunpack.c.l.bf16 %v2933
      %v3182 = vunpack.c.l.bf16 %v2934
      %v3183 = vadd.f32 %v3025, %v3151
      %v3184 = vadd.f32 %v3028, %v3152
      %v3185 = vadd.f32 %v3033, %v3153
      %v3186 = vadd.f32 %v3036, %v3154
      %v3187 = vadd.f32 %v3041, %v3155
      %v3188 = vadd.f32 %v3044, %v3156
      %v3189 = vadd.f32 %v3049, %v3157
      %v3190 = vadd.f32 %v3052, %v3158
      %v3191 = vadd.f32 %v3057, %v3159
      %v3192 = vadd.f32 %v3060, %v3160
      %v3193 = vadd.f32 %v3065, %v3161
      %v3194 = vadd.f32 %v3068, %v3162
      %v3195 = vadd.f32 %v3073, %v3163
      %v3196 = vadd.f32 %v3076, %v3164
      %v3197 = vadd.f32 %v3081, %v3165
      %v3198 = vadd.f32 %v3084, %v3166
      %v3199 = vadd.f32 %v3089, %v3167
      %v3200 = vadd.f32 %v3092, %v3168
      %v3201 = vadd.f32 %v3097, %v3169
      %v3202 = vadd.f32 %v3100, %v3170
      %v3203 = vadd.f32 %v3105, %v3171
      %v3204 = vadd.f32 %v3108, %v3172
      %v3205 = vadd.f32 %v3113, %v3173
      %v3206 = vadd.f32 %v3116, %v3174
      %v3207 = vadd.f32 %v3121, %v3175
      %v3208 = vadd.f32 %v3124, %v3176
      %v3209 = vadd.f32 %v3129, %v3177
      %v3210 = vadd.f32 %v3132, %v3178
      %v3211 = vadd.f32 %v3137, %v3179
      %v3212 = vadd.f32 %v3140, %v3180
      %v3213 = vadd.f32 %v3145, %v3181
      %v3214 = vadd.f32 %v3148, %v3182
      %v3215 = vmax.f32 %v3183, 0.0
      %v3216 = vmax.f32 %v3184, 0.0
      %v3217 = vmax.f32 %v3185, 0.0
      %v3218 = vmax.f32 %v3186, 0.0
      %v3219 = vmax.f32 %v3187, 0.0
      %v3220 = vmax.f32 %v3188, 0.0
      %v3221 = vmax.f32 %v3189, 0.0
      %v3222 = vmax.f32 %v3190, 0.0
      %v3223 = vmax.f32 %v3191, 0.0
      %v3224 = vmax.f32 %v3192, 0.0
      %v3225 = vmax.f32 %v3193, 0.0
      %v3226 = vmax.f32 %v3194, 0.0
      %v3227 = vmax.f32 %v3195, 0.0
      %v3228 = vmax.f32 %v3196, 0.0
      %v3229 = vmax.f32 %v3197, 0.0
      %v3230 = vmax.f32 %v3198, 0.0
      %v3231 = vmax.f32 %v3199, 0.0
      %v3232 = vmax.f32 %v3200, 0.0
      %v3233 = vmax.f32 %v3201, 0.0
      %v3234 = vmax.f32 %v3202, 0.0
      %v3235 = vmax.f32 %v3203, 0.0
      %v3236 = vmax.f32 %v3204, 0.0
      %v3237 = vmax.f32 %v3205, 0.0
      %v3238 = vmax.f32 %v3206, 0.0
      %v3239 = vmax.f32 %v3207, 0.0
      %v3240 = vmax.f32 %v3208, 0.0
      %v3241 = vmax.f32 %v3209, 0.0
      %v3242 = vmax.f32 %v3210, 0.0
      %v3243 = vmax.f32 %v3211, 0.0
      %v3244 = vmax.f32 %v3212, 0.0
      %v3245 = vmax.f32 %v3213, 0.0
      %v3246 = vmax.f32 %v3214, 0.0
      %3247 = vst [vmem:[%s302] sm:$0xff] %v3215
      %3248 = vst [vmem:[%s302 + $0x8] sm:$0xff] %v3216
      %3249 = vst [vmem:[%s302 + $0x10] sm:$0xff] %v3217
      %3250 = vst [vmem:[%s302 + $0x18] sm:$0xff] %v3218
      %3251 = vst [vmem:[%s302 + $0x20] sm:$0xff] %v3219
      %3252 = vst [vmem:[%s302 + $0x28] sm:$0xff] %v3220
      %3253 = vst [vmem:[%s302 + $0x30] sm:$0xff] %v3221
      %3254 = vst [vmem:[%s302 + $0x38] sm:$0xff] %v3222
      %3255 = vst [vmem:[%s302 + $0x40] sm:$0xff] %v3223
      %3256 = vst [vmem:[%s302 + $0x48] sm:$0xff] %v3224
      %3257 = vst [vmem:[%s302 + $0x50] sm:$0xff] %v3225
      %3258 = vst [vmem:[%s302 + $0x58] sm:$0xff] %v3226
      %3259 = vst [vmem:[%s302 + $0x60] sm:$0xff] %v3227
      %3260 = vst [vmem:[%s302 + $0x68] sm:$0xff] %v3228
      %3261 = vst [vmem:[%s302 + $0x70] sm:$0xff] %v3229
      %3262 = vst [vmem:[%s302 + $0x78] sm:$0xff] %v3230
      %3263 = vst [vmem:[%s302 + $0x80] sm:$0xff] %v3231
      %3264 = vst [vmem:[%s302 + $0x88] sm:$0xff] %v3232
      %3265 = vst [vmem:[%s302 + $0x90] sm:$0xff] %v3233
      %3266 = vst [vmem:[%s302 + $0x98] sm:$0xff] %v3234
      %3267 = vst [vmem:[%s302 + $0xa0] sm:$0xff] %v3235
      %3268 = vst [vmem:[%s302 + $0xa8] sm:$0xff] %v3236
      %3269 = vst [vmem:[%s302 + $0xb0] sm:$0xff] %v3237
      %3270 = vst [vmem:[%s302 + $0xb8] sm:$0xff] %v3238
      %3271 = vst [vmem:[%s302 + $0xc0] sm:$0xff] %v3239
      %3272 = vst [vmem:[%s302 + $0xc8] sm:$0xff] %v3240
      %3273 = vst [vmem:[%s302 + $0xd0] sm:$0xff] %v3241
      %3274 = vst [vmem:[%s302 + $0xd8] sm:$0xff] %v3242
      %3275 = vst [vmem:[%s302 + $0xe0] sm:$0xff] %v3243
      %3276 = vst [vmem:[%s302 + $0xe8] sm:$0xff] %v3244
      %3277 = vst [vmem:[%s302 + $0xf0] sm:$0xff] %v3245
      %3278 = vst [vmem:[%s302 + $0xf8] sm:$0xff] %v3246
      %s3279 = smul.u32 16, %s23
      %p3280 = scmp.lt.s32.totalorder %s22, 1
      %s3281 = scalar_select %p3280, %s22, 1
      %p3282 = scmp.lt.s32.totalorder %s3279, 15
      %s3283 = scalar_select %p3282, %s3279, 15
      %s3284 = smul.addr %s3283, 2
      %s3285 = smul.addr %s3281, 32
      %s3286 = sadd.s32 %s3284, %s3285
      %s3287 = smul.addr %s3286, 8
      %s3288 = scalar_lea.vmem %s7, %s3287
      // Predicated region
      $region53: #{bottleneck_forward.1} parent=47 // pred_check
        %p3289 = pneg %p202
      $region54: #{bottleneck_forward.1} parent=47 // pred_check_branch
        %3291 = sbr.rel (%p3289) target = $region56
      $region55: #{bottleneck_forward.1} parent=47 // pred_region
        %s3292 = smul.u32 16, %s23
      $region56: #{bottleneck_forward.1} parent=47 // pred_fallthru
        _
    $region48: #{bottleneck_forward.1} parent=5 // pred_fallthru
      _
    %p3293 = scmp.le.s32.totalorder 2, %s13
    // Predicated region
    $region57: #{bottleneck_forward.1} parent=5 // pred_check
      %p3294 = pneg %p3293
    $region58: #{bottleneck_forward.1} parent=5 // pred_check_branch
      %3296 = sbr.rel (%p3294) target = $region60
    $region59: #{bottleneck_forward.1} parent=5 // pred_region
      %s3297 = ssub.s32 %s13, 2
      // Predicated region
      $region61: #{bottleneck_forward.1} parent=59 // pred_check
        %p3298 = pneg %p208
      $region62: #{bottleneck_forward.1} parent=59 // pred_check_branch
        %3300 = sbr.rel (%p3298) target = $region64
      $region63: #{bottleneck_forward.1} parent=59 // pred_region
        %s3301 = smul.u32 16, %s25
        %p3302 = scmp.lt.s32.totalorder %s24, 1
        %s3303 = scalar_select %p3302, %s24, 1
        %p3304 = scmp.lt.s32.totalorder %s3301, 15
        %s3305 = scalar_select %p3304, %s3301, 15
        %s3306 = smul.addr %s3305, 2
        %s3307 = smul.addr %s3303, 32
        %s3308 = sadd.s32 %s3306, %s3307
        %s3309 = smul.addr %s3308, 8
        %s3310 = scalar_lea.vmem %s7, %s3309
      $region64: #{bottleneck_forward.1} parent=59 // pred_fallthru
        _
    $region60: #{bottleneck_forward.1} parent=5 // pred_fallthru
      _
  $region6: #{bottleneck_forward.1} parent=0 // loop_footer
    %s17 = sadd.s32 1, %s13
  $region7: #{bottleneck_forward.1} parent=0 // loop_footer_branch
    %12 = sbr.rel target = $region3
  $region8: #{bottleneck_forward.1} parent=0 // loop_exit
    _

</llo_original>
